<compile_context>
chip_gen: v5e
topology: v5e:2x2
jax: 0.10.0
libtpu: 0.0.40
codegen_flags: <defaults>
</compile_context>

<pallas_src>
import functools
from dataclasses import dataclass

import jax
import jax.numpy as jnp
from jax import lax
from jax.experimental import pallas as pl
from jax.experimental.pallas import tpu as pltpu

WEIGHT_DTYPE = jnp.bfloat16   # MXU-friendly on v6e/v7x; set jnp.float32 for bit-fidelity
LN_EPS = 1e-5                 # torch.nn.LayerNorm default


@dataclass
class Config:
    vocab_size: int
    context_length: int = 16
    d_model: int = 128
    n_head: int = 4
    n_layer: int = 2
    dropout: float = 0.0


# ---------------------------------------------------------------------------
# In-kernel helpers
# ---------------------------------------------------------------------------

def _layernorm(x, g, b, eps):
    # stats and affine in f32
    mu = jnp.mean(x, axis=-1, keepdims=True)
    var = jnp.mean((x - mu) ** 2, axis=-1, keepdims=True)
    return (x - mu) * lax.rsqrt(var + eps) * g + b


def _proj(x_f32, w_ref):
    """x(f32, rows x in) @ W(ref, in x out) with f32 accumulation on the MXU."""
    return jnp.dot(x_f32.astype(w_ref.dtype), w_ref[...],
                   preferred_element_type=jnp.float32)


def _attend(q3, k3, v3, out_ref, *, n_head, head_dim, scale, mask):
    """Per-head attention batched over the Bblk sequences.

    q3/k3/v3: (Bblk, T, C) f32 values. Each head's (Bblk, T, head_dim) output is
    written into `out_ref` (VMEM scratch, (Bblk, T, C)) at its static column
    slice — no jnp.concatenate, no kh.T transpose.
    """
    for h in range(n_head):
        lo = h * head_dim
        hi = lo + head_dim
        qh = q3[:, :, lo:hi]
        kh = k3[:, :, lo:hi]
        vh = v3[:, :, lo:hi]
        # scores: contract last axes of q and k, batch over Bblk (no transpose)
        s = lax.dot_general(qh, kh, (((2,), (2,)), ((0,), (0,))),
                            preferred_element_type=jnp.float32) * scale
        if mask is not None:
            s = jnp.where(mask, s, jnp.float32(-1e30))
        s = s - jnp.max(s, axis=-1, keepdims=True)
        p = jnp.exp(s)
        # divide -> EUP reciprocal + VPU multiply (frees the VALU divide)
        p = p * pl.reciprocal(jnp.sum(p, axis=-1, keepdims=True), approx=True)
        out_ref[:, :, lo:hi] = lax.dot_general(
            p, vh, (((2,), (1,)), ((0,), (0,))),
            preferred_element_type=jnp.float32)


# ---------------------------------------------------------------------------
# Fused decoder stack kernel: grid = (batch_blocks, n_layer)
# ---------------------------------------------------------------------------

def _decoder_stack_kernel(x_ref, q_ref, k_ref,
                          ln1g_ref, ln1b_ref, w_qkv_ref, w_sap_ref,
                          ln2g_ref, ln2b_ref, w_cav_ref, w_cap_ref,
                          ln3g_ref, ln3b_ref, w_ff1_ref, b_ff1_ref,
                          w_ff2_ref, b_ff2_ref,
                          o_ref, acc_ref, attn_ref,
                          *, n_head, head_dim, scale, eps, ff_chunk):
    l = pl.program_id(1)
    bblk, T, C = x_ref.shape
    TM = bblk * T

    # Load the embedding block into the resident residual-stream scratch once
    # per batch block; layers accumulate into it across the "arbitrary" axis.
    @pl.when(l == 0)
    def _():
        acc_ref[...] = x_ref[...].reshape(TM, C).astype(jnp.float32)

    x = acc_ref[...]                                    # (TM, C) f32

    # causal mask, shared by all heads / sequences in this block
    row = lax.broadcasted_iota(jnp.int32, (1, T, T), 1)
    col = lax.broadcasted_iota(jnp.int32, (1, T, T), 2)
    causal = col <= row                                 # (1, T, T)

    # --- causal self-attention ------------------------------------------------
    h = _layernorm(x, ln1g_ref[...], ln1b_ref[...], eps)
    qkv = _proj(h, w_qkv_ref).reshape(bblk, T, 3 * C)   # (Bblk, T, 3C) f32
    _attend(qkv[:, :, 0:C], qkv[:, :, C:2 * C], qkv[:, :, 2 * C:3 * C],
            attn_ref, n_head=n_head, head_dim=head_dim, scale=scale,
            mask=causal)
    x = x + _proj(attn_ref[...].reshape(TM, C), w_sap_ref)

    # --- cross-attention (q, k external; v projected from decoder state) -------
    h = _layernorm(x, ln2g_ref[...], ln2b_ref[...], eps)
    v3 = _proj(h, w_cav_ref).reshape(bblk, T, C)
    _attend(q_ref[...].astype(jnp.float32), k_ref[...].astype(jnp.float32), v3,
            attn_ref, n_head=n_head, head_dim=head_dim, scale=scale, mask=None)
    x = x + _proj(attn_ref[...].reshape(TM, C), w_cap_ref)

    # --- feed-forward (hidden dim chunked to cap live vregs) -------------------
    h = _layernorm(x, ln3g_ref[...], ln3b_ref[...], eps)
    hb = h.astype(w_ff1_ref.dtype)
    y = jnp.zeros((TM, C), jnp.float32)
    ff_dim = w_ff1_ref.shape[1]
    for j in range(0, ff_dim, ff_chunk):
        h1 = jnp.dot(hb, w_ff1_ref[:, j:j + ff_chunk],
                     preferred_element_type=jnp.float32) + b_ff1_ref[:, j:j + ff_chunk]
        # TODO(synk): reference uses exact erf gelu; tanh approx used here (EUP slot).
        h1 = jax.nn.gelu(h1, approximate=True)
        y = y + jnp.dot(h1.astype(w_ff2_ref.dtype), w_ff2_ref[j:j + ff_chunk, :],
                        preferred_element_type=jnp.float32)
    x = x + y + b_ff2_ref[...]

    acc_ref[...] = x

    @pl.when(l == pl.num_programs(1) - 1)
    def _():
        o_ref[...] = x.reshape(bblk, T, C).astype(o_ref.dtype)


def decoder_stack(x, q_in, k_in, blocks, cfg: Config, bblk: int):
    """Run all n_layer DecoderBlocks in one pallas_call. x/q_in/k_in: (Bp, T, C)."""
    Bp, T, C = x.shape
    H = cfg.n_head
    hd = C // H
    L = cfg.n_layer
    scale = 1.0 / float(hd) ** 0.5

    act_spec = pl.BlockSpec((bblk, T, C), lambda b, l: (b, 0, 0))

    def wspec(*dims):  # per-layer weight stacked along leading L axis
        return pl.BlockSpec((None,) + dims, lambda b, l: (l,) + (0,) * len(dims))

    kernel = functools.partial(_decoder_stack_kernel, n_head=H, head_dim=hd,
                               scale=scale, eps=LN_EPS, ff_chunk=C)

    return pl.pallas_call(
        kernel,
        out_shape=jax.ShapeDtypeStruct((Bp, T, C), x.dtype),
        grid=(Bp // bblk, L),
        in_specs=[
            act_spec, act_spec, act_spec,
            wspec(1, C), wspec(1, C),            # ln1
            wspec(C, 3 * C), wspec(C, C),        # sa_attn, sa_proj (no bias)
            wspec(1, C), wspec(1, C),            # ln2
            wspec(C, C), wspec(C, C),            # ca_cattn, ca_proj (no bias)
            wspec(1, C), wspec(1, C),            # ln3
            wspec(C, 4 * C), wspec(1, 4 * C),    # ff_w1, ff_b1
            wspec(4 * C, C), wspec(1, C),        # ff_w2, ff_b2
        ],
        out_specs=act_spec,
        scratch_shapes=[
            pltpu.VMEM((bblk * T, C), jnp.float32),   # resident residual stream
            pltpu.VMEM((bblk, T, C), jnp.float32),    # per-head attention staging
        ],
        compiler_params=pltpu.CompilerParams(
            dimension_semantics=("parallel", "arbitrary"),
            vmem_limit_bytes=32 * 1024 * 1024),
    )(x, q_in, k_in,
      blocks["ln1_g"], blocks["ln1_b"], blocks["sa_attn_w"], blocks["sa_proj_w"],
      blocks["ln2_g"], blocks["ln2_b"], blocks["ca_cattn_w"], blocks["ca_proj_w"],
      blocks["ln3_g"], blocks["ln3_b"], blocks["ff_w1"], blocks["ff_b1"],
      blocks["ff_w2"], blocks["ff_b2"])


# ---------------------------------------------------------------------------
# Fused final layernorm + lm_head, tiled over the (padded) vocab dimension
# ---------------------------------------------------------------------------

def _final_kernel(x_ref, g_ref, b_ref, w_ref, bias_ref, o_ref, *, eps):
    bblk, T, C = x_ref.shape
    TM = bblk * T
    x = x_ref[...].reshape(TM, C).astype(jnp.float32)
    h = _layernorm(x, g_ref[...], b_ref[...], eps)
    y = jnp.dot(h.astype(w_ref.dtype), w_ref[...],
                preferred_element_type=jnp.float32) + bias_ref[...]
    tn = o_ref.shape[2]
    o_ref[...] = y.reshape(bblk, T, tn).astype(o_ref.dtype)


def final_head(x, params, bblk: int):
    Bp, T, C = x.shape
    w = params["lm_head_w"]          # (C, Vpad), padded & bf16 at init
    bias = params["lm_head_b"]       # (1, Vpad), f32
    Vpad = w.shape[1]
    tn = 512 if (Vpad % 512 == 0 and Vpad > 128) else 128   # vocab tile

    return pl.pallas_call(
        functools.partial(_final_kernel, eps=LN_EPS),
        out_shape=jax.ShapeDtypeStruct((Bp, T, Vpad), x.dtype),
        grid=(Bp // bblk, Vpad // tn),
        in_specs=[
            pl.BlockSpec((bblk, T, C), lambda b, v: (b, 0, 0)),
            pl.BlockSpec((1, C), lambda b, v: (0, 0)),
            pl.BlockSpec((1, C), lambda b, v: (0, 0)),
            pl.BlockSpec((C, tn), lambda b, v: (0, v)),
            pl.BlockSpec((1, tn), lambda b, v: (0, v)),
        ],
        out_specs=pl.BlockSpec((bblk, T, tn), lambda b, v: (b, 0, v)),
        compiler_params=pltpu.CompilerParams(
            dimension_semantics=("parallel", "parallel"),
            vmem_limit_bytes=32 * 1024 * 1024),
    )(x, params["ln_f_g"], params["ln_f_b"], w, bias)


# ---------------------------------------------------------------------------
# Parameter init (deterministic, synthetic) + forward pass
# ---------------------------------------------------------------------------

def init_params(cfg: Config, key, weight_dtype=WEIGHT_DTYPE):
    C, L, V = cfg.d_model, cfg.n_layer, cfg.vocab_size

    def nrm(k, shape, scale=0.02, dtype=weight_dtype):
        return (scale * jax.random.normal(k, shape, jnp.float32)).astype(dtype)

    keys = iter(jax.random.split(key, 16))

    # lm_head padded once at init (lane-dense vocab); bias stays f32
    tn = 512 if V > 512 else 128
    vpad = ((V + tn - 1) // tn) * tn
    lm_w = nrm(next(keys), (C, V))
    lm_w_pad = jnp.zeros((C, vpad), weight_dtype).at[:, :V].set(lm_w)
    lm_b_pad = jnp.zeros((1, vpad), jnp.float32)

    return {
        "tke": nrm(next(keys), (V, C), dtype=jnp.float32),
        "pse": nrm(next(keys), (cfg.context_length, C), dtype=jnp.float32),
        "ln_f_g": jnp.ones((1, C), jnp.float32),
        "ln_f_b": jnp.zeros((1, C), jnp.float32),
        "lm_head_w": lm_w_pad,
        "lm_head_b": lm_b_pad,
        # per-layer weights stacked along a leading L axis (single fused call)
        "blocks": {
            "ln1_g": jnp.ones((L, 1, C), jnp.float32),
            "ln1_b": jnp.zeros((L, 1, C), jnp.float32),
            "sa_attn_w": nrm(next(keys), (L, C, 3 * C)),     # bias=False
            "sa_proj_w": nrm(next(keys), (L, C, C)),         # bias=False
            "ln2_g": jnp.ones((L, 1, C), jnp.float32),
            "ln2_b": jnp.zeros((L, 1, C), jnp.float32),
            "ca_cattn_w": nrm(next(keys), (L, C, C)),        # bias=False
            "ca_proj_w": nrm(next(keys), (L, C, C)),         # bias=False
            "ln3_g": jnp.ones((L, 1, C), jnp.float32),
            "ln3_b": jnp.zeros((L, 1, C), jnp.float32),
            "ff_w1": nrm(next(keys), (L, C, 4 * C)),
            "ff_b1": jnp.zeros((L, 1, 4 * C), jnp.float32),
            "ff_w2": nrm(next(keys), (L, 4 * C, C)),
            "ff_b2": jnp.zeros((L, 1, C), jnp.float32),
        },
    }


def _pick_batch_block(B, T, target_rows=128):
    """Batch block so each grid step sees ~target_rows matmul rows, while keeping
    >=2 parallel grid steps when there is enough work (v7x has 2 TensorCores)."""
    bblk = max(1, min(B, -(-target_rows // T)))
    if B * T >= 2 * target_rows:
        bblk = min(bblk, -(-B // 2))
    return bblk


def decoder_forward(params, tokens, q_in, k_in, cfg: Config):
    B, T = tokens.shape

    # embeddings (small gather -> plain JAX glue)
    x = params["tke"][tokens] + params["pse"][:T][None, :, :]      # (B, T, C) f32

    bblk = _pick_batch_block(B, T)
    Bp = -(-B // bblk) * bblk
    if Bp != B:  # pad batch to a multiple of the batch block
        pad = ((0, Bp - B), (0, 0), (0, 0))
        x, q_in, k_in = jnp.pad(x, pad), jnp.pad(q_in, pad), jnp.pad(k_in, pad)

    x = decoder_stack(x, q_in, k_in, params["blocks"], cfg, bblk)
    logits = final_head(x, params, bblk)
    return logits[:B, :, :cfg.vocab_size]


if __name__ == "__main__":
    cfg = Config(vocab_size=64, context_length=16, d_model=128,
                 n_head=4, n_layer=2, dropout=0.0)
    key = jax.random.PRNGKey(0)
    kp, kt, kq, kk = jax.random.split(key, 4)

    params = init_params(cfg, kp)

    B, T = 2, 8
    tokens = jax.random.randint(kt, (B, T), 0, cfg.vocab_size, dtype=jnp.int32)
    q_in = jax.random.normal(kq, (B, T, cfg.d_model), jnp.float32)
    k_in = jax.random.normal(kk, (B, T, cfg.d_model), jnp.float32)

    logits = decoder_forward(params, tokens, q_in, k_in, cfg)
    jax.block_until_ready(logits)
    assert logits.shape == (B, T, cfg.vocab_size)
    assert bool(jnp.all(jnp.isfinite(logits)))
    print("KERNEL_OK")
</pallas_src>

<mosaic_0001>
module attributes {stable_mosaic.version = 11 : i64} {
  func.func @_decoder_stack_kernel(%arg0: i32, %arg1: i32, %arg2: memref<2x8x128xf32, #tpu.memory_space<vmem>>, %arg3: memref<2x8x128xf32, #tpu.memory_space<vmem>>, %arg4: memref<2x8x128xf32, #tpu.memory_space<vmem>>, %arg5: memref<1x1x128xf32, #tpu.memory_space<vmem>>, %arg6: memref<1x1x128xf32, #tpu.memory_space<vmem>>, %arg7: memref<1x128x384xbf16, #tpu.memory_space<vmem>>, %arg8: memref<1x128x128xbf16, #tpu.memory_space<vmem>>, %arg9: memref<1x1x128xf32, #tpu.memory_space<vmem>>, %arg10: memref<1x1x128xf32, #tpu.memory_space<vmem>>, %arg11: memref<1x128x128xbf16, #tpu.memory_space<vmem>>, %arg12: memref<1x128x128xbf16, #tpu.memory_space<vmem>>, %arg13: memref<1x1x128xf32, #tpu.memory_space<vmem>>, %arg14: memref<1x1x128xf32, #tpu.memory_space<vmem>>, %arg15: memref<1x128x512xbf16, #tpu.memory_space<vmem>>, %arg16: memref<1x1x512xf32, #tpu.memory_space<vmem>>, %arg17: memref<1x512x128xbf16, #tpu.memory_space<vmem>>, %arg18: memref<1x1x128xf32, #tpu.memory_space<vmem>>, %arg19: memref<2x8x128xf32, #tpu.memory_space<vmem>>, %arg20: memref<16x128xf32, #tpu.memory_space<vmem>>, %arg21: memref<2x8x128xf32, #tpu.memory_space<vmem>>) attributes {dimension_semantics = [#tpu.dimension_semantics<parallel>, #tpu.dimension_semantics<arbitrary>], iteration_bounds = array<i64: 1, 2>, scalar_prefetch = 0 : i64, scratch_operands = 2 : i64, tpu.core_type = #tpu.core_type<tc>, window_params = [{transform_indices = @transform_0, window_bounds = array<i64: 2, 8, 128>}, {transform_indices = @transform_1, window_bounds = array<i64: 2, 8, 128>}, {transform_indices = @transform_2, window_bounds = array<i64: 2, 8, 128>}, {transform_indices = @transform_3, window_bounds = array<i64: 1, 1, 128>}, {transform_indices = @transform_4, window_bounds = array<i64: 1, 1, 128>}, {transform_indices = @transform_5, window_bounds = array<i64: 1, 128, 384>}, {transform_indices = @transform_6, window_bounds = array<i64: 1, 128, 128>}, {transform_indices = @transform_7, window_bounds = array<i64: 1, 1, 128>}, {transform_indices = @transform_8, window_bounds = array<i64: 1, 1, 128>}, {transform_indices = @transform_9, window_bounds = array<i64: 1, 128, 128>}, {transform_indices = @transform_10, window_bounds = array<i64: 1, 128, 128>}, {transform_indices = @transform_11, window_bounds = array<i64: 1, 1, 128>}, {transform_indices = @transform_12, window_bounds = array<i64: 1, 1, 128>}, {transform_indices = @transform_13, window_bounds = array<i64: 1, 128, 512>}, {transform_indices = @transform_14, window_bounds = array<i64: 1, 1, 512>}, {transform_indices = @transform_15, window_bounds = array<i64: 1, 512, 128>}, {transform_indices = @transform_16, window_bounds = array<i64: 1, 1, 128>}, {transform_indices = @transform_17, window_bounds = array<i64: 2, 8, 128>}]} {
    %c0_i32 = arith.constant 0 : i32
    %0 = arith.cmpi eq, %arg1, %c0_i32 : i32
    %1 = arith.extui %0 : i1 to i32
    %c0_i32_0 = arith.constant 0 : i32
    %2 = arith.cmpi ne, %1, %c0_i32_0 : i32
    scf.if %2 {
      %c0_191 = arith.constant 0 : index
      %c0_192 = arith.constant 0 : index
      %c0_193 = arith.constant 0 : index
      %385 = vector.load %arg2[%c0_191, %c0_192, %c0_193] : memref<2x8x128xf32, #tpu.memory_space<vmem>>, vector<2x8x128xf32>
      %386 = vector.shape_cast %385 : vector<2x8x128xf32> to vector<16x128xf32>
      %c0_194 = arith.constant 0 : index
      %c0_195 = arith.constant 0 : index
      %387 = vector.load %arg20[%c0_194, %c0_195] : memref<16x128xf32, #tpu.memory_space<vmem>>, vector<16x128xf32>
      tpu.vector_store %arg20[%c0_194, %c0_195], %386 {strides = array<i32>} : memref<16x128xf32, #tpu.memory_space<vmem>>, vector<16x128xf32>,
    } else {
    }
    %c0 = arith.constant 0 : index
    %c0_1 = arith.constant 0 : index
    %3 = vector.load %arg20[%c0, %c0_1] : memref<16x128xf32, #tpu.memory_space<vmem>>, vector<16x128xf32>
    %4 = tpu.iota {dimensions = array<i32: 1>} : vector<1x8x8xi32>
    %5 = tpu.iota {dimensions = array<i32: 2>} : vector<1x8x8xi32>
    %6 = arith.cmpi sle, %5, %4 : vector<1x8x8xi32>
    %c0_2 = arith.constant 0 : index
    %c0_3 = arith.constant 0 : index
    %c0_4 = arith.constant 0 : index
    %7 = vector.load %arg5[%c0_2, %c0_3, %c0_4] : memref<1x1x128xf32, #tpu.memory_space<vmem>>, vector<1x1x128xf32>
    %8 = vector.shape_cast %7 : vector<1x1x128xf32> to vector<1x128xf32>
    %c0_5 = arith.constant 0 : index
    %c0_6 = arith.constant 0 : index
    %c0_7 = arith.constant 0 : index
    %9 = vector.load %arg6[%c0_5, %c0_6, %c0_7] : memref<1x1x128xf32, #tpu.memory_space<vmem>>, vector<1x1x128xf32>
    %10 = vector.shape_cast %9 : vector<1x1x128xf32> to vector<1x128xf32>
    %cst = arith.constant dense<0.000000e+00> : vector<16xf32>
    %11 = vector.multi_reduction <add>, %3, %cst [1] : vector<16x128xf32> to vector<16xf32>
    %12 = vector.shape_cast %11 : vector<16xf32> to vector<16x1xf32>
    %cst_8 = arith.constant 1.280000e+02 : f32
    %13 = vector.broadcast %cst_8 : f32 to vector<16x1xf32>
    %14 = arith.divf %12, %13 : vector<16x1xf32>
    %15 = vector.broadcast %14 : vector<16x1xf32> to vector<16x128xf32>
    %16 = arith.subf %3, %15 : vector<16x128xf32>
    %17 = arith.mulf %16, %16 : vector<16x128xf32>
    %cst_9 = arith.constant dense<0.000000e+00> : vector<16xf32>
    %18 = vector.multi_reduction <add>, %17, %cst_9 [1] : vector<16x128xf32> to vector<16xf32>
    %19 = vector.shape_cast %18 : vector<16xf32> to vector<16x1xf32>
    %cst_10 = arith.constant 1.280000e+02 : f32
    %20 = vector.broadcast %cst_10 : f32 to vector<16x1xf32>
    %21 = arith.divf %19, %20 : vector<16x1xf32>
    %22 = vector.broadcast %14 : vector<16x1xf32> to vector<16x128xf32>
    %23 = arith.subf %3, %22 : vector<16x128xf32>
    %cst_11 = arith.constant 9.99999974E-6 : f32
    %24 = vector.broadcast %cst_11 : f32 to vector<16x1xf32>
    %25 = arith.addf %21, %24 : vector<16x1xf32>
    %26 = math.rsqrt %25 : vector<16x1xf32>
    %27 = vector.broadcast %26 : vector<16x1xf32> to vector<16x128xf32>
    %28 = arith.mulf %23, %27 : vector<16x128xf32>
    %29 = vector.broadcast %8 : vector<1x128xf32> to vector<16x128xf32>
    %30 = arith.mulf %28, %29 : vector<16x128xf32>
    %31 = vector.broadcast %10 : vector<1x128xf32> to vector<16x128xf32>
    %32 = arith.addf %30, %31 : vector<16x128xf32>
    %33 = arith.truncf %32 : vector<16x128xf32> to vector<16x128xbf16>
    %c0_12 = arith.constant 0 : index
    %c0_13 = arith.constant 0 : index
    %c0_14 = arith.constant 0 : index
    %34 = vector.load %arg7[%c0_12, %c0_13, %c0_14] : memref<1x128x384xbf16, #tpu.memory_space<vmem>>, vector<1x128x384xbf16>
    %35 = vector.shape_cast %34 : vector<1x128x384xbf16> to vector<128x384xbf16>
    %cst_15 = arith.constant dense<0.000000e+00> : vector<16x384xf32>
    %36 = tpu.matmul %33, %35, %cst_15 {dimension_numbers = #tpu.dot_dimension_numbers<[1], [0], [0], [1], [0, 0, 1, 1], [], []>} : vector<16x128xbf16>, vector<128x384xbf16>, vector<16x384xf32> -> vector<16x384xf32>
    %37 = vector.shape_cast %36 : vector<16x384xf32> to vector<2x8x384xf32>
    %38 = vector.extract_strided_slice %37 {offsets = [0, 0, 0], sizes = [2, 8, 128], strides = [1, 1, 1]} : vector<2x8x384xf32> to vector<2x8x128xf32>
    %39 = vector.extract_strided_slice %37 {offsets = [0, 0, 128], sizes = [2, 8, 128], strides = [1, 1, 1]} : vector<2x8x384xf32> to vector<2x8x128xf32>
    %40 = vector.extract_strided_slice %37 {offsets = [0, 0, 256], sizes = [2, 8, 128], strides = [1, 1, 1]} : vector<2x8x384xf32> to vector<2x8x128xf32>
    %41 = vector.extract_strided_slice %38 {offsets = [0, 0, 0], sizes = [2, 8, 32], strides = [1, 1, 1]} : vector<2x8x128xf32> to vector<2x8x32xf32>
    %42 = vector.extract_strided_slice %39 {offsets = [0, 0, 0], sizes = [2, 8, 32], strides = [1, 1, 1]} : vector<2x8x128xf32> to vector<2x8x32xf32>
    %43 = vector.extract_strided_slice %40 {offsets = [0, 0, 0], sizes = [2, 8, 32], strides = [1, 1, 1]} : vector<2x8x128xf32> to vector<2x8x32xf32>
    %cst_16 = arith.constant dense<0.000000e+00> : vector<2x8x8xf32>
    %44 = tpu.matmul %41, %42, %cst_16 {dimension_numbers = #tpu.dot_dimension_numbers<[2], [2], [1], [1], [0, 0, 0, 1, 1, 1], [0], [0]>} : vector<2x8x32xf32>, vector<2x8x32xf32>, vector<2x8x8xf32> -> vector<2x8x8xf32>
    %cst_17 = arith.constant 0.176776692 : f32
    %45 = vector.broadcast %cst_17 : f32 to vector<2x8x8xf32>
    %46 = arith.mulf %44, %45 : vector<2x8x8xf32>
    %cst_18 = arith.constant -1.000000e+30 : f32
    %47 = vector.shape_cast %6 : vector<1x8x8xi1> to vector<1x8x8xi1>
    %48 = vector.broadcast %47 : vector<1x8x8xi1> to vector<2x8x8xi1>
    %49 = vector.broadcast %cst_18 : f32 to vector<2x8x8xf32>
    %50 = arith.select %48, %46, %49 : vector<2x8x8xi1>, vector<2x8x8xf32>
    %cst_19 = arith.constant dense<0xFF800000> : vector<2x8xf32>
    %51 = vector.multi_reduction <maximumf>, %50, %cst_19 [2] : vector<2x8x8xf32> to vector<2x8xf32>
    %52 = vector.shape_cast %51 : vector<2x8xf32> to vector<2x8x1xf32>
    %53 = vector.broadcast %52 : vector<2x8x1xf32> to vector<2x8x8xf32>
    %54 = arith.subf %50, %53 : vector<2x8x8xf32>
    %55 = math.exp %54 : vector<2x8x8xf32>
    %cst_20 = arith.constant dense<0.000000e+00> : vector<2x8xf32>
    %56 = vector.multi_reduction <add>, %55, %cst_20 [2] : vector<2x8x8xf32> to vector<2x8xf32>
    %57 = vector.shape_cast %56 : vector<2x8xf32> to vector<2x8x1xf32>
    %58 = tpu.reciprocal %57 {approx = true} : vector<2x8x1xf32> -> vector<2x8x1xf32>
    %59 = vector.broadcast %58 : vector<2x8x1xf32> to vector<2x8x8xf32>
    %60 = arith.mulf %55, %59 : vector<2x8x8xf32>
    %cst_21 = arith.constant dense<0.000000e+00> : vector<2x8x32xf32>
    %61 = tpu.matmul %60, %43, %cst_21 {dimension_numbers = #tpu.dot_dimension_numbers<[2], [1], [1], [2], [0, 0, 0, 1, 1, 2], [0], [0]>} : vector<2x8x8xf32>, vector<2x8x32xf32>, vector<2x8x32xf32> -> vector<2x8x32xf32>
    %c0_22 = arith.constant 0 : index
    %c0_23 = arith.constant 0 : index
    %c0_24 = arith.constant 0 : index
    %62 = vector.load %arg21[%c0_22, %c0_23, %c0_24] : memref<2x8x128xf32, #tpu.memory_space<vmem>>, vector<2x8x32xf32>
    tpu.vector_store %arg21[%c0_22, %c0_23, %c0_24], %61 {strides = array<i32>} : memref<2x8x128xf32, #tpu.memory_space<vmem>>, vector<2x8x32xf32>,
    %63 = vector.extract_strided_slice %38 {offsets = [0, 0, 32], sizes = [2, 8, 32], strides = [1, 1, 1]} : vector<2x8x128xf32> to vector<2x8x32xf32>
    %64 = vector.extract_strided_slice %39 {offsets = [0, 0, 32], sizes = [2, 8, 32], strides = [1, 1, 1]} : vector<2x8x128xf32> to vector<2x8x32xf32>
    %65 = vector.extract_strided_slice %40 {offsets = [0, 0, 32], sizes = [2, 8, 32], strides = [1, 1, 1]} : vector<2x8x128xf32> to vector<2x8x32xf32>
    %cst_25 = arith.constant dense<0.000000e+00> : vector<2x8x8xf32>
    %66 = tpu.matmul %63, %64, %cst_25 {dimension_numbers = #tpu.dot_dimension_numbers<[2], [2], [1], [1], [0, 0, 0, 1, 1, 1], [0], [0]>} : vector<2x8x32xf32>, vector<2x8x32xf32>, vector<2x8x8xf32> -> vector<2x8x8xf32>
    %cst_26 = arith.constant 0.176776692 : f32
    %67 = vector.broadcast %cst_26 : f32 to vector<2x8x8xf32>
    %68 = arith.mulf %66, %67 : vector<2x8x8xf32>
    %cst_27 = arith.constant -1.000000e+30 : f32
    %69 = vector.shape_cast %6 : vector<1x8x8xi1> to vector<1x8x8xi1>
    %70 = vector.broadcast %69 : vector<1x8x8xi1> to vector<2x8x8xi1>
    %71 = vector.broadcast %cst_27 : f32 to vector<2x8x8xf32>
    %72 = arith.select %70, %68, %71 : vector<2x8x8xi1>, vector<2x8x8xf32>
    %cst_28 = arith.constant dense<0xFF800000> : vector<2x8xf32>
    %73 = vector.multi_reduction <maximumf>, %72, %cst_28 [2] : vector<2x8x8xf32> to vector<2x8xf32>
    %74 = vector.shape_cast %73 : vector<2x8xf32> to vector<2x8x1xf32>
    %75 = vector.broadcast %74 : vector<2x8x1xf32> to vector<2x8x8xf32>
    %76 = arith.subf %72, %75 : vector<2x8x8xf32>
    %77 = math.exp %76 : vector<2x8x8xf32>
    %cst_29 = arith.constant dense<0.000000e+00> : vector<2x8xf32>
    %78 = vector.multi_reduction <add>, %77, %cst_29 [2] : vector<2x8x8xf32> to vector<2x8xf32>
    %79 = vector.shape_cast %78 : vector<2x8xf32> to vector<2x8x1xf32>
    %80 = tpu.reciprocal %79 {approx = true} : vector<2x8x1xf32> -> vector<2x8x1xf32>
    %81 = vector.broadcast %80 : vector<2x8x1xf32> to vector<2x8x8xf32>
    %82 = arith.mulf %77, %81 : vector<2x8x8xf32>
    %cst_30 = arith.constant dense<0.000000e+00> : vector<2x8x32xf32>
    %83 = tpu.matmul %82, %65, %cst_30 {dimension_numbers = #tpu.dot_dimension_numbers<[2], [1], [1], [2], [0, 0, 0, 1, 1, 2], [0], [0]>} : vector<2x8x8xf32>, vector<2x8x32xf32>, vector<2x8x32xf32> -> vector<2x8x32xf32>
    %c0_31 = arith.constant 0 : index
    %c0_32 = arith.constant 0 : index
    %c32 = arith.constant 32 : index
    %84 = vector.load %arg21[%c0_31, %c0_32, %c32] : memref<2x8x128xf32, #tpu.memory_space<vmem>>, vector<2x8x32xf32>
    tpu.vector_store %arg21[%c0_31, %c0_32, %c32], %83 {strides = array<i32>} : memref<2x8x128xf32, #tpu.memory_space<vmem>>, vector<2x8x32xf32>,
    %85 = vector.extract_strided_slice %38 {offsets = [0, 0, 64], sizes = [2, 8, 32], strides = [1, 1, 1]} : vector<2x8x128xf32> to vector<2x8x32xf32>
    %86 = vector.extract_strided_slice %39 {offsets = [0, 0, 64], sizes = [2, 8, 32], strides = [1, 1, 1]} : vector<2x8x128xf32> to vector<2x8x32xf32>
    %87 = vector.extract_strided_slice %40 {offsets = [0, 0, 64], sizes = [2, 8, 32], strides = [1, 1, 1]} : vector<2x8x128xf32> to vector<2x8x32xf32>
    %cst_33 = arith.constant dense<0.000000e+00> : vector<2x8x8xf32>
    %88 = tpu.matmul %85, %86, %cst_33 {dimension_numbers = #tpu.dot_dimension_numbers<[2], [2], [1], [1], [0, 0, 0, 1, 1, 1], [0], [0]>} : vector<2x8x32xf32>, vector<2x8x32xf32>, vector<2x8x8xf32> -> vector<2x8x8xf32>
    %cst_34 = arith.constant 0.176776692 : f32
    %89 = vector.broadcast %cst_34 : f32 to vector<2x8x8xf32>
    %90 = arith.mulf %88, %89 : vector<2x8x8xf32>
    %cst_35 = arith.constant -1.000000e+30 : f32
    %91 = vector.shape_cast %6 : vector<1x8x8xi1> to vector<1x8x8xi1>
    %92 = vector.broadcast %91 : vector<1x8x8xi1> to vector<2x8x8xi1>
    %93 = vector.broadcast %cst_35 : f32 to vector<2x8x8xf32>
    %94 = arith.select %92, %90, %93 : vector<2x8x8xi1>, vector<2x8x8xf32>
    %cst_36 = arith.constant dense<0xFF800000> : vector<2x8xf32>
    %95 = vector.multi_reduction <maximumf>, %94, %cst_36 [2] : vector<2x8x8xf32> to vector<2x8xf32>
    %96 = vector.shape_cast %95 : vector<2x8xf32> to vector<2x8x1xf32>
    %97 = vector.broadcast %96 : vector<2x8x1xf32> to vector<2x8x8xf32>
    %98 = arith.subf %94, %97 : vector<2x8x8xf32>
    %99 = math.exp %98 : vector<2x8x8xf32>
    %cst_37 = arith.constant dense<0.000000e+00> : vector<2x8xf32>
    %100 = vector.multi_reduction <add>, %99, %cst_37 [2] : vector<2x8x8xf32> to vector<2x8xf32>
    %101 = vector.shape_cast %100 : vector<2x8xf32> to vector<2x8x1xf32>
    %102 = tpu.reciprocal %101 {approx = true} : vector<2x8x1xf32> -> vector<2x8x1xf32>
    %103 = vector.broadcast %102 : vector<2x8x1xf32> to vector<2x8x8xf32>
    %104 = arith.mulf %99, %103 : vector<2x8x8xf32>
    %cst_38 = arith.constant dense<0.000000e+00> : vector<2x8x32xf32>
    %105 = tpu.matmul %104, %87, %cst_38 {dimension_numbers = #tpu.dot_dimension_numbers<[2], [1], [1], [2], [0, 0, 0, 1, 1, 2], [0], [0]>} : vector<2x8x8xf32>, vector<2x8x32xf32>, vector<2x8x32xf32> -> vector<2x8x32xf32>
    %c0_39 = arith.constant 0 : index
    %c0_40 = arith.constant 0 : index
    %c64 = arith.constant 64 : index
    %106 = vector.load %arg21[%c0_39, %c0_40, %c64] : memref<2x8x128xf32, #tpu.memory_space<vmem>>, vector<2x8x32xf32>
    tpu.vector_store %arg21[%c0_39, %c0_40, %c64], %105 {strides = array<i32>} : memref<2x8x128xf32, #tpu.memory_space<vmem>>, vector<2x8x32xf32>,
    %107 = vector.extract_strided_slice %38 {offsets = [0, 0, 96], sizes = [2, 8, 32], strides = [1, 1, 1]} : vector<2x8x128xf32> to vector<2x8x32xf32>
    %108 = vector.extract_strided_slice %39 {offsets = [0, 0, 96], sizes = [2, 8, 32], strides = [1, 1, 1]} : vector<2x8x128xf32> to vector<2x8x32xf32>
    %109 = vector.extract_strided_slice %40 {offsets = [0, 0, 96], sizes = [2, 8, 32], strides = [1, 1, 1]} : vector<2x8x128xf32> to vector<2x8x32xf32>
    %cst_41 = arith.constant dense<0.000000e+00> : vector<2x8x8xf32>
    %110 = tpu.matmul %107, %108, %cst_41 {dimension_numbers = #tpu.dot_dimension_numbers<[2], [2], [1], [1], [0, 0, 0, 1, 1, 1], [0], [0]>} : vector<2x8x32xf32>, vector<2x8x32xf32>, vector<2x8x8xf32> -> vector<2x8x8xf32>
    %cst_42 = arith.constant 0.176776692 : f32
    %111 = vector.broadcast %cst_42 : f32 to vector<2x8x8xf32>
    %112 = arith.mulf %110, %111 : vector<2x8x8xf32>
    %cst_43 = arith.constant -1.000000e+30 : f32
    %113 = vector.shape_cast %6 : vector<1x8x8xi1> to vector<1x8x8xi1>
    %114 = vector.broadcast %113 : vector<1x8x8xi1> to vector<2x8x8xi1>
    %115 = vector.broadcast %cst_43 : f32 to vector<2x8x8xf32>
    %116 = arith.select %114, %112, %115 : vector<2x8x8xi1>, vector<2x8x8xf32>
    %cst_44 = arith.constant dense<0xFF800000> : vector<2x8xf32>
    %117 = vector.multi_reduction <maximumf>, %116, %cst_44 [2] : vector<2x8x8xf32> to vector<2x8xf32>
    %118 = vector.shape_cast %117 : vector<2x8xf32> to vector<2x8x1xf32>
    %119 = vector.broadcast %118 : vector<2x8x1xf32> to vector<2x8x8xf32>
    %120 = arith.subf %116, %119 : vector<2x8x8xf32>
    %121 = math.exp %120 : vector<2x8x8xf32>
    %cst_45 = arith.constant dense<0.000000e+00> : vector<2x8xf32>
    %122 = vector.multi_reduction <add>, %121, %cst_45 [2] : vector<2x8x8xf32> to vector<2x8xf32>
    %123 = vector.shape_cast %122 : vector<2x8xf32> to vector<2x8x1xf32>
    %124 = tpu.reciprocal %123 {approx = true} : vector<2x8x1xf32> -> vector<2x8x1xf32>
    %125 = vector.broadcast %124 : vector<2x8x1xf32> to vector<2x8x8xf32>
    %126 = arith.mulf %121, %125 : vector<2x8x8xf32>
    %cst_46 = arith.constant dense<0.000000e+00> : vector<2x8x32xf32>
    %127 = tpu.matmul %126, %109, %cst_46 {dimension_numbers = #tpu.dot_dimension_numbers<[2], [1], [1], [2], [0, 0, 0, 1, 1, 2], [0], [0]>} : vector<2x8x8xf32>, vector<2x8x32xf32>, vector<2x8x32xf32> -> vector<2x8x32xf32>
    %c0_47 = arith.constant 0 : index
    %c0_48 = arith.constant 0 : index
    %c96 = arith.constant 96 : index
    %128 = vector.load %arg21[%c0_47, %c0_48, %c96] : memref<2x8x128xf32, #tpu.memory_space<vmem>>, vector<2x8x32xf32>
    tpu.vector_store %arg21[%c0_47, %c0_48, %c96], %127 {strides = array<i32>} : memref<2x8x128xf32, #tpu.memory_space<vmem>>, vector<2x8x32xf32>,
    %c0_49 = arith.constant 0 : index
    %c0_50 = arith.constant 0 : index
    %c0_51 = arith.constant 0 : index
    %129 = vector.load %arg21[%c0_49, %c0_50, %c0_51] : memref<2x8x128xf32, #tpu.memory_space<vmem>>, vector<2x8x128xf32>
    %130 = vector.shape_cast %129 : vector<2x8x128xf32> to vector<16x128xf32>
    %131 = arith.truncf %130 : vector<16x128xf32> to vector<16x128xbf16>
    %c0_52 = arith.constant 0 : index
    %c0_53 = arith.constant 0 : index
    %c0_54 = arith.constant 0 : index
    %132 = vector.load %arg8[%c0_52, %c0_53, %c0_54] : memref<1x128x128xbf16, #tpu.memory_space<vmem>>, vector<1x128x128xbf16>
    %133 = vector.shape_cast %132 : vector<1x128x128xbf16> to vector<128x128xbf16>
    %cst_55 = arith.constant dense<0.000000e+00> : vector<16x128xf32>
    %134 = tpu.matmul %131, %133, %cst_55 {dimension_numbers = #tpu.dot_dimension_numbers<[1], [0], [0], [1], [0, 0, 1, 1], [], []>} : vector<16x128xbf16>, vector<128x128xbf16>, vector<16x128xf32> -> vector<16x128xf32>
    %135 = arith.addf %3, %134 : vector<16x128xf32>
    %c0_56 = arith.constant 0 : index
    %c0_57 = arith.constant 0 : index
    %c0_58 = arith.constant 0 : index
    %136 = vector.load %arg9[%c0_56, %c0_57, %c0_58] : memref<1x1x128xf32, #tpu.memory_space<vmem>>, vector<1x1x128xf32>
    %137 = vector.shape_cast %136 : vector<1x1x128xf32> to vector<1x128xf32>
    %c0_59 = arith.constant 0 : index
    %c0_60 = arith.constant 0 : index
    %c0_61 = arith.constant 0 : index
    %138 = vector.load %arg10[%c0_59, %c0_60, %c0_61] : memref<1x1x128xf32, #tpu.memory_space<vmem>>, vector<1x1x128xf32>
    %139 = vector.shape_cast %138 : vector<1x1x128xf32> to vector<1x128xf32>
    %cst_62 = arith.constant dense<0.000000e+00> : vector<16xf32>
    %140 = vector.multi_reduction <add>, %135, %cst_62 [1] : vector<16x128xf32> to vector<16xf32>
    %141 = vector.shape_cast %140 : vector<16xf32> to vector<16x1xf32>
    %cst_63 = arith.constant 1.280000e+02 : f32
    %142 = vector.broadcast %cst_63 : f32 to vector<16x1xf32>
    %143 = arith.divf %141, %142 : vector<16x1xf32>
    %144 = vector.broadcast %143 : vector<16x1xf32> to vector<16x128xf32>
    %145 = arith.subf %135, %144 : vector<16x128xf32>
    %146 = arith.mulf %145, %145 : vector<16x128xf32>
    %cst_64 = arith.constant dense<0.000000e+00> : vector<16xf32>
    %147 = vector.multi_reduction <add>, %146, %cst_64 [1] : vector<16x128xf32> to vector<16xf32>
    %148 = vector.shape_cast %147 : vector<16xf32> to vector<16x1xf32>
    %cst_65 = arith.constant 1.280000e+02 : f32
    %149 = vector.broadcast %cst_65 : f32 to vector<16x1xf32>
    %150 = arith.divf %148, %149 : vector<16x1xf32>
    %151 = vector.broadcast %143 : vector<16x1xf32> to vector<16x128xf32>
    %152 = arith.subf %135, %151 : vector<16x128xf32>
    %cst_66 = arith.constant 9.99999974E-6 : f32
    %153 = vector.broadcast %cst_66 : f32 to vector<16x1xf32>
    %154 = arith.addf %150, %153 : vector<16x1xf32>
    %155 = math.rsqrt %154 : vector<16x1xf32>
    %156 = vector.broadcast %155 : vector<16x1xf32> to vector<16x128xf32>
    %157 = arith.mulf %152, %156 : vector<16x128xf32>
    %158 = vector.broadcast %137 : vector<1x128xf32> to vector<16x128xf32>
    %159 = arith.mulf %157, %158 : vector<16x128xf32>
    %160 = vector.broadcast %139 : vector<1x128xf32> to vector<16x128xf32>
    %161 = arith.addf %159, %160 : vector<16x128xf32>
    %162 = arith.truncf %161 : vector<16x128xf32> to vector<16x128xbf16>
    %c0_67 = arith.constant 0 : index
    %c0_68 = arith.constant 0 : index
    %c0_69 = arith.constant 0 : index
    %163 = vector.load %arg11[%c0_67, %c0_68, %c0_69] : memref<1x128x128xbf16, #tpu.memory_space<vmem>>, vector<1x128x128xbf16>
    %164 = vector.shape_cast %163 : vector<1x128x128xbf16> to vector<128x128xbf16>
    %cst_70 = arith.constant dense<0.000000e+00> : vector<16x128xf32>
    %165 = tpu.matmul %162, %164, %cst_70 {dimension_numbers = #tpu.dot_dimension_numbers<[1], [0], [0], [1], [0, 0, 1, 1], [], []>} : vector<16x128xbf16>, vector<128x128xbf16>, vector<16x128xf32> -> vector<16x128xf32>
    %166 = vector.shape_cast %165 : vector<16x128xf32> to vector<2x8x128xf32>
    %c0_71 = arith.constant 0 : index
    %c0_72 = arith.constant 0 : index
    %c0_73 = arith.constant 0 : index
    %167 = vector.load %arg3[%c0_71, %c0_72, %c0_73] : memref<2x8x128xf32, #tpu.memory_space<vmem>>, vector<2x8x128xf32>
    %c0_74 = arith.constant 0 : index
    %c0_75 = arith.constant 0 : index
    %c0_76 = arith.constant 0 : index
    %168 = vector.load %arg4[%c0_74, %c0_75, %c0_76] : memref<2x8x128xf32, #tpu.memory_space<vmem>>, vector<2x8x128xf32>
    %169 = vector.extract_strided_slice %167 {offsets = [0, 0, 0], sizes = [2, 8, 32], strides = [1, 1, 1]} : vector<2x8x128xf32> to vector<2x8x32xf32>
    %170 = vector.extract_strided_slice %168 {offsets = [0, 0, 0], sizes = [2, 8, 32], strides = [1, 1, 1]} : vector<2x8x128xf32> to vector<2x8x32xf32>
    %171 = vector.extract_strided_slice %166 {offsets = [0, 0, 0], sizes = [2, 8, 32], strides = [1, 1, 1]} : vector<2x8x128xf32> to vector<2x8x32xf32>
    %cst_77 = arith.constant dense<0.000000e+00> : vector<2x8x8xf32>
    %172 = tpu.matmul %169, %170, %cst_77 {dimension_numbers = #tpu.dot_dimension_numbers<[2], [2], [1], [1], [0, 0, 0, 1, 1, 1], [0], [0]>} : vector<2x8x32xf32>, vector<2x8x32xf32>, vector<2x8x8xf32> -> vector<2x8x8xf32>
    %cst_78 = arith.constant 0.176776692 : f32
    %173 = vector.broadcast %cst_78 : f32 to vector<2x8x8xf32>
    %174 = arith.mulf %172, %173 : vector<2x8x8xf32>
    %cst_79 = arith.constant dense<0xFF800000> : vector<2x8xf32>
    %175 = vector.multi_reduction <maximumf>, %174, %cst_79 [2] : vector<2x8x8xf32> to vector<2x8xf32>
    %176 = vector.shape_cast %175 : vector<2x8xf32> to vector<2x8x1xf32>
    %177 = vector.broadcast %176 : vector<2x8x1xf32> to vector<2x8x8xf32>
    %178 = arith.subf %174, %177 : vector<2x8x8xf32>
    %179 = math.exp %178 : vector<2x8x8xf32>
    %cst_80 = arith.constant dense<0.000000e+00> : vector<2x8xf32>
    %180 = vector.multi_reduction <add>, %179, %cst_80 [2] : vector<2x8x8xf32> to vector<2x8xf32>
    %181 = vector.shape_cast %180 : vector<2x8xf32> to vector<2x8x1xf32>
    %182 = tpu.reciprocal %181 {approx = true} : vector<2x8x1xf32> -> vector<2x8x1xf32>
    %183 = vector.broadcast %182 : vector<2x8x1xf32> to vector<2x8x8xf32>
    %184 = arith.mulf %179, %183 : vector<2x8x8xf32>
    %cst_81 = arith.constant dense<0.000000e+00> : vector<2x8x32xf32>
    %185 = tpu.matmul %184, %171, %cst_81 {dimension_numbers = #tpu.dot_dimension_numbers<[2], [1], [1], [2], [0, 0, 0, 1, 1, 2], [0], [0]>} : vector<2x8x8xf32>, vector<2x8x32xf32>, vector<2x8x32xf32> -> vector<2x8x32xf32>
    %c0_82 = arith.constant 0 : index
    %c0_83 = arith.constant 0 : index
    %c0_84 = arith.constant 0 : index
    %186 = vector.load %arg21[%c0_82, %c0_83, %c0_84] : memref<2x8x128xf32, #tpu.memory_space<vmem>>, vector<2x8x32xf32>
    tpu.vector_store %arg21[%c0_82, %c0_83, %c0_84], %185 {strides = array<i32>} : memref<2x8x128xf32, #tpu.memory_space<vmem>>, vector<2x8x32xf32>,
    %187 = vector.extract_strided_slice %167 {offsets = [0, 0, 32], sizes = [2, 8, 32], strides = [1, 1, 1]} : vector<2x8x128xf32> to vector<2x8x32xf32>
    %188 = vector.extract_strided_slice %168 {offsets = [0, 0, 32], sizes = [2, 8, 32], strides = [1, 1, 1]} : vector<2x8x128xf32> to vector<2x8x32xf32>
    %189 = vector.extract_strided_slice %166 {offsets = [0, 0, 32], sizes = [2, 8, 32], strides = [1, 1, 1]} : vector<2x8x128xf32> to vector<2x8x32xf32>
    %cst_85 = arith.constant dense<0.000000e+00> : vector<2x8x8xf32>
    %190 = tpu.matmul %187, %188, %cst_85 {dimension_numbers = #tpu.dot_dimension_numbers<[2], [2], [1], [1], [0, 0, 0, 1, 1, 1], [0], [0]>} : vector<2x8x32xf32>, vector<2x8x32xf32>, vector<2x8x8xf32> -> vector<2x8x8xf32>
    %cst_86 = arith.constant 0.176776692 : f32
    %191 = vector.broadcast %cst_86 : f32 to vector<2x8x8xf32>
    %192 = arith.mulf %190, %191 : vector<2x8x8xf32>
    %cst_87 = arith.constant dense<0xFF800000> : vector<2x8xf32>
    %193 = vector.multi_reduction <maximumf>, %192, %cst_87 [2] : vector<2x8x8xf32> to vector<2x8xf32>
    %194 = vector.shape_cast %193 : vector<2x8xf32> to vector<2x8x1xf32>
    %195 = vector.broadcast %194 : vector<2x8x1xf32> to vector<2x8x8xf32>
    %196 = arith.subf %192, %195 : vector<2x8x8xf32>
    %197 = math.exp %196 : vector<2x8x8xf32>
    %cst_88 = arith.constant dense<0.000000e+00> : vector<2x8xf32>
    %198 = vector.multi_reduction <add>, %197, %cst_88 [2] : vector<2x8x8xf32> to vector<2x8xf32>
    %199 = vector.shape_cast %198 : vector<2x8xf32> to vector<2x8x1xf32>
    %200 = tpu.reciprocal %199 {approx = true} : vector<2x8x1xf32> -> vector<2x8x1xf32>
    %201 = vector.broadcast %200 : vector<2x8x1xf32> to vector<2x8x8xf32>
    %202 = arith.mulf %197, %201 : vector<2x8x8xf32>
    %cst_89 = arith.constant dense<0.000000e+00> : vector<2x8x32xf32>
    %203 = tpu.matmul %202, %189, %cst_89 {dimension_numbers = #tpu.dot_dimension_numbers<[2], [1], [1], [2], [0, 0, 0, 1, 1, 2], [0], [0]>} : vector<2x8x8xf32>, vector<2x8x32xf32>, vector<2x8x32xf32> -> vector<2x8x32xf32>
    %c0_90 = arith.constant 0 : index
    %c0_91 = arith.constant 0 : index
    %c32_92 = arith.constant 32 : index
    %204 = vector.load %arg21[%c0_90, %c0_91, %c32_92] : memref<2x8x128xf32, #tpu.memory_space<vmem>>, vector<2x8x32xf32>
    tpu.vector_store %arg21[%c0_90, %c0_91, %c32_92], %203 {strides = array<i32>} : memref<2x8x128xf32, #tpu.memory_space<vmem>>, vector<2x8x32xf32>,
    %205 = vector.extract_strided_slice %167 {offsets = [0, 0, 64], sizes = [2, 8, 32], strides = [1, 1, 1]} : vector<2x8x128xf32> to vector<2x8x32xf32>
    %206 = vector.extract_strided_slice %168 {offsets = [0, 0, 64], sizes = [2, 8, 32], strides = [1, 1, 1]} : vector<2x8x128xf32> to vector<2x8x32xf32>
    %207 = vector.extract_strided_slice %166 {offsets = [0, 0, 64], sizes = [2, 8, 32], strides = [1, 1, 1]} : vector<2x8x128xf32> to vector<2x8x32xf32>
    %cst_93 = arith.constant dense<0.000000e+00> : vector<2x8x8xf32>
    %208 = tpu.matmul %205, %206, %cst_93 {dimension_numbers = #tpu.dot_dimension_numbers<[2], [2], [1], [1], [0, 0, 0, 1, 1, 1], [0], [0]>} : vector<2x8x32xf32>, vector<2x8x32xf32>, vector<2x8x8xf32> -> vector<2x8x8xf32>
    %cst_94 = arith.constant 0.176776692 : f32
    %209 = vector.broadcast %cst_94 : f32 to vector<2x8x8xf32>
    %210 = arith.mulf %208, %209 : vector<2x8x8xf32>
    %cst_95 = arith.constant dense<0xFF800000> : vector<2x8xf32>
    %211 = vector.multi_reduction <maximumf>, %210, %cst_95 [2] : vector<2x8x8xf32> to vector<2x8xf32>
    %212 = vector.shape_cast %211 : vector<2x8xf32> to vector<2x8x1xf32>
    %213 = vector.broadcast %212 : vector<2x8x1xf32> to vector<2x8x8xf32>
    %214 = arith.subf %210, %213 : vector<2x8x8xf32>
    %215 = math.exp %214 : vector<2x8x8xf32>
    %cst_96 = arith.constant dense<0.000000e+00> : vector<2x8xf32>
    %216 = vector.multi_reduction <add>, %215, %cst_96 [2] : vector<2x8x8xf32> to vector<2x8xf32>
    %217 = vector.shape_cast %216 : vector<2x8xf32> to vector<2x8x1xf32>
    %218 = tpu.reciprocal %217 {approx = true} : vector<2x8x1xf32> -> vector<2x8x1xf32>
    %219 = vector.broadcast %218 : vector<2x8x1xf32> to vector<2x8x8xf32>
    %220 = arith.mulf %215, %219 : vector<2x8x8xf32>
    %cst_97 = arith.constant dense<0.000000e+00> : vector<2x8x32xf32>
    %221 = tpu.matmul %220, %207, %cst_97 {dimension_numbers = #tpu.dot_dimension_numbers<[2], [1], [1], [2], [0, 0, 0, 1, 1, 2], [0], [0]>} : vector<2x8x8xf32>, vector<2x8x32xf32>, vector<2x8x32xf32> -> vector<2x8x32xf32>
    %c0_98 = arith.constant 0 : index
    %c0_99 = arith.constant 0 : index
    %c64_100 = arith.constant 64 : index
    %222 = vector.load %arg21[%c0_98, %c0_99, %c64_100] : memref<2x8x128xf32, #tpu.memory_space<vmem>>, vector<2x8x32xf32>
    tpu.vector_store %arg21[%c0_98, %c0_99, %c64_100], %221 {strides = array<i32>} : memref<2x8x128xf32, #tpu.memory_space<vmem>>, vector<2x8x32xf32>,
    %223 = vector.extract_strided_slice %167 {offsets = [0, 0, 96], sizes = [2, 8, 32], strides = [1, 1, 1]} : vector<2x8x128xf32> to vector<2x8x32xf32>
    %224 = vector.extract_strided_slice %168 {offsets = [0, 0, 96], sizes = [2, 8, 32], strides = [1, 1, 1]} : vector<2x8x128xf32> to vector<2x8x32xf32>
    %225 = vector.extract_strided_slice %166 {offsets = [0, 0, 96], sizes = [2, 8, 32], strides = [1, 1, 1]} : vector<2x8x128xf32> to vector<2x8x32xf32>
    %cst_101 = arith.constant dense<0.000000e+00> : vector<2x8x8xf32>
    %226 = tpu.matmul %223, %224, %cst_101 {dimension_numbers = #tpu.dot_dimension_numbers<[2], [2], [1], [1], [0, 0, 0, 1, 1, 1], [0], [0]>} : vector<2x8x32xf32>, vector<2x8x32xf32>, vector<2x8x8xf32> -> vector<2x8x8xf32>
    %cst_102 = arith.constant 0.176776692 : f32
    %227 = vector.broadcast %cst_102 : f32 to vector<2x8x8xf32>
    %228 = arith.mulf %226, %227 : vector<2x8x8xf32>
    %cst_103 = arith.constant dense<0xFF800000> : vector<2x8xf32>
    %229 = vector.multi_reduction <maximumf>, %228, %cst_103 [2] : vector<2x8x8xf32> to vector<2x8xf32>
    %230 = vector.shape_cast %229 : vector<2x8xf32> to vector<2x8x1xf32>
    %231 = vector.broadcast %230 : vector<2x8x1xf32> to vector<2x8x8xf32>
    %232 = arith.subf %228, %231 : vector<2x8x8xf32>
    %233 = math.exp %232 : vector<2x8x8xf32>
    %cst_104 = arith.constant dense<0.000000e+00> : vector<2x8xf32>
    %234 = vector.multi_reduction <add>, %233, %cst_104 [2] : vector<2x8x8xf32> to vector<2x8xf32>
    %235 = vector.shape_cast %234 : vector<2x8xf32> to vector<2x8x1xf32>
    %236 = tpu.reciprocal %235 {approx = true} : vector<2x8x1xf32> -> vector<2x8x1xf32>
    %237 = vector.broadcast %236 : vector<2x8x1xf32> to vector<2x8x8xf32>
    %238 = arith.mulf %233, %237 : vector<2x8x8xf32>
    %cst_105 = arith.constant dense<0.000000e+00> : vector<2x8x32xf32>
    %239 = tpu.matmul %238, %225, %cst_105 {dimension_numbers = #tpu.dot_dimension_numbers<[2], [1], [1], [2], [0, 0, 0, 1, 1, 2], [0], [0]>} : vector<2x8x8xf32>, vector<2x8x32xf32>, vector<2x8x32xf32> -> vector<2x8x32xf32>
    %c0_106 = arith.constant 0 : index
    %c0_107 = arith.constant 0 : index
    %c96_108 = arith.constant 96 : index
    %240 = vector.load %arg21[%c0_106, %c0_107, %c96_108] : memref<2x8x128xf32, #tpu.memory_space<vmem>>, vector<2x8x32xf32>
    tpu.vector_store %arg21[%c0_106, %c0_107, %c96_108], %239 {strides = array<i32>} : memref<2x8x128xf32, #tpu.memory_space<vmem>>, vector<2x8x32xf32>,
    %c0_109 = arith.constant 0 : index
    %c0_110 = arith.constant 0 : index
    %c0_111 = arith.constant 0 : index
    %241 = vector.load %arg21[%c0_109, %c0_110, %c0_111] : memref<2x8x128xf32, #tpu.memory_space<vmem>>, vector<2x8x128xf32>
    %242 = vector.shape_cast %241 : vector<2x8x128xf32> to vector<16x128xf32>
    %243 = arith.truncf %242 : vector<16x128xf32> to vector<16x128xbf16>
    %c0_112 = arith.constant 0 : index
    %c0_113 = arith.constant 0 : index
    %c0_114 = arith.constant 0 : index
    %244 = vector.load %arg12[%c0_112, %c0_113, %c0_114] : memref<1x128x128xbf16, #tpu.memory_space<vmem>>, vector<1x128x128xbf16>
    %245 = vector.shape_cast %244 : vector<1x128x128xbf16> to vector<128x128xbf16>
    %cst_115 = arith.constant dense<0.000000e+00> : vector<16x128xf32>
    %246 = tpu.matmul %243, %245, %cst_115 {dimension_numbers = #tpu.dot_dimension_numbers<[1], [0], [0], [1], [0, 0, 1, 1], [], []>} : vector<16x128xbf16>, vector<128x128xbf16>, vector<16x128xf32> -> vector<16x128xf32>
    %247 = arith.addf %135, %246 : vector<16x128xf32>
    %c0_116 = arith.constant 0 : index
    %c0_117 = arith.constant 0 : index
    %c0_118 = arith.constant 0 : index
    %248 = vector.load %arg13[%c0_116, %c0_117, %c0_118] : memref<1x1x128xf32, #tpu.memory_space<vmem>>, vector<1x1x128xf32>
    %249 = vector.shape_cast %248 : vector<1x1x128xf32> to vector<1x128xf32>
    %c0_119 = arith.constant 0 : index
    %c0_120 = arith.constant 0 : index
    %c0_121 = arith.constant 0 : index
    %250 = vector.load %arg14[%c0_119, %c0_120, %c0_121] : memref<1x1x128xf32, #tpu.memory_space<vmem>>, vector<1x1x128xf32>
    %251 = vector.shape_cast %250 : vector<1x1x128xf32> to vector<1x128xf32>
    %cst_122 = arith.constant dense<0.000000e+00> : vector<16xf32>
    %252 = vector.multi_reduction <add>, %247, %cst_122 [1] : vector<16x128xf32> to vector<16xf32>
    %253 = vector.shape_cast %252 : vector<16xf32> to vector<16x1xf32>
    %cst_123 = arith.constant 1.280000e+02 : f32
    %254 = vector.broadcast %cst_123 : f32 to vector<16x1xf32>
    %255 = arith.divf %253, %254 : vector<16x1xf32>
    %256 = vector.broadcast %255 : vector<16x1xf32> to vector<16x128xf32>
    %257 = arith.subf %247, %256 : vector<16x128xf32>
    %258 = arith.mulf %257, %257 : vector<16x128xf32>
    %cst_124 = arith.constant dense<0.000000e+00> : vector<16xf32>
    %259 = vector.multi_reduction <add>, %258, %cst_124 [1] : vector<16x128xf32> to vector<16xf32>
    %260 = vector.shape_cast %259 : vector<16xf32> to vector<16x1xf32>
    %cst_125 = arith.constant 1.280000e+02 : f32
    %261 = vector.broadcast %cst_125 : f32 to vector<16x1xf32>
    %262 = arith.divf %260, %261 : vector<16x1xf32>
    %263 = vector.broadcast %255 : vector<16x1xf32> to vector<16x128xf32>
    %264 = arith.subf %247, %263 : vector<16x128xf32>
    %cst_126 = arith.constant 9.99999974E-6 : f32
    %265 = vector.broadcast %cst_126 : f32 to vector<16x1xf32>
    %266 = arith.addf %262, %265 : vector<16x1xf32>
    %267 = math.rsqrt %266 : vector<16x1xf32>
    %268 = vector.broadcast %267 : vector<16x1xf32> to vector<16x128xf32>
    %269 = arith.mulf %264, %268 : vector<16x128xf32>
    %270 = vector.broadcast %249 : vector<1x128xf32> to vector<16x128xf32>
    %271 = arith.mulf %269, %270 : vector<16x128xf32>
    %272 = vector.broadcast %251 : vector<1x128xf32> to vector<16x128xf32>
    %273 = arith.addf %271, %272 : vector<16x128xf32>
    %274 = arith.truncf %273 : vector<16x128xf32> to vector<16x128xbf16>
    %cst_127 = arith.constant 0.000000e+00 : f32
    %275 = vector.broadcast %cst_127 : f32 to vector<16x128xf32>
    %c0_128 = arith.constant 0 : index
    %c0_129 = arith.constant 0 : index
    %c0_130 = arith.constant 0 : index
    %276 = vector.load %arg15[%c0_128, %c0_129, %c0_130] : memref<1x128x512xbf16, #tpu.memory_space<vmem>>, vector<1x128x128xbf16>
    %277 = vector.shape_cast %276 : vector<1x128x128xbf16> to vector<128x128xbf16>
    %cst_131 = arith.constant dense<0.000000e+00> : vector<16x128xf32>
    %278 = tpu.matmul %274, %277, %cst_131 {dimension_numbers = #tpu.dot_dimension_numbers<[1], [0], [0], [1], [0, 0, 1, 1], [], []>} : vector<16x128xbf16>, vector<128x128xbf16>, vector<16x128xf32> -> vector<16x128xf32>
    %c0_132 = arith.constant 0 : index
    %c0_133 = arith.constant 0 : index
    %c0_134 = arith.constant 0 : index
    %279 = vector.load %arg16[%c0_132, %c0_133, %c0_134] : memref<1x1x512xf32, #tpu.memory_space<vmem>>, vector<1x1x128xf32>
    %280 = vector.shape_cast %279 : vector<1x1x128xf32> to vector<1x128xf32>
    %281 = vector.broadcast %280 : vector<1x128xf32> to vector<16x128xf32>
    %282 = arith.addf %278, %281 : vector<16x128xf32>
    %283 = arith.mulf %282, %282 : vector<16x128xf32>
    %284 = arith.mulf %282, %283 : vector<16x128xf32>
    %cst_135 = arith.constant 4.471500e-02 : f32
    %285 = vector.broadcast %cst_135 : f32 to vector<16x128xf32>
    %286 = arith.mulf %285, %284 : vector<16x128xf32>
    %287 = arith.addf %282, %286 : vector<16x128xf32>
    %cst_136 = arith.constant 0.797884583 : f32
    %288 = vector.broadcast %cst_136 : f32 to vector<16x128xf32>
    %289 = arith.mulf %288, %287 : vector<16x128xf32>
    %290 = math.tanh %289 : vector<16x128xf32>
    %cst_137 = arith.constant 1.000000e+00 : f32
    %291 = vector.broadcast %cst_137 : f32 to vector<16x128xf32>
    %292 = arith.addf %291, %290 : vector<16x128xf32>
    %cst_138 = arith.constant 5.000000e-01 : f32
    %293 = vector.broadcast %cst_138 : f32 to vector<16x128xf32>
    %294 = arith.mulf %293, %292 : vector<16x128xf32>
    %295 = arith.mulf %282, %294 : vector<16x128xf32>
    %296 = arith.truncf %295 : vector<16x128xf32> to vector<16x128xbf16>
    %c0_139 = arith.constant 0 : index
    %c0_140 = arith.constant 0 : index
    %c0_141 = arith.constant 0 : index
    %297 = vector.load %arg17[%c0_139, %c0_140, %c0_141] : memref<1x512x128xbf16, #tpu.memory_space<vmem>>, vector<1x128x128xbf16>
    %298 = vector.shape_cast %297 : vector<1x128x128xbf16> to vector<128x128xbf16>
    %cst_142 = arith.constant dense<0.000000e+00> : vector<16x128xf32>
    %299 = tpu.matmul %296, %298, %cst_142 {dimension_numbers = #tpu.dot_dimension_numbers<[1], [0], [0], [1], [0, 0, 1, 1], [], []>} : vector<16x128xbf16>, vector<128x128xbf16>, vector<16x128xf32> -> vector<16x128xf32>
    %300 = arith.addf %275, %299 : vector<16x128xf32>
    %c0_143 = arith.constant 0 : index
    %c0_144 = arith.constant 0 : index
    %c128 = arith.constant 128 : index
    %301 = vector.load %arg15[%c0_143, %c0_144, %c128] : memref<1x128x512xbf16, #tpu.memory_space<vmem>>, vector<1x128x128xbf16>
    %302 = vector.shape_cast %301 : vector<1x128x128xbf16> to vector<128x128xbf16>
    %cst_145 = arith.constant dense<0.000000e+00> : vector<16x128xf32>
    %303 = tpu.matmul %274, %302, %cst_145 {dimension_numbers = #tpu.dot_dimension_numbers<[1], [0], [0], [1], [0, 0, 1, 1], [], []>} : vector<16x128xbf16>, vector<128x128xbf16>, vector<16x128xf32> -> vector<16x128xf32>
    %c0_146 = arith.constant 0 : index
    %c0_147 = arith.constant 0 : index
    %c128_148 = arith.constant 128 : index
    %304 = vector.load %arg16[%c0_146, %c0_147, %c128_148] : memref<1x1x512xf32, #tpu.memory_space<vmem>>, vector<1x1x128xf32>
    %305 = vector.shape_cast %304 : vector<1x1x128xf32> to vector<1x128xf32>
    %306 = vector.broadcast %305 : vector<1x128xf32> to vector<16x128xf32>
    %307 = arith.addf %303, %306 : vector<16x128xf32>
    %308 = arith.mulf %307, %307 : vector<16x128xf32>
    %309 = arith.mulf %307, %308 : vector<16x128xf32>
    %cst_149 = arith.constant 4.471500e-02 : f32
    %310 = vector.broadcast %cst_149 : f32 to vector<16x128xf32>
    %311 = arith.mulf %310, %309 : vector<16x128xf32>
    %312 = arith.addf %307, %311 : vector<16x128xf32>
    %cst_150 = arith.constant 0.797884583 : f32
    %313 = vector.broadcast %cst_150 : f32 to vector<16x128xf32>
    %314 = arith.mulf %313, %312 : vector<16x128xf32>
    %315 = math.tanh %314 : vector<16x128xf32>
    %cst_151 = arith.constant 1.000000e+00 : f32
    %316 = vector.broadcast %cst_151 : f32 to vector<16x128xf32>
    %317 = arith.addf %316, %315 : vector<16x128xf32>
    %cst_152 = arith.constant 5.000000e-01 : f32
    %318 = vector.broadcast %cst_152 : f32 to vector<16x128xf32>
    %319 = arith.mulf %318, %317 : vector<16x128xf32>
    %320 = arith.mulf %307, %319 : vector<16x128xf32>
    %321 = arith.truncf %320 : vector<16x128xf32> to vector<16x128xbf16>
    %c0_153 = arith.constant 0 : index
    %c128_154 = arith.constant 128 : index
    %c0_155 = arith.constant 0 : index
    %322 = vector.load %arg17[%c0_153, %c128_154, %c0_155] : memref<1x512x128xbf16, #tpu.memory_space<vmem>>, vector<1x128x128xbf16>
    %323 = vector.shape_cast %322 : vector<1x128x128xbf16> to vector<128x128xbf16>
    %cst_156 = arith.constant dense<0.000000e+00> : vector<16x128xf32>
    %324 = tpu.matmul %321, %323, %cst_156 {dimension_numbers = #tpu.dot_dimension_numbers<[1], [0], [0], [1], [0, 0, 1, 1], [], []>} : vector<16x128xbf16>, vector<128x128xbf16>, vector<16x128xf32> -> vector<16x128xf32>
    %325 = arith.addf %300, %324 : vector<16x128xf32>
    %c0_157 = arith.constant 0 : index
    %c0_158 = arith.constant 0 : index
    %c256 = arith.constant 256 : index
    %326 = vector.load %arg15[%c0_157, %c0_158, %c256] : memref<1x128x512xbf16, #tpu.memory_space<vmem>>, vector<1x128x128xbf16>
    %327 = vector.shape_cast %326 : vector<1x128x128xbf16> to vector<128x128xbf16>
    %cst_159 = arith.constant dense<0.000000e+00> : vector<16x128xf32>
    %328 = tpu.matmul %274, %327, %cst_159 {dimension_numbers = #tpu.dot_dimension_numbers<[1], [0], [0], [1], [0, 0, 1, 1], [], []>} : vector<16x128xbf16>, vector<128x128xbf16>, vector<16x128xf32> -> vector<16x128xf32>
    %c0_160 = arith.constant 0 : index
    %c0_161 = arith.constant 0 : index
    %c256_162 = arith.constant 256 : index
    %329 = vector.load %arg16[%c0_160, %c0_161, %c256_162] : memref<1x1x512xf32, #tpu.memory_space<vmem>>, vector<1x1x128xf32>
    %330 = vector.shape_cast %329 : vector<1x1x128xf32> to vector<1x128xf32>
    %331 = vector.broadcast %330 : vector<1x128xf32> to vector<16x128xf32>
    %332 = arith.addf %328, %331 : vector<16x128xf32>
    %333 = arith.mulf %332, %332 : vector<16x128xf32>
    %334 = arith.mulf %332, %333 : vector<16x128xf32>
    %cst_163 = arith.constant 4.471500e-02 : f32
    %335 = vector.broadcast %cst_163 : f32 to vector<16x128xf32>
    %336 = arith.mulf %335, %334 : vector<16x128xf32>
    %337 = arith.addf %332, %336 : vector<16x128xf32>
    %cst_164 = arith.constant 0.797884583 : f32
    %338 = vector.broadcast %cst_164 : f32 to vector<16x128xf32>
    %339 = arith.mulf %338, %337 : vector<16x128xf32>
    %340 = math.tanh %339 : vector<16x128xf32>
    %cst_165 = arith.constant 1.000000e+00 : f32
    %341 = vector.broadcast %cst_165 : f32 to vector<16x128xf32>
    %342 = arith.addf %341, %340 : vector<16x128xf32>
    %cst_166 = arith.constant 5.000000e-01 : f32
    %343 = vector.broadcast %cst_166 : f32 to vector<16x128xf32>
    %344 = arith.mulf %343, %342 : vector<16x128xf32>
    %345 = arith.mulf %332, %344 : vector<16x128xf32>
    %346 = arith.truncf %345 : vector<16x128xf32> to vector<16x128xbf16>
    %c0_167 = arith.constant 0 : index
    %c256_168 = arith.constant 256 : index
    %c0_169 = arith.constant 0 : index
    %347 = vector.load %arg17[%c0_167, %c256_168, %c0_169] : memref<1x512x128xbf16, #tpu.memory_space<vmem>>, vector<1x128x128xbf16>
    %348 = vector.shape_cast %347 : vector<1x128x128xbf16> to vector<128x128xbf16>
    %cst_170 = arith.constant dense<0.000000e+00> : vector<16x128xf32>
    %349 = tpu.matmul %346, %348, %cst_170 {dimension_numbers = #tpu.dot_dimension_numbers<[1], [0], [0], [1], [0, 0, 1, 1], [], []>} : vector<16x128xbf16>, vector<128x128xbf16>, vector<16x128xf32> -> vector<16x128xf32>
    %350 = arith.addf %325, %349 : vector<16x128xf32>
    %c0_171 = arith.constant 0 : index
    %c0_172 = arith.constant 0 : index
    %c384 = arith.constant 384 : index
    %351 = vector.load %arg15[%c0_171, %c0_172, %c384] : memref<1x128x512xbf16, #tpu.memory_space<vmem>>, vector<1x128x128xbf16>
    %352 = vector.shape_cast %351 : vector<1x128x128xbf16> to vector<128x128xbf16>
    %cst_173 = arith.constant dense<0.000000e+00> : vector<16x128xf32>
    %353 = tpu.matmul %274, %352, %cst_173 {dimension_numbers = #tpu.dot_dimension_numbers<[1], [0], [0], [1], [0, 0, 1, 1], [], []>} : vector<16x128xbf16>, vector<128x128xbf16>, vector<16x128xf32> -> vector<16x128xf32>
    %c0_174 = arith.constant 0 : index
    %c0_175 = arith.constant 0 : index
    %c384_176 = arith.constant 384 : index
    %354 = vector.load %arg16[%c0_174, %c0_175, %c384_176] : memref<1x1x512xf32, #tpu.memory_space<vmem>>, vector<1x1x128xf32>
    %355 = vector.shape_cast %354 : vector<1x1x128xf32> to vector<1x128xf32>
    %356 = vector.broadcast %355 : vector<1x128xf32> to vector<16x128xf32>
    %357 = arith.addf %353, %356 : vector<16x128xf32>
    %358 = arith.mulf %357, %357 : vector<16x128xf32>
    %359 = arith.mulf %357, %358 : vector<16x128xf32>
    %cst_177 = arith.constant 4.471500e-02 : f32
    %360 = vector.broadcast %cst_177 : f32 to vector<16x128xf32>
    %361 = arith.mulf %360, %359 : vector<16x128xf32>
    %362 = arith.addf %357, %361 : vector<16x128xf32>
    %cst_178 = arith.constant 0.797884583 : f32
    %363 = vector.broadcast %cst_178 : f32 to vector<16x128xf32>
    %364 = arith.mulf %363, %362 : vector<16x128xf32>
    %365 = math.tanh %364 : vector<16x128xf32>
    %cst_179 = arith.constant 1.000000e+00 : f32
    %366 = vector.broadcast %cst_179 : f32 to vector<16x128xf32>
    %367 = arith.addf %366, %365 : vector<16x128xf32>
    %cst_180 = arith.constant 5.000000e-01 : f32
    %368 = vector.broadcast %cst_180 : f32 to vector<16x128xf32>
    %369 = arith.mulf %368, %367 : vector<16x128xf32>
    %370 = arith.mulf %357, %369 : vector<16x128xf32>
    %371 = arith.truncf %370 : vector<16x128xf32> to vector<16x128xbf16>
    %c0_181 = arith.constant 0 : index
    %c384_182 = arith.constant 384 : index
    %c0_183 = arith.constant 0 : index
    %372 = vector.load %arg17[%c0_181, %c384_182, %c0_183] : memref<1x512x128xbf16, #tpu.memory_space<vmem>>, vector<1x128x128xbf16>
    %373 = vector.shape_cast %372 : vector<1x128x128xbf16> to vector<128x128xbf16>
    %cst_184 = arith.constant dense<0.000000e+00> : vector<16x128xf32>
    %374 = tpu.matmul %371, %373, %cst_184 {dimension_numbers = #tpu.dot_dimension_numbers<[1], [0], [0], [1], [0, 0, 1, 1], [], []>} : vector<16x128xbf16>, vector<128x128xbf16>, vector<16x128xf32> -> vector<16x128xf32>
    %375 = arith.addf %350, %374 : vector<16x128xf32>
    %376 = arith.addf %247, %375 : vector<16x128xf32>
    %c0_185 = arith.constant 0 : index
    %c0_186 = arith.constant 0 : index
    %c0_187 = arith.constant 0 : index
    %377 = vector.load %arg18[%c0_185, %c0_186, %c0_187] : memref<1x1x128xf32, #tpu.memory_space<vmem>>, vector<1x1x128xf32>
    %378 = vector.shape_cast %377 : vector<1x1x128xf32> to vector<1x128xf32>
    %379 = vector.broadcast %378 : vector<1x128xf32> to vector<16x128xf32>
    %380 = arith.addf %376, %379 : vector<16x128xf32>
    %c0_188 = arith.constant 0 : index
    %c0_189 = arith.constant 0 : index
    %381 = vector.load %arg20[%c0_188, %c0_189] : memref<16x128xf32, #tpu.memory_space<vmem>>, vector<16x128xf32>
    tpu.vector_store %arg20[%c0_188, %c0_189], %380 {strides = array<i32>} : memref<16x128xf32, #tpu.memory_space<vmem>>, vector<16x128xf32>,
    %c1_i32 = arith.constant 1 : i32
    %382 = arith.cmpi eq, %arg1, %c1_i32 : i32
    %383 = arith.extui %382 : i1 to i32
    %c0_i32_190 = arith.constant 0 : i32
    %384 = arith.cmpi ne, %383, %c0_i32_190 : i32
    scf.if %384 {
      %385 = vector.shape_cast %380 : vector<16x128xf32> to vector<2x8x128xf32>
      %c0_191 = arith.constant 0 : index
      %c0_192 = arith.constant 0 : index
      %c0_193 = arith.constant 0 : index
      %386 = vector.load %arg19[%c0_191, %c0_192, %c0_193] : memref<2x8x128xf32, #tpu.memory_space<vmem>>, vector<2x8x128xf32>
      tpu.vector_store %arg19[%c0_191, %c0_192, %c0_193], %385 {strides = array<i32>} : memref<2x8x128xf32, #tpu.memory_space<vmem>>, vector<2x8x128xf32>,
    } else {
    }
    return
  }
  func.func @transform_0(%arg0: i32, %arg1: i32) -> (i32, i32, i32) {
    %c0_i32 = arith.constant 0 : i32
    %c0_i32_0 = arith.constant 0 : i32
    %c0_i32_1 = arith.constant 0 : i32
    return %arg0, %c0_i32, %c0_i32_0 : i32, i32, i32
  }
  func.func @transform_1(%arg0: i32, %arg1: i32) -> (i32, i32, i32) {
    %c0_i32 = arith.constant 0 : i32
    %c0_i32_0 = arith.constant 0 : i32
    %c0_i32_1 = arith.constant 0 : i32
    return %arg0, %c0_i32, %c0_i32_0 : i32, i32, i32
  }
  func.func @transform_2(%arg0: i32, %arg1: i32) -> (i32, i32, i32) {
    %c0_i32 = arith.constant 0 : i32
    %c0_i32_0 = arith.constant 0 : i32
    %c0_i32_1 = arith.constant 0 : i32
    return %arg0, %c0_i32, %c0_i32_0 : i32, i32, i32
  }
  func.func @transform_3(%arg0: i32, %arg1: i32) -> (i32, i32, i32) {
    %c0_i32 = arith.constant 0 : i32
    %c0_i32_0 = arith.constant 0 : i32
    %c0_i32_1 = arith.constant 0 : i32
    return %arg1, %c0_i32, %c0_i32_0 : i32, i32, i32
  }
  func.func @transform_4(%arg0: i32, %arg1: i32) -> (i32, i32, i32) {
    %c0_i32 = arith.constant 0 : i32
    %c0_i32_0 = arith.constant 0 : i32
    %c0_i32_1 = arith.constant 0 : i32
    return %arg1, %c0_i32, %c0_i32_0 : i32, i32, i32
  }
  func.func @transform_5(%arg0: i32, %arg1: i32) -> (i32, i32, i32) {
    %c0_i32 = arith.constant 0 : i32
    %c0_i32_0 = arith.constant 0 : i32
    %c0_i32_1 = arith.constant 0 : i32
    return %arg1, %c0_i32, %c0_i32_0 : i32, i32, i32
  }
  func.func @transform_6(%arg0: i32, %arg1: i32) -> (i32, i32, i32) {
    %c0_i32 = arith.constant 0 : i32
    %c0_i32_0 = arith.constant 0 : i32
    %c0_i32_1 = arith.constant 0 : i32
    return %arg1, %c0_i32, %c0_i32_0 : i32, i32, i32
  }
  func.func @transform_7(%arg0: i32, %arg1: i32) -> (i32, i32, i32) {
    %c0_i32 = arith.constant 0 : i32
    %c0_i32_0 = arith.constant 0 : i32
    %c0_i32_1 = arith.constant 0 : i32
    return %arg1, %c0_i32, %c0_i32_0 : i32, i32, i32
  }
  func.func @transform_8(%arg0: i32, %arg1: i32) -> (i32, i32, i32) {
    %c0_i32 = arith.constant 0 : i32
    %c0_i32_0 = arith.constant 0 : i32
    %c0_i32_1 = arith.constant 0 : i32
    return %arg1, %c0_i32, %c0_i32_0 : i32, i32, i32
  }
  func.func @transform_9(%arg0: i32, %arg1: i32) -> (i32, i32, i32) {
    %c0_i32 = arith.constant 0 : i32
    %c0_i32_0 = arith.constant 0 : i32
    %c0_i32_1 = arith.constant 0 : i32
    return %arg1, %c0_i32, %c0_i32_0 : i32, i32, i32
  }
  func.func @transform_10(%arg0: i32, %arg1: i32) -> (i32, i32, i32) {
    %c0_i32 = arith.constant 0 : i32
    %c0_i32_0 = arith.constant 0 : i32
    %c0_i32_1 = arith.constant 0 : i32
    return %arg1, %c0_i32, %c0_i32_0 : i32, i32, i32
  }
  func.func @transform_11(%arg0: i32, %arg1: i32) -> (i32, i32, i32) {
    %c0_i32 = arith.constant 0 : i32
    %c0_i32_0 = arith.constant 0 : i32
    %c0_i32_1 = arith.constant 0 : i32
    return %arg1, %c0_i32, %c0_i32_0 : i32, i32, i32
  }
  func.func @transform_12(%arg0: i32, %arg1: i32) -> (i32, i32, i32) {
    %c0_i32 = arith.constant 0 : i32
    %c0_i32_0 = arith.constant 0 : i32
    %c0_i32_1 = arith.constant 0 : i32
    return %arg1, %c0_i32, %c0_i32_0 : i32, i32, i32
  }
  func.func @transform_13(%arg0: i32, %arg1: i32) -> (i32, i32, i32) {
    %c0_i32 = arith.constant 0 : i32
    %c0_i32_0 = arith.constant 0 : i32
    %c0_i32_1 = arith.constant 0 : i32
    return %arg1, %c0_i32, %c0_i32_0 : i32, i32, i32
  }
  func.func @transform_14(%arg0: i32, %arg1: i32) -> (i32, i32, i32) {
    %c0_i32 = arith.constant 0 : i32
    %c0_i32_0 = arith.constant 0 : i32
    %c0_i32_1 = arith.constant 0 : i32
    return %arg1, %c0_i32, %c0_i32_0 : i32, i32, i32
  }
  func.func @transform_15(%arg0: i32, %arg1: i32) -> (i32, i32, i32) {
    %c0_i32 = arith.constant 0 : i32
    %c0_i32_0 = arith.constant 0 : i32
    %c0_i32_1 = arith.constant 0 : i32
    return %arg1, %c0_i32, %c0_i32_0 : i32, i32, i32
  }
  func.func @transform_16(%arg0: i32, %arg1: i32) -> (i32, i32, i32) {
    %c0_i32 = arith.constant 0 : i32
    %c0_i32_0 = arith.constant 0 : i32
    %c0_i32_1 = arith.constant 0 : i32
    return %arg1, %c0_i32, %c0_i32_0 : i32, i32, i32
  }
  func.func @transform_17(%arg0: i32, %arg1: i32) -> (i32, i32, i32) {
    %c0_i32 = arith.constant 0 : i32
    %c0_i32_0 = arith.constant 0 : i32
    %c0_i32_1 = arith.constant 0 : i32
    return %arg0, %c0_i32, %c0_i32_0 : i32, i32, i32
  }
}

</mosaic_0001>

<llo_original>
// kernel: tpu_custom_call.1
$region0: #{tpu_custom_call.1}
  #allocation0 [shape = 'u32[]', space=smem, size = 0x4, offset = 0x4, fixed_abs, tag = 'smem constant byte address 0x4 - core index']
  #allocation1 [shape = 'u32[72,128]{1,0:T(1,128)}', space=vmem, size = 0x9000, scoped, tag = 'internal scratch']
  #allocation2 [shape = 'f32[16,128]{1,0:T(8,128)}', space=vmem, size = 0x2000, scoped, tag = 'scratch operand']
  #allocation3 [shape = 'f32[2,8,128]{2,1,0:T(8,128)}', space=vmem, size = 0x2000, scoped, tag = 'scratch operand']
  %s0 = inlined_call_operand.hbm [shape: f32[2,8,128], index: 0, kind: input, shape index: {}]
  %s1 = inlined_call_operand.hbm [shape: f32[2,8,128], index: 1, kind: input, shape index: {}]
  %s2 = inlined_call_operand.hbm [shape: f32[2,8,128], index: 2, kind: input, shape index: {}]
  %s3 = inlined_call_operand.vmem [shape: f32[2,1,128], index: 3, kind: input, shape index: {}]
  %s4 = inlined_call_operand.hbm [shape: f32[2,1,128], index: 4, kind: input, shape index: {}]
  %s5 = inlined_call_operand.hbm [shape: bf16[2,128,384], index: 5, kind: input, shape index: {}]
  %s6 = inlined_call_operand.hbm [shape: bf16[2,128,128], index: 6, kind: input, shape index: {}]
  %s7 = inlined_call_operand.vmem [shape: f32[2,1,128], index: 7, kind: input, shape index: {}]
  %s8 = inlined_call_operand.hbm [shape: f32[2,1,128], index: 8, kind: input, shape index: {}]
  %s9 = inlined_call_operand.hbm [shape: bf16[2,128,128], index: 9, kind: input, shape index: {}]
  %s10 = inlined_call_operand.hbm [shape: bf16[2,128,128], index: 10, kind: input, shape index: {}]
  %s11 = inlined_call_operand.hbm [shape: f32[2,1,128], index: 11, kind: input, shape index: {}]
  %s12 = inlined_call_operand.hbm [shape: f32[2,1,128], index: 12, kind: input, shape index: {}]
  %s13 = inlined_call_operand.hbm [shape: bf16[2,128,512], index: 13, kind: input, shape index: {}]
  %s14 = inlined_call_operand.vmem [shape: f32[2,1,512], index: 14, kind: input, shape index: {}]
  %s15 = inlined_call_operand.hbm [shape: bf16[2,512,128], index: 15, kind: input, shape index: {}]
  %s16 = inlined_call_operand.vmem [shape: f32[2,1,128], index: 16, kind: input, shape index: {}]
  %s17 = inlined_call_operand.hbm [shape: f32[2,8,128], index: 17, kind: output, shape index: {}]
  %s18 = sld [smem:[#allocation0]]
  $region161: #{tpu_custom_call.1} parent=0
    _
  %s20 = ssub.s32 1, %s18
  %s21 = scalar_select 0, %s20, %s18
  $region1: #{tpu_custom_call.1} parent=0
    #allocation4 [shape = 'u8[8192]{0}', space=vmem, size = 0x2000, scoped, tag = 'input window, operand 0, single buffered']
    #allocation5 [shape = 's32[2]{0}', space=sflag, size = 0x8, scoped, tag = 'scoped memory for tpu_custom_call.1']
    #allocation6 [shape = 's32[2]{0}', space=sflag, size = 0x8, scoped, tag = 'scoped memory for tpu_custom_call.1']
    #allocation7 [shape = 'u8[8192]{0}', space=vmem, size = 0x2000, scoped, tag = 'input window, operand 1, single buffered']
    #allocation8 [shape = 's32[1]{0}', space=sflag, size = 0x4, scoped, tag = 'scoped memory for tpu_custom_call.1']
    #allocation9 [shape = 'u8[8192]{0}', space=vmem, size = 0x2000, scoped, tag = 'input window, operand 2, single buffered']
    #allocation10 [shape = 'u8[1024]{0}', space=vmem, size = 0x400, scoped, tag = 'input window, operand 4']
    #allocation11 [shape = 's32[2]{0}', space=sflag, size = 0x8, scoped, tag = 'scoped memory for tpu_custom_call.1']
    #allocation12 [shape = 'u8[196608]{0}', space=vmem, size = 0x30000, scoped, tag = 'input window, operand 5']
    #allocation13 [shape = 'u8[65536]{0}', space=vmem, size = 0x10000, scoped, tag = 'input window, operand 6']
    #allocation14 [shape = 's32[2]{0}', space=sflag, size = 0x8, scoped, tag = 'scoped memory for tpu_custom_call.1']
    #allocation15 [shape = 'u8[1024]{0}', space=vmem, size = 0x400, scoped, tag = 'input window, operand 8']
    #allocation16 [shape = 'u8[65536]{0}', space=vmem, size = 0x10000, scoped, tag = 'input window, operand 9']
    #allocation17 [shape = 's32[2]{0}', space=sflag, size = 0x8, scoped, tag = 'scoped memory for tpu_custom_call.1']
    #allocation18 [shape = 'u8[65536]{0}', space=vmem, size = 0x10000, scoped, tag = 'input window, operand 10']
    #allocation19 [shape = 'u8[1024]{0}', space=vmem, size = 0x400, scoped, tag = 'input window, operand 11']
    #allocation20 [shape = 's32[2]{0}', space=sflag, size = 0x8, scoped, tag = 'scoped memory for tpu_custom_call.1']
    #allocation21 [shape = 'u8[1024]{0}', space=vmem, size = 0x400, scoped, tag = 'input window, operand 12']
    #allocation22 [shape = 'u8[262144]{0}', space=vmem, size = 0x40000, scoped, tag = 'input window, operand 13']
    #allocation23 [shape = 's32[2]{0}', space=sflag, size = 0x8, scoped, tag = 'scoped memory for tpu_custom_call.1']
    #allocation24 [shape = 'u8[262144]{0}', space=vmem, size = 0x40000, scoped, tag = 'input window, operand 15']
    #allocation25 [shape = 'u8[8192]{0}', space=vmem, size = 0x2000, scoped, tag = 'output window, operand 0, single buffered']
    %22 = vsyncpa [#allocation5], 0
    %23 = vsyncpa [#allocation8], 0
    %24 = vsyncpa [#allocation11], 0
    %s25 = scalar_lea.sflag [#allocation11], 1
    %26 = vsyncpa %s25, 0
    %27 = vsyncpa [#allocation14], 0
    %s28 = scalar_lea.sflag [#allocation14], 1
    %29 = vsyncpa %s28, 0
    %30 = vsyncpa [#allocation17], 0
    %s31 = scalar_lea.sflag [#allocation17], 1
    %32 = vsyncpa %s31, 0
    %33 = vsyncpa [#allocation20], 0
    %s34 = scalar_lea.sflag [#allocation20], 1
    %35 = vsyncpa %s34, 0
    %36 = vsyncpa [#allocation23], 0
    %s37 = scalar_lea.sflag [#allocation23], 1
    %38 = vsyncpa %s37, 0
    %39 = vsyncpa [#allocation6], 0
    loop: start=0, step=1, limit=4
    $region2: #{tpu_custom_call.1} parent=1 // loop_pre_header
      _
    $region3: #{tpu_custom_call.1} parent=1 // loop_header
      %s41 = sphi 0, %s45
      %p42 = scmp.ge.s32.totalorder %s41, 4
      %s48 = sphi 0, %s60
      %s49 = sphi 0, %s56
      %s50 = sphi 0, %s48
      %s51 = sphi 0, %s49
      %s52 = sphi 0, %s50
      %s53 = sphi 0, %s51
      %s63 = sphi 0, %s65
      %s66 = sphi 0, %s63
      %s67 = sphi 0, %s66
      %s83 = sphi 0, %s67
      %s89 = sphi 0, %s91
      %s92 = sphi 0, %s89
      %s93 = sphi 0, %s92
      %s109 = sphi 0, %s93
      %s115 = sphi 0, %s117
      %s118 = sphi 0, %s115
      %s119 = sphi 0, %s118
      %s135 = sphi 0, %s119
      %s141 = sphi 0, %s143
      %s144 = sphi 0, %s141
      %s145 = sphi 0, %s144
      %s161 = sphi 0, %s145
      %s167 = sphi 0, %s169
      %s170 = sphi 0, %s167
      %s171 = sphi 0, %s170
      %s187 = sphi 0, %s171
      %s193 = sphi 0, %s195
      %s196 = sphi 0, %s193
      %s197 = sphi 0, %s196
      %s213 = sphi 0, %s197
      %s219 = sphi 0, %s221
      %s222 = sphi 0, %s219
      %s223 = sphi 0, %s222
      %s239 = sphi 0, %s223
      %s245 = sphi 0, %s247
      %s248 = sphi 0, %s245
      %s249 = sphi 0, %s248
      %s265 = sphi 0, %s249
      %s271 = sphi 0, %s273
      %s274 = sphi 0, %s271
      %s275 = sphi 0, %s274
      %s291 = sphi 0, %s275
      %s297 = sphi 0, %s299
      %s300 = sphi 0, %s297
      %s301 = sphi 0, %s300
      %s317 = sphi 0, %s301
      %s323 = sphi 0, %s325
      %s326 = sphi 0, %s323
      %s327 = sphi 0, %s326
      %s343 = sphi 0, %s327
      %s349 = sphi 0, %s351
      %s352 = sphi 0, %s349
      %s353 = sphi 0, %s352
      %s369 = sphi 0, %s353
      %s375 = sphi 0, %s377
      %s378 = sphi 0, %s375
      %s379 = sphi 0, %s378
      %s395 = sphi 0, %s379
      %s401 = sphi 0, %s403
      %s404 = sphi 0, %s401
      %s405 = sphi 0, %s404
      %s421 = sphi 0, %s405
      %s427 = sphi 0, %s429
      %s430 = sphi 0, %s427
      %s431 = sphi 0, %s430
      %s447 = sphi 0, %s431
      %s453 = sphi 0, %s455
      %s456 = sphi 0, %s453
      %s457 = sphi 0, %s456
      %s473 = sphi 0, %s457
      %s479 = sphi 0, %s481
      %s482 = sphi 0, %s479
      %s483 = sphi 0, %s482
      %s499 = sphi 0, %s483
      %s505 = sphi 0, %s507
      %s508 = sphi 0, %s505
      %s509 = sphi 0, %s508
      %s525 = sphi 0, %s509
    $region4: #{tpu_custom_call.1} parent=1 // loop_header_branch
      %44 = sbr.rel (%p42) target = $region8
    $region5: #{tpu_custom_call.1} parent=1 // loop_body
      %s46 = ssub.s32 %s41, 1
      %s47 = ssub.s32 %s41, 2
      %s54 = sadd.s32 1, %s49
      %p55 = scmp.ge.s32.totalorder %s54, 2
      %s56 = scalar_select %p55, 0, %s54
      %s57 = sadd.s32 1, %s48
      %s58 = scalar_select %p55, %s57, %s48
      %p59 = scmp.ge.s32.totalorder %s58, 1
      %s60 = scalar_select %p59, 0, %s58
      %s61 = ssub.s32 %s48, %s60
      %p62 = scmp.eq.s32.totalorder %s61, 0
      %s64 = sadd.s32 %s63, 1
      %s65 = scalar_select %p62, %s63, %s64
      %p68 = pneg %p62
      %p69 = scmp.eq.s32.totalorder %s41, 1
      %p70 = por %p68, %p69
      %p71 = scmp.ne.s32.totalorder %s63, %s66
      %p72 = scmp.eq.s32.totalorder %s41, 0
      %p73 = por %p71, %p72
      %p74 = scmp.ne.s32.totalorder %s63, %s66
      %p75 = scmp.eq.s32.totalorder %s46, 1
      %p76 = por %p74, %p75
      %p77 = scmp.ne.s32.totalorder %s66, %s67
      %p78 = scmp.eq.s32.totalorder %s46, 0
      %p79 = por %p77, %p78
      %p80 = scmp.ne.s32.totalorder %s66, %s67
      %p81 = scmp.eq.s32.totalorder %s47, 1
      %p82 = por %p80, %p81
      %p84 = scmp.ne.s32.totalorder %s67, %s83
      %p85 = scmp.eq.s32.totalorder %s47, 0
      %p86 = por %p84, %p85
      %s87 = ssub.s32 %s48, %s60
      %p88 = scmp.eq.s32.totalorder %s87, 0
      %s90 = sadd.s32 %s89, 1
      %s91 = scalar_select %p88, %s89, %s90
      %p94 = pneg %p88
      %p95 = scmp.eq.s32.totalorder %s41, 1
      %p96 = por %p94, %p95
      %p97 = scmp.ne.s32.totalorder %s89, %s92
      %p98 = scmp.eq.s32.totalorder %s41, 0
      %p99 = por %p97, %p98
      %p100 = scmp.ne.s32.totalorder %s89, %s92
      %p101 = scmp.eq.s32.totalorder %s46, 1
      %p102 = por %p100, %p101
      %p103 = scmp.ne.s32.totalorder %s92, %s93
      %p104 = scmp.eq.s32.totalorder %s46, 0
      %p105 = por %p103, %p104
      %p106 = scmp.ne.s32.totalorder %s92, %s93
      %p107 = scmp.eq.s32.totalorder %s47, 1
      %p108 = por %p106, %p107
      %p110 = scmp.ne.s32.totalorder %s93, %s109
      %p111 = scmp.eq.s32.totalorder %s47, 0
      %p112 = por %p110, %p111
      %s113 = ssub.s32 %s48, %s60
      %p114 = scmp.eq.s32.totalorder %s113, 0
      %s116 = sadd.s32 %s115, 1
      %s117 = scalar_select %p114, %s115, %s116
      %p120 = pneg %p114
      %p121 = scmp.eq.s32.totalorder %s41, 1
      %p122 = por %p120, %p121
      %p123 = scmp.ne.s32.totalorder %s115, %s118
      %p124 = scmp.eq.s32.totalorder %s41, 0
      %p125 = por %p123, %p124
      %p126 = scmp.ne.s32.totalorder %s115, %s118
      %p127 = scmp.eq.s32.totalorder %s46, 1
      %p128 = por %p126, %p127
      %p129 = scmp.ne.s32.totalorder %s118, %s119
      %p130 = scmp.eq.s32.totalorder %s46, 0
      %p131 = por %p129, %p130
      %p132 = scmp.ne.s32.totalorder %s118, %s119
      %p133 = scmp.eq.s32.totalorder %s47, 1
      %p134 = por %p132, %p133
      %p136 = scmp.ne.s32.totalorder %s119, %s135
      %p137 = scmp.eq.s32.totalorder %s47, 0
      %p138 = por %p136, %p137
      %s139 = ssub.s32 %s49, %s56
      %p140 = scmp.eq.s32.totalorder %s139, 0
      %s142 = sadd.s32 %s141, 1
      %s143 = scalar_select %p140, %s141, %s142
      %p146 = pneg %p140
      %p147 = scmp.eq.s32.totalorder %s41, 1
      %p148 = por %p146, %p147
      %p149 = scmp.ne.s32.totalorder %s141, %s144
      %p150 = scmp.eq.s32.totalorder %s41, 0
      %p151 = por %p149, %p150
      %p152 = scmp.ne.s32.totalorder %s141, %s144
      %p153 = scmp.eq.s32.totalorder %s46, 1
      %p154 = por %p152, %p153
      %p155 = scmp.ne.s32.totalorder %s144, %s145
      %p156 = scmp.eq.s32.totalorder %s46, 0
      %p157 = por %p155, %p156
      %p158 = scmp.ne.s32.totalorder %s144, %s145
      %p159 = scmp.eq.s32.totalorder %s47, 1
      %p160 = por %p158, %p159
      %p162 = scmp.ne.s32.totalorder %s145, %s161
      %p163 = scmp.eq.s32.totalorder %s47, 0
      %p164 = por %p162, %p163
      %s165 = ssub.s32 %s49, %s56
      %p166 = scmp.eq.s32.totalorder %s165, 0
      %s168 = sadd.s32 %s167, 1
      %s169 = scalar_select %p166, %s167, %s168
      %p172 = pneg %p166
      %p173 = scmp.eq.s32.totalorder %s41, 1
      %p174 = por %p172, %p173
      %p175 = scmp.ne.s32.totalorder %s167, %s170
      %p176 = scmp.eq.s32.totalorder %s41, 0
      %p177 = por %p175, %p176
      %p178 = scmp.ne.s32.totalorder %s167, %s170
      %p179 = scmp.eq.s32.totalorder %s46, 1
      %p180 = por %p178, %p179
      %p181 = scmp.ne.s32.totalorder %s170, %s171
      %p182 = scmp.eq.s32.totalorder %s46, 0
      %p183 = por %p181, %p182
      %p184 = scmp.ne.s32.totalorder %s170, %s171
      %p185 = scmp.eq.s32.totalorder %s47, 1
      %p186 = por %p184, %p185
      %p188 = scmp.ne.s32.totalorder %s171, %s187
      %p189 = scmp.eq.s32.totalorder %s47, 0
      %p190 = por %p188, %p189
      %s191 = ssub.s32 %s49, %s56
      %p192 = scmp.eq.s32.totalorder %s191, 0
      %s194 = sadd.s32 %s193, 1
      %s195 = scalar_select %p192, %s193, %s194
      %p198 = pneg %p192
      %p199 = scmp.eq.s32.totalorder %s41, 1
      %p200 = por %p198, %p199
      %p201 = scmp.ne.s32.totalorder %s193, %s196
      %p202 = scmp.eq.s32.totalorder %s41, 0
      %p203 = por %p201, %p202
      %p204 = scmp.ne.s32.totalorder %s193, %s196
      %p205 = scmp.eq.s32.totalorder %s46, 1
      %p206 = por %p204, %p205
      %p207 = scmp.ne.s32.totalorder %s196, %s197
      %p208 = scmp.eq.s32.totalorder %s46, 0
      %p209 = por %p207, %p208
      %p210 = scmp.ne.s32.totalorder %s196, %s197
      %p211 = scmp.eq.s32.totalorder %s47, 1
      %p212 = por %p210, %p211
      %p214 = scmp.ne.s32.totalorder %s197, %s213
      %p215 = scmp.eq.s32.totalorder %s47, 0
      %p216 = por %p214, %p215
      %s217 = ssub.s32 %s49, %s56
      %p218 = scmp.eq.s32.totalorder %s217, 0
      %s220 = sadd.s32 %s219, 1
      %s221 = scalar_select %p218, %s219, %s220
      %p224 = pneg %p218
      %p225 = scmp.eq.s32.totalorder %s41, 1
      %p226 = por %p224, %p225
      %p227 = scmp.ne.s32.totalorder %s219, %s222
      %p228 = scmp.eq.s32.totalorder %s41, 0
      %p229 = por %p227, %p228
      %p230 = scmp.ne.s32.totalorder %s219, %s222
      %p231 = scmp.eq.s32.totalorder %s46, 1
      %p232 = por %p230, %p231
      %p233 = scmp.ne.s32.totalorder %s222, %s223
      %p234 = scmp.eq.s32.totalorder %s46, 0
      %p235 = por %p233, %p234
      %p236 = scmp.ne.s32.totalorder %s222, %s223
      %p237 = scmp.eq.s32.totalorder %s47, 1
      %p238 = por %p236, %p237
      %p240 = scmp.ne.s32.totalorder %s223, %s239
      %p241 = scmp.eq.s32.totalorder %s47, 0
      %p242 = por %p240, %p241
      %s243 = ssub.s32 %s49, %s56
      %p244 = scmp.eq.s32.totalorder %s243, 0
      %s246 = sadd.s32 %s245, 1
      %s247 = scalar_select %p244, %s245, %s246
      %p250 = pneg %p244
      %p251 = scmp.eq.s32.totalorder %s41, 1
      %p252 = por %p250, %p251
      %p253 = scmp.ne.s32.totalorder %s245, %s248
      %p254 = scmp.eq.s32.totalorder %s41, 0
      %p255 = por %p253, %p254
      %p256 = scmp.ne.s32.totalorder %s245, %s248
      %p257 = scmp.eq.s32.totalorder %s46, 1
      %p258 = por %p256, %p257
      %p259 = scmp.ne.s32.totalorder %s248, %s249
      %p260 = scmp.eq.s32.totalorder %s46, 0
      %p261 = por %p259, %p260
      %p262 = scmp.ne.s32.totalorder %s248, %s249
      %p263 = scmp.eq.s32.totalorder %s47, 1
      %p264 = por %p262, %p263
      %p266 = scmp.ne.s32.totalorder %s249, %s265
      %p267 = scmp.eq.s32.totalorder %s47, 0
      %p268 = por %p266, %p267
      %s269 = ssub.s32 %s49, %s56
      %p270 = scmp.eq.s32.totalorder %s269, 0
      %s272 = sadd.s32 %s271, 1
      %s273 = scalar_select %p270, %s271, %s272
      %p276 = pneg %p270
      %p277 = scmp.eq.s32.totalorder %s41, 1
      %p278 = por %p276, %p277
      %p279 = scmp.ne.s32.totalorder %s271, %s274
      %p280 = scmp.eq.s32.totalorder %s41, 0
      %p281 = por %p279, %p280
      %p282 = scmp.ne.s32.totalorder %s271, %s274
      %p283 = scmp.eq.s32.totalorder %s46, 1
      %p284 = por %p282, %p283
      %p285 = scmp.ne.s32.totalorder %s274, %s275
      %p286 = scmp.eq.s32.totalorder %s46, 0
      %p287 = por %p285, %p286
      %p288 = scmp.ne.s32.totalorder %s274, %s275
      %p289 = scmp.eq.s32.totalorder %s47, 1
      %p290 = por %p288, %p289
      %p292 = scmp.ne.s32.totalorder %s275, %s291
      %p293 = scmp.eq.s32.totalorder %s47, 0
      %p294 = por %p292, %p293
      %s295 = ssub.s32 %s49, %s56
      %p296 = scmp.eq.s32.totalorder %s295, 0
      %s298 = sadd.s32 %s297, 1
      %s299 = scalar_select %p296, %s297, %s298
      %p302 = pneg %p296
      %p303 = scmp.eq.s32.totalorder %s41, 1
      %p304 = por %p302, %p303
      %p305 = scmp.ne.s32.totalorder %s297, %s300
      %p306 = scmp.eq.s32.totalorder %s41, 0
      %p307 = por %p305, %p306
      %p308 = scmp.ne.s32.totalorder %s297, %s300
      %p309 = scmp.eq.s32.totalorder %s46, 1
      %p310 = por %p308, %p309
      %p311 = scmp.ne.s32.totalorder %s300, %s301
      %p312 = scmp.eq.s32.totalorder %s46, 0
      %p313 = por %p311, %p312
      %p314 = scmp.ne.s32.totalorder %s300, %s301
      %p315 = scmp.eq.s32.totalorder %s47, 1
      %p316 = por %p314, %p315
      %p318 = scmp.ne.s32.totalorder %s301, %s317
      %p319 = scmp.eq.s32.totalorder %s47, 0
      %p320 = por %p318, %p319
      %s321 = ssub.s32 %s49, %s56
      %p322 = scmp.eq.s32.totalorder %s321, 0
      %s324 = sadd.s32 %s323, 1
      %s325 = scalar_select %p322, %s323, %s324
      %p328 = pneg %p322
      %p329 = scmp.eq.s32.totalorder %s41, 1
      %p330 = por %p328, %p329
      %p331 = scmp.ne.s32.totalorder %s323, %s326
      %p332 = scmp.eq.s32.totalorder %s41, 0
      %p333 = por %p331, %p332
      %p334 = scmp.ne.s32.totalorder %s323, %s326
      %p335 = scmp.eq.s32.totalorder %s46, 1
      %p336 = por %p334, %p335
      %p337 = scmp.ne.s32.totalorder %s326, %s327
      %p338 = scmp.eq.s32.totalorder %s46, 0
      %p339 = por %p337, %p338
      %p340 = scmp.ne.s32.totalorder %s326, %s327
      %p341 = scmp.eq.s32.totalorder %s47, 1
      %p342 = por %p340, %p341
      %p344 = scmp.ne.s32.totalorder %s327, %s343
      %p345 = scmp.eq.s32.totalorder %s47, 0
      %p346 = por %p344, %p345
      %s347 = ssub.s32 %s49, %s56
      %p348 = scmp.eq.s32.totalorder %s347, 0
      %s350 = sadd.s32 %s349, 1
      %s351 = scalar_select %p348, %s349, %s350
      %p354 = pneg %p348
      %p355 = scmp.eq.s32.totalorder %s41, 1
      %p356 = por %p354, %p355
      %p357 = scmp.ne.s32.totalorder %s349, %s352
      %p358 = scmp.eq.s32.totalorder %s41, 0
      %p359 = por %p357, %p358
      %p360 = scmp.ne.s32.totalorder %s349, %s352
      %p361 = scmp.eq.s32.totalorder %s46, 1
      %p362 = por %p360, %p361
      %p363 = scmp.ne.s32.totalorder %s352, %s353
      %p364 = scmp.eq.s32.totalorder %s46, 0
      %p365 = por %p363, %p364
      %p366 = scmp.ne.s32.totalorder %s352, %s353
      %p367 = scmp.eq.s32.totalorder %s47, 1
      %p368 = por %p366, %p367
      %p370 = scmp.ne.s32.totalorder %s353, %s369
      %p371 = scmp.eq.s32.totalorder %s47, 0
      %p372 = por %p370, %p371
      %s373 = ssub.s32 %s49, %s56
      %p374 = scmp.eq.s32.totalorder %s373, 0
      %s376 = sadd.s32 %s375, 1
      %s377 = scalar_select %p374, %s375, %s376
      %p380 = pneg %p374
      %p381 = scmp.eq.s32.totalorder %s41, 1
      %p382 = por %p380, %p381
      %p383 = scmp.ne.s32.totalorder %s375, %s378
      %p384 = scmp.eq.s32.totalorder %s41, 0
      %p385 = por %p383, %p384
      %p386 = scmp.ne.s32.totalorder %s375, %s378
      %p387 = scmp.eq.s32.totalorder %s46, 1
      %p388 = por %p386, %p387
      %p389 = scmp.ne.s32.totalorder %s378, %s379
      %p390 = scmp.eq.s32.totalorder %s46, 0
      %p391 = por %p389, %p390
      %p392 = scmp.ne.s32.totalorder %s378, %s379
      %p393 = scmp.eq.s32.totalorder %s47, 1
      %p394 = por %p392, %p393
      %p396 = scmp.ne.s32.totalorder %s379, %s395
      %p397 = scmp.eq.s32.totalorder %s47, 0
      %p398 = por %p396, %p397
      %s399 = ssub.s32 %s49, %s56
      %p400 = scmp.eq.s32.totalorder %s399, 0
      %s402 = sadd.s32 %s401, 1
      %s403 = scalar_select %p400, %s401, %s402
      %p406 = pneg %p400
      %p407 = scmp.eq.s32.totalorder %s41, 1
      %p408 = por %p406, %p407
      %p409 = scmp.ne.s32.totalorder %s401, %s404
      %p410 = scmp.eq.s32.totalorder %s41, 0
      %p411 = por %p409, %p410
      %p412 = scmp.ne.s32.totalorder %s401, %s404
      %p413 = scmp.eq.s32.totalorder %s46, 1
      %p414 = por %p412, %p413
      %p415 = scmp.ne.s32.totalorder %s404, %s405
      %p416 = scmp.eq.s32.totalorder %s46, 0
      %p417 = por %p415, %p416
      %p418 = scmp.ne.s32.totalorder %s404, %s405
      %p419 = scmp.eq.s32.totalorder %s47, 1
      %p420 = por %p418, %p419
      %p422 = scmp.ne.s32.totalorder %s405, %s421
      %p423 = scmp.eq.s32.totalorder %s47, 0
      %p424 = por %p422, %p423
      %s425 = ssub.s32 %s49, %s56
      %p426 = scmp.eq.s32.totalorder %s425, 0
      %s428 = sadd.s32 %s427, 1
      %s429 = scalar_select %p426, %s427, %s428
      %p432 = pneg %p426
      %p433 = scmp.eq.s32.totalorder %s41, 1
      %p434 = por %p432, %p433
      %p435 = scmp.ne.s32.totalorder %s427, %s430
      %p436 = scmp.eq.s32.totalorder %s41, 0
      %p437 = por %p435, %p436
      %p438 = scmp.ne.s32.totalorder %s427, %s430
      %p439 = scmp.eq.s32.totalorder %s46, 1
      %p440 = por %p438, %p439
      %p441 = scmp.ne.s32.totalorder %s430, %s431
      %p442 = scmp.eq.s32.totalorder %s46, 0
      %p443 = por %p441, %p442
      %p444 = scmp.ne.s32.totalorder %s430, %s431
      %p445 = scmp.eq.s32.totalorder %s47, 1
      %p446 = por %p444, %p445
      %p448 = scmp.ne.s32.totalorder %s431, %s447
      %p449 = scmp.eq.s32.totalorder %s47, 0
      %p450 = por %p448, %p449
      %s451 = ssub.s32 %s49, %s56
      %p452 = scmp.eq.s32.totalorder %s451, 0
      %s454 = sadd.s32 %s453, 1
      %s455 = scalar_select %p452, %s453, %s454
      %p458 = pneg %p452
      %p459 = scmp.eq.s32.totalorder %s41, 1
      %p460 = por %p458, %p459
      %p461 = scmp.ne.s32.totalorder %s453, %s456
      %p462 = scmp.eq.s32.totalorder %s41, 0
      %p463 = por %p461, %p462
      %p464 = scmp.ne.s32.totalorder %s453, %s456
      %p465 = scmp.eq.s32.totalorder %s46, 1
      %p466 = por %p464, %p465
      %p467 = scmp.ne.s32.totalorder %s456, %s457
      %p468 = scmp.eq.s32.totalorder %s46, 0
      %p469 = por %p467, %p468
      %p470 = scmp.ne.s32.totalorder %s456, %s457
      %p471 = scmp.eq.s32.totalorder %s47, 1
      %p472 = por %p470, %p471
      %p474 = scmp.ne.s32.totalorder %s457, %s473
      %p475 = scmp.eq.s32.totalorder %s47, 0
      %p476 = por %p474, %p475
      %s477 = ssub.s32 %s49, %s56
      %p478 = scmp.eq.s32.totalorder %s477, 0
      %s480 = sadd.s32 %s479, 1
      %s481 = scalar_select %p478, %s479, %s480
      %p484 = pneg %p478
      %p485 = scmp.eq.s32.totalorder %s41, 1
      %p486 = por %p484, %p485
      %p487 = scmp.ne.s32.totalorder %s479, %s482
      %p488 = scmp.eq.s32.totalorder %s41, 0
      %p489 = por %p487, %p488
      %p490 = scmp.ne.s32.totalorder %s479, %s482
      %p491 = scmp.eq.s32.totalorder %s46, 1
      %p492 = por %p490, %p491
      %p493 = scmp.ne.s32.totalorder %s482, %s483
      %p494 = scmp.eq.s32.totalorder %s46, 0
      %p495 = por %p493, %p494
      %p496 = scmp.ne.s32.totalorder %s482, %s483
      %p497 = scmp.eq.s32.totalorder %s47, 1
      %p498 = por %p496, %p497
      %p500 = scmp.ne.s32.totalorder %s483, %s499
      %p501 = scmp.eq.s32.totalorder %s47, 0
      %p502 = por %p500, %p501
      %s503 = ssub.s32 %s48, %s60
      %p504 = scmp.eq.s32.totalorder %s503, 0
      %s506 = sadd.s32 %s505, 1
      %s507 = scalar_select %p504, %s505, %s506
      %p510 = pneg %p504
      %p511 = scmp.eq.s32.totalorder %s41, 1
      %p512 = por %p510, %p511
      %p513 = scmp.ne.s32.totalorder %s505, %s508
      %p514 = scmp.eq.s32.totalorder %s41, 0
      %p515 = por %p513, %p514
      %p516 = scmp.ne.s32.totalorder %s505, %s508
      %p517 = scmp.eq.s32.totalorder %s46, 1
      %p518 = por %p516, %p517
      %p519 = scmp.ne.s32.totalorder %s508, %s509
      %p520 = scmp.eq.s32.totalorder %s46, 0
      %p521 = por %p519, %p520
      %p522 = scmp.ne.s32.totalorder %s508, %s509
      %p523 = scmp.eq.s32.totalorder %s47, 1
      %p524 = por %p522, %p523
      %p526 = scmp.ne.s32.totalorder %s509, %s525
      %p527 = scmp.eq.s32.totalorder %s47, 0
      %p528 = por %p526, %p527
      %p529 = scmp.le.s32.totalorder 1, %s41
      %p530 = scmp.lt.s32.totalorder %s41, 3
      %p531 = pnand %p529, %p530
      %p532 = pneg %p531
      // Predicated region
      $region9: #{tpu_custom_call.1} parent=5 // pred_check
        _
      $region10: #{tpu_custom_call.1} parent=5 // pred_check_branch
        %534 = sbr.rel (%p531) target = $region12
      $region11: #{tpu_custom_call.1} parent=5 // pred_region
        %s535 = ssub.s32 %s41, 1
        // Predicated region
        $region13: #{tpu_custom_call.1} parent=11 // pred_check
          %p536 = pneg %p79
        $region14: #{tpu_custom_call.1} parent=11 // pred_check_branch
          %538 = sbr.rel (%p536) target = $region16
        $region15: #{tpu_custom_call.1} parent=11 // pred_region
          %s539 = smul.u32 2, %s50
          %541 = vsyncadd [#allocation5], 0
          %s542 = smul.addr %s539, 8
          %s543 = scalar_lea.hbm %s0, %s542
          %s544 = sshll.u32 %s543, 4
          %s545 = int_to_ptr.hbm [resolvable:$true] %s544
          %s546 = sshll.u32 [#allocation4], 4
          %s547 = int_to_ptr.vmem [resolvable:$true] %s546
          %552 = dma.hbm_to_vmem [thread:$0]  %s545, 256, %s547, [#allocation5], 128, 128, 8
        $region16: #{tpu_custom_call.1} parent=11 // pred_fallthru
          _
        // Predicated region
        $region17: #{tpu_custom_call.1} parent=11 // pred_check
          %p553 = pneg %p105
        $region18: #{tpu_custom_call.1} parent=11 // pred_check_branch
          %555 = sbr.rel (%p553) target = $region20
        $region19: #{tpu_custom_call.1} parent=11 // pred_region
          %s556 = smul.u32 2, %s50
          %558 = vsyncadd [#allocation8], 0
          %s559 = smul.addr %s556, 8
          %s560 = scalar_lea.hbm %s1, %s559
          %s561 = sshll.u32 %s560, 4
          %s562 = int_to_ptr.hbm [resolvable:$true] %s561
          %s563 = sshll.u32 [#allocation7], 4
          %s564 = int_to_ptr.vmem [resolvable:$true] %s563
          %569 = dma.hbm_to_vmem [thread:$0]  %s562, 256, %s564, [#allocation8], 128, 128, 8
        $region20: #{tpu_custom_call.1} parent=11 // pred_fallthru
          _
        // Predicated region
        $region21: #{tpu_custom_call.1} parent=11 // pred_check
          %p570 = pneg %p131
        $region22: #{tpu_custom_call.1} parent=11 // pred_check_branch
          %572 = sbr.rel (%p570) target = $region24
        $region23: #{tpu_custom_call.1} parent=11 // pred_region
          %s573 = smul.u32 2, %s50
          %575 = vsyncadd [#allocation8], 0
          %s576 = smul.addr %s573, 8
          %s577 = scalar_lea.hbm %s2, %s576
          %s578 = sshll.u32 %s577, 4
          %s579 = int_to_ptr.hbm [resolvable:$true] %s578
          %s580 = sshll.u32 [#allocation9], 4
          %s581 = int_to_ptr.vmem [resolvable:$true] %s580
          %586 = dma.hbm_to_vmem [thread:$0]  %s579, 256, %s581, [#allocation8], 128, 128, 8
        $region24: #{tpu_custom_call.1} parent=11 // pred_fallthru
          _
      $region12: #{tpu_custom_call.1} parent=5 // pred_fallthru
        _
      %p587 = scmp.lt.s32.totalorder %s41, 2
      // Predicated region
      $region25: #{tpu_custom_call.1} parent=5 // pred_check
        %p588 = pneg %p587
      $region26: #{tpu_custom_call.1} parent=5 // pred_check_branch
        %590 = sbr.rel (%p588) target = $region28
      $region27: #{tpu_custom_call.1} parent=5 // pred_region
        // Predicated region
        $region29: #{tpu_custom_call.1} parent=27 // pred_check
          %p591 = pneg %p151
        $region30: #{tpu_custom_call.1} parent=27 // pred_check_branch
          %593 = sbr.rel (%p591) target = $region32
        $region31: #{tpu_custom_call.1} parent=27 // pred_region
          %p594 = scmp.lt.s32.totalorder %s49, 1
          %s595 = scalar_select %p594, %s49, 1
          %s596 = scalar_lea.vmem %s3, %s595
        $region32: #{tpu_custom_call.1} parent=27 // pred_fallthru
          _
        // Predicated region
        $region33: #{tpu_custom_call.1} parent=27 // pred_check
          %p597 = pneg %p177
        $region34: #{tpu_custom_call.1} parent=27 // pred_check_branch
          %599 = sbr.rel (%p597) target = $region36
        $region35: #{tpu_custom_call.1} parent=27 // pred_region
          %s600 = sand.u32 %s41, 1
          %s601 = scalar_lea.sflag [#allocation11], %s600
          %s602 = sand.u32 %s167, 1
          %s603 = scalar_lea.vmem [#allocation10], %s602
          %605 = vsyncadd %s601, 0
          %s606 = scalar_lea.hbm %s4, %s49
          %s608 = sshll.u32 %s606, 4
          %s609 = int_to_ptr.hbm [resolvable:$true] %s608
          %s610 = sshll.u32 %s603, 4
          %s611 = int_to_ptr.vmem [resolvable:$true] %s610
          %613 = dma.hbm_to_vmem [thread:$0]  %s609, 16, %s611, %s601
        $region36: #{tpu_custom_call.1} parent=27 // pred_fallthru
          _
        // Predicated region
        $region37: #{tpu_custom_call.1} parent=27 // pred_check
          %p614 = pneg %p203
        $region38: #{tpu_custom_call.1} parent=27 // pred_check_branch
          %616 = sbr.rel (%p614) target = $region40
        $region39: #{tpu_custom_call.1} parent=27 // pred_region
          %s617 = sand.u32 %s41, 1
          %s618 = scalar_lea.sflag [#allocation11], %s617
          %s619 = sand.u32 %s193, 1
          %s620 = smul.addr %s619, 192
          %s621 = scalar_lea.vmem [#allocation12], %s620
          %623 = vsyncadd %s618, 0
          %s624 = smul.addr %s49, 48
          %s625 = smul.addr %s624, 4
          %s626 = scalar_lea.hbm %s5, %s625
          %s627 = sshll.u32 %s626, 4
          %s628 = int_to_ptr.hbm [resolvable:$true] %s627
          %s629 = sshll.u32 %s621, 4
          %s630 = int_to_ptr.vmem [resolvable:$true] %s629
          %635 = dma.hbm_to_vmem [thread:$0]  %s628, 3072, %s630, %s618, 192, 192, 12
        $region40: #{tpu_custom_call.1} parent=27 // pred_fallthru
          _
        // Predicated region
        $region41: #{tpu_custom_call.1} parent=27 // pred_check
          %p636 = pneg %p229
        $region42: #{tpu_custom_call.1} parent=27 // pred_check_branch
          %638 = sbr.rel (%p636) target = $region44
        $region43: #{tpu_custom_call.1} parent=27 // pred_region
          %s639 = sand.u32 %s41, 1
          %s640 = scalar_lea.sflag [#allocation14], %s639
          %s641 = sand.u32 %s219, 1
          %s642 = smul.addr %s641, 64
          %s643 = scalar_lea.vmem [#allocation13], %s642
          %645 = vsyncadd %s640, 0
          %s646 = smul.addr %s49, 16
          %s647 = smul.addr %s646, 4
          %s648 = scalar_lea.hbm %s6, %s647
          %s649 = sshll.u32 %s648, 4
          %s650 = int_to_ptr.hbm [resolvable:$true] %s649
          %s651 = sshll.u32 %s643, 4
          %s652 = int_to_ptr.vmem [resolvable:$true] %s651
          %657 = dma.hbm_to_vmem [thread:$0]  %s650, 1024, %s652, %s640, 64, 64, 4
        $region44: #{tpu_custom_call.1} parent=27 // pred_fallthru
          _
        // Predicated region
        $region45: #{tpu_custom_call.1} parent=27 // pred_check
          %p658 = pneg %p255
        $region46: #{tpu_custom_call.1} parent=27 // pred_check_branch
          %660 = sbr.rel (%p658) target = $region48
        $region47: #{tpu_custom_call.1} parent=27 // pred_region
          %p661 = scmp.lt.s32.totalorder %s49, 1
          %s662 = scalar_select %p661, %s49, 1
          %s663 = scalar_lea.vmem %s7, %s662
        $region48: #{tpu_custom_call.1} parent=27 // pred_fallthru
          _
        // Predicated region
        $region49: #{tpu_custom_call.1} parent=27 // pred_check
          %p664 = pneg %p281
        $region50: #{tpu_custom_call.1} parent=27 // pred_check_branch
          %666 = sbr.rel (%p664) target = $region52
        $region51: #{tpu_custom_call.1} parent=27 // pred_region
          %s667 = sand.u32 %s41, 1
          %s668 = scalar_lea.sflag [#allocation14], %s667
          %s669 = sand.u32 %s271, 1
          %s670 = scalar_lea.vmem [#allocation15], %s669
          %672 = vsyncadd %s668, 0
          %s673 = scalar_lea.hbm %s8, %s49
          %s675 = sshll.u32 %s673, 4
          %s676 = int_to_ptr.hbm [resolvable:$true] %s675
          %s677 = sshll.u32 %s670, 4
          %s678 = int_to_ptr.vmem [resolvable:$true] %s677
          %680 = dma.hbm_to_vmem [thread:$0]  %s676, 16, %s678, %s668
        $region52: #{tpu_custom_call.1} parent=27 // pred_fallthru
          _
        // Predicated region
        $region53: #{tpu_custom_call.1} parent=27 // pred_check
          %p681 = pneg %p307
        $region54: #{tpu_custom_call.1} parent=27 // pred_check_branch
          %683 = sbr.rel (%p681) target = $region56
        $region55: #{tpu_custom_call.1} parent=27 // pred_region
          %s684 = sand.u32 %s41, 1
          %s685 = scalar_lea.sflag [#allocation17], %s684
          %s686 = sand.u32 %s297, 1
          %s687 = smul.addr %s686, 64
          %s688 = scalar_lea.vmem [#allocation16], %s687
          %690 = vsyncadd %s685, 0
          %s691 = smul.addr %s49, 16
          %s692 = smul.addr %s691, 4
          %s693 = scalar_lea.hbm %s9, %s692
          %s694 = sshll.u32 %s693, 4
          %s695 = int_to_ptr.hbm [resolvable:$true] %s694
          %s696 = sshll.u32 %s688, 4
          %s697 = int_to_ptr.vmem [resolvable:$true] %s696
          %702 = dma.hbm_to_vmem [thread:$0]  %s695, 1024, %s697, %s685, 64, 64, 4
        $region56: #{tpu_custom_call.1} parent=27 // pred_fallthru
          _
        // Predicated region
        $region57: #{tpu_custom_call.1} parent=27 // pred_check
          %p703 = pneg %p333
        $region58: #{tpu_custom_call.1} parent=27 // pred_check_branch
          %705 = sbr.rel (%p703) target = $region60
        $region59: #{tpu_custom_call.1} parent=27 // pred_region
          %s706 = sand.u32 %s41, 1
          %s707 = scalar_lea.sflag [#allocation17], %s706
          %s708 = sand.u32 %s323, 1
          %s709 = smul.addr %s708, 64
          %s710 = scalar_lea.vmem [#allocation18], %s709
          %712 = vsyncadd %s707, 0
          %s713 = smul.addr %s49, 16
          %s714 = smul.addr %s713, 4
          %s715 = scalar_lea.hbm %s10, %s714
          %s716 = sshll.u32 %s715, 4
          %s717 = int_to_ptr.hbm [resolvable:$true] %s716
          %s718 = sshll.u32 %s710, 4
          %s719 = int_to_ptr.vmem [resolvable:$true] %s718
          %724 = dma.hbm_to_vmem [thread:$0]  %s717, 1024, %s719, %s707, 64, 64, 4
        $region60: #{tpu_custom_call.1} parent=27 // pred_fallthru
          _
        // Predicated region
        $region61: #{tpu_custom_call.1} parent=27 // pred_check
          %p725 = pneg %p359
        $region62: #{tpu_custom_call.1} parent=27 // pred_check_branch
          %727 = sbr.rel (%p725) target = $region64
        $region63: #{tpu_custom_call.1} parent=27 // pred_region
          %s728 = sand.u32 %s41, 1
          %s729 = scalar_lea.sflag [#allocation20], %s728
          %s730 = sand.u32 %s349, 1
          %s731 = scalar_lea.vmem [#allocation19], %s730
          %733 = vsyncadd %s729, 0
          %s734 = scalar_lea.hbm %s11, %s49
          %s736 = sshll.u32 %s734, 4
          %s737 = int_to_ptr.hbm [resolvable:$true] %s736
          %s738 = sshll.u32 %s731, 4
          %s739 = int_to_ptr.vmem [resolvable:$true] %s738
          %741 = dma.hbm_to_vmem [thread:$0]  %s737, 16, %s739, %s729
        $region64: #{tpu_custom_call.1} parent=27 // pred_fallthru
          _
        // Predicated region
        $region65: #{tpu_custom_call.1} parent=27 // pred_check
          %p742 = pneg %p385
        $region66: #{tpu_custom_call.1} parent=27 // pred_check_branch
          %744 = sbr.rel (%p742) target = $region68
        $region67: #{tpu_custom_call.1} parent=27 // pred_region
          %s745 = sand.u32 %s41, 1
          %s746 = scalar_lea.sflag [#allocation20], %s745
          %s747 = sand.u32 %s375, 1
          %s748 = scalar_lea.vmem [#allocation21], %s747
          %750 = vsyncadd %s746, 0
          %s751 = scalar_lea.hbm %s12, %s49
          %s753 = sshll.u32 %s751, 4
          %s754 = int_to_ptr.hbm [resolvable:$true] %s753
          %s755 = sshll.u32 %s748, 4
          %s756 = int_to_ptr.vmem [resolvable:$true] %s755
          %758 = dma.hbm_to_vmem [thread:$0]  %s754, 16, %s756, %s746
        $region68: #{tpu_custom_call.1} parent=27 // pred_fallthru
          _
        // Predicated region
        $region69: #{tpu_custom_call.1} parent=27 // pred_check
          %p759 = pneg %p411
        $region70: #{tpu_custom_call.1} parent=27 // pred_check_branch
          %761 = sbr.rel (%p759) target = $region72
        $region71: #{tpu_custom_call.1} parent=27 // pred_region
          %s762 = sand.u32 %s41, 1
          %s763 = scalar_lea.sflag [#allocation23], %s762
          %s764 = sand.u32 %s401, 1
          %s765 = smul.addr %s764, 256
          %s766 = scalar_lea.vmem [#allocation22], %s765
          %768 = vsyncadd %s763, 0
          %s769 = smul.addr %s49, 64
          %s770 = smul.addr %s769, 4
          %s771 = scalar_lea.hbm %s13, %s770
          %s772 = sshll.u32 %s771, 4
          %s773 = int_to_ptr.hbm [resolvable:$true] %s772
          %s774 = sshll.u32 %s766, 4
          %s775 = int_to_ptr.vmem [resolvable:$true] %s774
          %780 = dma.hbm_to_vmem [thread:$0]  %s773, 4096, %s775, %s763, 256, 256, 16
        $region72: #{tpu_custom_call.1} parent=27 // pred_fallthru
          _
        // Predicated region
        $region73: #{tpu_custom_call.1} parent=27 // pred_check
          %p781 = pneg %p437
        $region74: #{tpu_custom_call.1} parent=27 // pred_check_branch
          %783 = sbr.rel (%p781) target = $region76
        $region75: #{tpu_custom_call.1} parent=27 // pred_region
          %p784 = scmp.lt.s32.totalorder %s49, 1
          %s785 = scalar_select %p784, %s49, 1
          %s786 = smul.addr %s785, 4
          %s787 = scalar_lea.vmem %s14, %s786
        $region76: #{tpu_custom_call.1} parent=27 // pred_fallthru
          _
        // Predicated region
        $region77: #{tpu_custom_call.1} parent=27 // pred_check
          %p788 = pneg %p463
        $region78: #{tpu_custom_call.1} parent=27 // pred_check_branch
          %790 = sbr.rel (%p788) target = $region80
        $region79: #{tpu_custom_call.1} parent=27 // pred_region
          %s791 = sand.u32 %s41, 1
          %s792 = scalar_lea.sflag [#allocation23], %s791
          %s793 = sand.u32 %s453, 1
          %s794 = smul.addr %s793, 256
          %s795 = scalar_lea.vmem [#allocation24], %s794
          %797 = vsyncadd %s792, 0
          %s798 = smul.addr %s49, 64
          %s799 = smul.addr %s798, 4
          %s800 = scalar_lea.hbm %s15, %s799
          %s801 = sshll.u32 %s800, 4
          %s802 = int_to_ptr.hbm [resolvable:$true] %s801
          %s803 = sshll.u32 %s795, 4
          %s804 = int_to_ptr.vmem [resolvable:$true] %s803
          %809 = dma.hbm_to_vmem [thread:$0]  %s802, 4096, %s804, %s792, 64, 64, 4
        $region80: #{tpu_custom_call.1} parent=27 // pred_fallthru
          _
        // Predicated region
        $region81: #{tpu_custom_call.1} parent=27 // pred_check
          %p810 = pneg %p489
        $region82: #{tpu_custom_call.1} parent=27 // pred_check_branch
          %812 = sbr.rel (%p810) target = $region84
        $region83: #{tpu_custom_call.1} parent=27 // pred_region
          %p813 = scmp.lt.s32.totalorder %s49, 1
          %s814 = scalar_select %p813, %s49, 1
          %s815 = scalar_lea.vmem %s16, %s814
        $region84: #{tpu_custom_call.1} parent=27 // pred_fallthru
          _
      $region28: #{tpu_custom_call.1} parent=5 // pred_fallthru
        _
      %p816 = scmp.le.s32.totalorder 1, %s41
      %p817 = scmp.lt.s32.totalorder %s41, 3
      %p818 = pnand %p816, %p817
      %p819 = pneg %p818
      // Predicated region
      $region85: #{tpu_custom_call.1} parent=5 // pred_check
        _
      $region86: #{tpu_custom_call.1} parent=5 // pred_check_branch
        %821 = sbr.rel (%p818) target = $region88
      $region87: #{tpu_custom_call.1} parent=5 // pred_region
        %s822 = ssub.s32 %s41, 1
        // Predicated region
        $region89: #{tpu_custom_call.1} parent=87 // pred_check
          %p823 = pneg %p79
        $region90: #{tpu_custom_call.1} parent=87 // pred_check_branch
          %825 = sbr.rel (%p823) target = $region92
        $region91: #{tpu_custom_call.1} parent=87 // pred_region
          %827 = dma.done [#allocation5], 256
        $region92: #{tpu_custom_call.1} parent=87 // pred_fallthru
          _
        // Predicated region
        $region93: #{tpu_custom_call.1} parent=87 // pred_check
          %p828 = pneg %p105
        $region94: #{tpu_custom_call.1} parent=87 // pred_check_branch
          %830 = sbr.rel (%p828) target = $region96
        $region95: #{tpu_custom_call.1} parent=87 // pred_region
          %832 = dma.done [#allocation8], 256
        $region96: #{tpu_custom_call.1} parent=87 // pred_fallthru
          _
        // Predicated region
        $region97: #{tpu_custom_call.1} parent=87 // pred_check
          %p833 = pneg %p131
        $region98: #{tpu_custom_call.1} parent=87 // pred_check_branch
          %835 = sbr.rel (%p833) target = $region100
        $region99: #{tpu_custom_call.1} parent=87 // pred_region
          %837 = dma.done [#allocation8], 256
        $region100: #{tpu_custom_call.1} parent=87 // pred_fallthru
          _
        %s838 = sand.u32 %s46, 1
        %s839 = scalar_lea.sflag [#allocation11], %s838
        %s840 = sand.u32 %s170, 1
        %s841 = scalar_lea.vmem [#allocation10], %s840
        // Predicated region
        $region101: #{tpu_custom_call.1} parent=87 // pred_check
          %p842 = pneg %p183
        $region102: #{tpu_custom_call.1} parent=87 // pred_check_branch
          %844 = sbr.rel (%p842) target = $region104
        $region103: #{tpu_custom_call.1} parent=87 // pred_region
          %846 = dma.done %s839, 16
        $region104: #{tpu_custom_call.1} parent=87 // pred_fallthru
          _
        %s847 = sand.u32 %s46, 1
        %s848 = scalar_lea.sflag [#allocation11], %s847
        %s849 = sand.u32 %s196, 1
        %s850 = smul.addr %s849, 192
        %s851 = scalar_lea.vmem [#allocation12], %s850
        // Predicated region
        $region105: #{tpu_custom_call.1} parent=87 // pred_check
          %p852 = pneg %p209
        $region106: #{tpu_custom_call.1} parent=87 // pred_check_branch
          %854 = sbr.rel (%p852) target = $region108
        $region107: #{tpu_custom_call.1} parent=87 // pred_region
          %856 = dma.done %s848, 3072
        $region108: #{tpu_custom_call.1} parent=87 // pred_fallthru
          _
        %s857 = sand.u32 %s46, 1
        %s858 = scalar_lea.sflag [#allocation14], %s857
        %s859 = sand.u32 %s222, 1
        %s860 = smul.addr %s859, 64
        %s861 = scalar_lea.vmem [#allocation13], %s860
        // Predicated region
        $region109: #{tpu_custom_call.1} parent=87 // pred_check
          %p862 = pneg %p235
        $region110: #{tpu_custom_call.1} parent=87 // pred_check_branch
          %864 = sbr.rel (%p862) target = $region112
        $region111: #{tpu_custom_call.1} parent=87 // pred_region
          %866 = dma.done %s858, 1024
        $region112: #{tpu_custom_call.1} parent=87 // pred_fallthru
          _
        %s867 = sand.u32 %s46, 1
        %s868 = scalar_lea.sflag [#allocation14], %s867
        %s869 = sand.u32 %s274, 1
        %s870 = scalar_lea.vmem [#allocation15], %s869
        // Predicated region
        $region113: #{tpu_custom_call.1} parent=87 // pred_check
          %p871 = pneg %p287
        $region114: #{tpu_custom_call.1} parent=87 // pred_check_branch
          %873 = sbr.rel (%p871) target = $region116
        $region115: #{tpu_custom_call.1} parent=87 // pred_region
          %875 = dma.done %s868, 16
        $region116: #{tpu_custom_call.1} parent=87 // pred_fallthru
          _
        %s876 = sand.u32 %s46, 1
        %s877 = scalar_lea.sflag [#allocation17], %s876
        %s878 = sand.u32 %s300, 1
        %s879 = smul.addr %s878, 64
        %s880 = scalar_lea.vmem [#allocation16], %s879
        // Predicated region
        $region117: #{tpu_custom_call.1} parent=87 // pred_check
          %p881 = pneg %p313
        $region118: #{tpu_custom_call.1} parent=87 // pred_check_branch
          %883 = sbr.rel (%p881) target = $region120
        $region119: #{tpu_custom_call.1} parent=87 // pred_region
          %885 = dma.done %s877, 1024
        $region120: #{tpu_custom_call.1} parent=87 // pred_fallthru
          _
        %s886 = sand.u32 %s46, 1
        %s887 = scalar_lea.sflag [#allocation17], %s886
        %s888 = sand.u32 %s326, 1
        %s889 = smul.addr %s888, 64
        %s890 = scalar_lea.vmem [#allocation18], %s889
        // Predicated region
        $region121: #{tpu_custom_call.1} parent=87 // pred_check
          %p891 = pneg %p339
        $region122: #{tpu_custom_call.1} parent=87 // pred_check_branch
          %893 = sbr.rel (%p891) target = $region124
        $region123: #{tpu_custom_call.1} parent=87 // pred_region
          %895 = dma.done %s887, 1024
        $region124: #{tpu_custom_call.1} parent=87 // pred_fallthru
          _
        %s896 = sand.u32 %s46, 1
        %s897 = scalar_lea.sflag [#allocation20], %s896
        %s898 = sand.u32 %s352, 1
        %s899 = scalar_lea.vmem [#allocation19], %s898
        // Predicated region
        $region125: #{tpu_custom_call.1} parent=87 // pred_check
          %p900 = pneg %p365
        $region126: #{tpu_custom_call.1} parent=87 // pred_check_branch
          %902 = sbr.rel (%p900) target = $region128
        $region127: #{tpu_custom_call.1} parent=87 // pred_region
          %904 = dma.done %s897, 16
        $region128: #{tpu_custom_call.1} parent=87 // pred_fallthru
          _
        %s905 = sand.u32 %s46, 1
        %s906 = scalar_lea.sflag [#allocation20], %s905
        %s907 = sand.u32 %s378, 1
        %s908 = scalar_lea.vmem [#allocation21], %s907
        // Predicated region
        $region129: #{tpu_custom_call.1} parent=87 // pred_check
          %p909 = pneg %p391
        $region130: #{tpu_custom_call.1} parent=87 // pred_check_branch
          %911 = sbr.rel (%p909) target = $region132
        $region131: #{tpu_custom_call.1} parent=87 // pred_region
          %913 = dma.done %s906, 16
        $region132: #{tpu_custom_call.1} parent=87 // pred_fallthru
          _
        %s914 = sand.u32 %s46, 1
        %s915 = scalar_lea.sflag [#allocation23], %s914
        %s916 = sand.u32 %s404, 1
        %s917 = smul.addr %s916, 256
        %s918 = scalar_lea.vmem [#allocation22], %s917
        // Predicated region
        $region133: #{tpu_custom_call.1} parent=87 // pred_check
          %p919 = pneg %p417
        $region134: #{tpu_custom_call.1} parent=87 // pred_check_branch
          %921 = sbr.rel (%p919) target = $region136
        $region135: #{tpu_custom_call.1} parent=87 // pred_region
          %923 = dma.done %s915, 4096
        $region136: #{tpu_custom_call.1} parent=87 // pred_fallthru
          _
        %s924 = sand.u32 %s46, 1
        %s925 = scalar_lea.sflag [#allocation23], %s924
        %s926 = sand.u32 %s456, 1
        %s927 = smul.addr %s926, 256
        %s928 = scalar_lea.vmem [#allocation24], %s927
        // Predicated region
        $region137: #{tpu_custom_call.1} parent=87 // pred_check
          %p929 = pneg %p469
        $region138: #{tpu_custom_call.1} parent=87 // pred_check_branch
          %931 = sbr.rel (%p929) target = $region140
        $region139: #{tpu_custom_call.1} parent=87 // pred_region
          %933 = dma.done %s925, 4096
        $region140: #{tpu_custom_call.1} parent=87 // pred_fallthru
          _
        %p934 = pneg %p79
        %p935 = pneg %p76
        %p936 = pneg %p105
        %p937 = pneg %p102
        %p938 = pneg %p131
        %p939 = pneg %p128
        %p940 = scmp.lt.s32.totalorder %s51, 1
        %s941 = scalar_select %p940, %s51, 1
        %s942 = scalar_lea.vmem %s3, %s941
        %p943 = pneg %p157
        %p944 = pneg %p154
        %s945 = sand.u32 %s46, 1
        %s946 = scalar_lea.sflag [#allocation11], %s945
        %s947 = sand.u32 %s170, 1
        %s948 = scalar_lea.vmem [#allocation10], %s947
        %p949 = pneg %p183
        %p950 = pneg %p180
        %s951 = sand.u32 %s46, 1
        %s952 = scalar_lea.sflag [#allocation11], %s951
        %s953 = sand.u32 %s196, 1
        %s954 = smul.addr %s953, 192
        %s955 = scalar_lea.vmem [#allocation12], %s954
        %p956 = pneg %p209
        %p957 = pneg %p206
        %s958 = sand.u32 %s46, 1
        %s959 = scalar_lea.sflag [#allocation14], %s958
        %s960 = sand.u32 %s222, 1
        %s961 = smul.addr %s960, 64
        %s962 = scalar_lea.vmem [#allocation13], %s961
        %p963 = pneg %p235
        %p964 = pneg %p232
        %p965 = scmp.lt.s32.totalorder %s51, 1
        %s966 = scalar_select %p965, %s51, 1
        %s967 = scalar_lea.vmem %s7, %s966
        %p968 = pneg %p261
        %p969 = pneg %p258
        %s970 = sand.u32 %s46, 1
        %s971 = scalar_lea.sflag [#allocation14], %s970
        %s972 = sand.u32 %s274, 1
        %s973 = scalar_lea.vmem [#allocation15], %s972
        %p974 = pneg %p287
        %p975 = pneg %p284
        %s976 = sand.u32 %s46, 1
        %s977 = scalar_lea.sflag [#allocation17], %s976
        %s978 = sand.u32 %s300, 1
        %s979 = smul.addr %s978, 64
        %s980 = scalar_lea.vmem [#allocation16], %s979
        %p981 = pneg %p313
        %p982 = pneg %p310
        %s983 = sand.u32 %s46, 1
        %s984 = scalar_lea.sflag [#allocation17], %s983
        %s985 = sand.u32 %s326, 1
        %s986 = smul.addr %s985, 64
        %s987 = scalar_lea.vmem [#allocation18], %s986
        %p988 = pneg %p339
        %p989 = pneg %p336
        %s990 = sand.u32 %s46, 1
        %s991 = scalar_lea.sflag [#allocation20], %s990
        %s992 = sand.u32 %s352, 1
        %s993 = scalar_lea.vmem [#allocation19], %s992
        %p994 = pneg %p365
        %p995 = pneg %p362
        %s996 = sand.u32 %s46, 1
        %s997 = scalar_lea.sflag [#allocation20], %s996
        %s998 = sand.u32 %s378, 1
        %s999 = scalar_lea.vmem [#allocation21], %s998
        %p1000 = pneg %p391
        %p1001 = pneg %p388
        %s1002 = sand.u32 %s46, 1
        %s1003 = scalar_lea.sflag [#allocation23], %s1002
        %s1004 = sand.u32 %s404, 1
        %s1005 = smul.addr %s1004, 256
        %s1006 = scalar_lea.vmem [#allocation22], %s1005
        %p1007 = pneg %p417
        %p1008 = pneg %p414
        %p1009 = scmp.lt.s32.totalorder %s51, 1
        %s1010 = scalar_select %p1009, %s51, 1
        %s1011 = smul.addr %s1010, 4
        %s1012 = scalar_lea.vmem %s14, %s1011
        %p1013 = pneg %p443
        %p1014 = pneg %p440
        %s1015 = sand.u32 %s46, 1
        %s1016 = scalar_lea.sflag [#allocation23], %s1015
        %s1017 = sand.u32 %s456, 1
        %s1018 = smul.addr %s1017, 256
        %s1019 = scalar_lea.vmem [#allocation24], %s1018
        %p1020 = pneg %p469
        %p1021 = pneg %p466
        %p1022 = scmp.lt.s32.totalorder %s51, 1
        %s1023 = scalar_select %p1022, %s51, 1
        %s1024 = scalar_lea.vmem %s16, %s1023
        %p1025 = pneg %p495
        %p1026 = pneg %p492
        %p1027 = pneg %p521
        %p1028 = pneg %p518
        %s1029 = smul.u32 2, %s50
        %s1030 = smul.u32 2, %s50
        %s1031 = smul.u32 2, %s50
        %p1032 = scmp.lt.s32.totalorder %s51, 1
        %s1033 = scalar_select %p1032, %s51, 1
        %s1034 = scalar_lea.vmem %s3, %s1033
        %p1035 = scmp.lt.s32.totalorder %s51, 1
        %s1036 = scalar_select %p1035, %s51, 1
        %s1037 = scalar_lea.vmem %s7, %s1036
        %p1038 = scmp.lt.s32.totalorder %s51, 1
        %s1039 = scalar_select %p1038, %s51, 1
        %s1040 = smul.addr %s1039, 4
        %s1041 = scalar_lea.vmem %s14, %s1040
        %p1042 = scmp.lt.s32.totalorder %s51, 1
        %s1043 = scalar_select %p1042, %s51, 1
        %s1044 = scalar_lea.vmem %s16, %s1043
        %s1045 = smul.u32 2, %s50
        %p1046 = scmp.eq.s32.totalorder %s51, 0
        // Predicated region
        $region141: #{tpu_custom_call.1} parent=87 // pred_check
          %p1047 = pneg %p1046
        $region142: #{tpu_custom_call.1} parent=87 // pred_check_branch
          %1049 = sbr.rel (%p1047) target = $region144
        $region143: #{tpu_custom_call.1} parent=87 // pred_region
          %v1050 = vld [vmem:[#allocation4] sm:$0xff]
          %v1051 = vld [vmem:[#allocation4 + $0x8] sm:$0xff]
          %1052 = vst [vmem:[#allocation2] sm:$0xff] %v1050
          %1053 = vst [vmem:[#allocation2 + $0x8] sm:$0xff] %v1051
        $region144: #{tpu_custom_call.1} parent=87 // pred_fallthru
          _
        %v1054 = vld [vmem:[#allocation2] sm:$0xff]
        %v1055 = vld [vmem:[#allocation2 + $0x8] sm:$0xff]
        %v1056 = vlaneseq
        %v1057 = vshrl.u32 %v1056, 7
        %v1058 = vlaneseq
        %v1059 = vand.u32 %v1058, 127
        %vm1060 = vcmp.le.s32.totalorder %v1059, %v1057
        %v1061 = vld [vmem:[%s1034] sm:$0x1]
        %v1062 = vld [vmem:[%s841] sm:$0x1]
        %1063 = vadd.xlane.f32.xlu0 %v1054
        %v1064 = vpop.xlane.xlu0 %1063
        %1065 = vadd.xlane.f32.xlu0 %v1055
        %v1066 = vpop.xlane.xlu0 %1065
        %v1067 = vrcp.pop 128.0
        %v1068 = vmul.f32 128.0, %v1067
        %v1069 = vsub.f32 1.0, %v1068
        %v1070 = vmul.f32 %v1067, %v1069
        %v1071 = vadd.f32 %v1067, %v1070
        %vm1072 = vweird.f32 %v1067
        %v1073 = vsel %vm1072, %v1067, %v1071
        %v1074 = vmul.f32 %v1064, %v1073
        %v1075 = vmul.f32 %v1066, %v1073
        %v1076 = vsub.f32 %v1054, %v1074
        %v1077 = vsub.f32 %v1055, %v1075
        %v1078 = vmul.f32 %v1076, %v1076
        %v1079 = vmul.f32 %v1077, %v1077
        %1080 = vadd.xlane.f32.xlu0 %v1078
        %v1081 = vpop.xlane.xlu0 %1080
        %1082 = vadd.xlane.f32.xlu0 %v1079
        %v1083 = vpop.xlane.xlu0 %1082
        %v1084 = vmul.f32 %v1081, %v1073
        %v1085 = vmul.f32 %v1083, %v1073
        %v1086 = vadd.f32 %v1084, 1e-05
        %v1087 = vadd.f32 %v1085, 1e-05
        %v1088 = vrsqrt.pop %v1086
        %v1089 = vmul.f32 %v1088, %v1086
        %v1090 = vmul.f32 %v1089, %v1088
        %v1091 = vmul.f32 0.5, %v1090
        %v1092 = vsub.f32 1.5, %v1091
        %v1093 = vmul.f32 %v1088, %v1092
        %vm1094 = vweird.f32 %v1086
        %vm1095 = vweird.f32 %v1088
        %vm1096 = vmor %vm1094, %vm1095
        %v1097 = vsel %vm1096, %v1088, %v1093
        %v1098 = vrsqrt.pop %v1087
        %v1099 = vmul.f32 %v1098, %v1087
        %v1100 = vmul.f32 %v1099, %v1098
        %v1101 = vmul.f32 0.5, %v1100
        %v1102 = vsub.f32 1.5, %v1101
        %v1103 = vmul.f32 %v1098, %v1102
        %vm1104 = vweird.f32 %v1087
        %vm1105 = vweird.f32 %v1098
        %vm1106 = vmor %vm1104, %vm1105
        %v1107 = vsel %vm1106, %v1098, %v1103
        %v1108 = vmul.f32 %v1076, %v1097
        %v1109 = vmul.f32 %v1077, %v1107
        %v1111 = vperm.slane %v1061, 0
        %v1113 = vmul.f32 %v1108, %v1111
        %v1114 = vmul.f32 %v1109, %v1111
        %v1116 = vperm.slane %v1062, 0
        %v1118 = vadd.f32 %v1113, %v1116
        %v1119 = vadd.f32 %v1114, %v1116
        %v1120 = vpack.c.bf16 %v1119, %v1118
        %v1121 = vld [vmem:[%s851] sm:$0xff]
        %v1122 = vld [vmem:[%s851 + $0x8] sm:$0xf]
        %v1123 = vld [vmem:[%s851 + $0xc] sm:$0xff]
        %v1124 = vld [vmem:[%s851 + $0x14] sm:$0xf]
        %v1125 = vld [vmem:[%s851 + $0x18] sm:$0xff]
        %v1126 = vld [vmem:[%s851 + $0x20] sm:$0xf]
        %v1127 = vld [vmem:[%s851 + $0x24] sm:$0xff]
        %v1128 = vld [vmem:[%s851 + $0x2c] sm:$0xf]
        %v1129 = vld [vmem:[%s851 + $0x30] sm:$0xff]
        %v1130 = vld [vmem:[%s851 + $0x38] sm:$0xf]
        %v1131 = vld [vmem:[%s851 + $0x3c] sm:$0xff]
        %v1132 = vld [vmem:[%s851 + $0x44] sm:$0xf]
        %v1133 = vld [vmem:[%s851 + $0x48] sm:$0xff]
        %v1134 = vld [vmem:[%s851 + $0x50] sm:$0xf]
        %v1135 = vld [vmem:[%s851 + $0x54] sm:$0xff]
        %v1136 = vld [vmem:[%s851 + $0x5c] sm:$0xf]
        %v1137 = vld [vmem:[%s851 + $0x60] sm:$0xff]
        %v1138 = vld [vmem:[%s851 + $0x68] sm:$0xf]
        %v1139 = vld [vmem:[%s851 + $0x6c] sm:$0xff]
        %v1140 = vld [vmem:[%s851 + $0x74] sm:$0xf]
        %v1141 = vld [vmem:[%s851 + $0x78] sm:$0xff]
        %v1142 = vld [vmem:[%s851 + $0x80] sm:$0xf]
        %v1143 = vld [vmem:[%s851 + $0x84] sm:$0xff]
        %v1144 = vld [vmem:[%s851 + $0x8c] sm:$0xf]
        %v1145 = vld [vmem:[%s851 + $0x90] sm:$0xff]
        %v1146 = vld [vmem:[%s851 + $0x98] sm:$0xf]
        %v1147 = vld [vmem:[%s851 + $0x9c] sm:$0xff]
        %v1148 = vld [vmem:[%s851 + $0xa4] sm:$0xf]
        %v1149 = vld [vmem:[%s851 + $0xa8] sm:$0xff]
        %v1150 = vld [vmem:[%s851 + $0xb0] sm:$0xf]
        %v1151 = vld [vmem:[%s851 + $0xb4] sm:$0xff]
        %v1152 = vld [vmem:[%s851 + $0xbc] sm:$0xf]
        %v1185 = vunpack.c.l.b16 %v1121
        %v1186 = vunpack.c.h.b16 %v1121
        %v1187 = vunpack.c.l.b16 %v1122
        %v1188 = vunpack.c.l.b16 %v1123
        %v1189 = vunpack.c.h.b16 %v1123
        %v1190 = vunpack.c.l.b16 %v1124
        %v1191 = vunpack.c.l.b16 %v1125
        %v1192 = vunpack.c.h.b16 %v1125
        %v1193 = vunpack.c.l.b16 %v1126
        %v1194 = vunpack.c.l.b16 %v1127
        %v1195 = vunpack.c.h.b16 %v1127
        %v1196 = vunpack.c.l.b16 %v1128
        %v1197 = vunpack.c.l.b16 %v1129
        %v1198 = vunpack.c.h.b16 %v1129
        %v1199 = vunpack.c.l.b16 %v1130
        %v1200 = vunpack.c.l.b16 %v1131
        %v1201 = vunpack.c.h.b16 %v1131
        %v1202 = vunpack.c.l.b16 %v1132
        %v1203 = vunpack.c.l.b16 %v1133
        %v1204 = vunpack.c.h.b16 %v1133
        %v1205 = vunpack.c.l.b16 %v1134
        %v1206 = vunpack.c.l.b16 %v1135
        %v1207 = vunpack.c.h.b16 %v1135
        %v1208 = vunpack.c.l.b16 %v1136
        %v1209 = vunpack.c.l.b16 %v1137
        %v1210 = vunpack.c.h.b16 %v1137
        %v1211 = vunpack.c.l.b16 %v1138
        %v1212 = vunpack.c.l.b16 %v1139
        %v1213 = vunpack.c.h.b16 %v1139
        %v1214 = vunpack.c.l.b16 %v1140
        %v1215 = vunpack.c.l.b16 %v1141
        %v1216 = vunpack.c.h.b16 %v1141
        %v1217 = vunpack.c.l.b16 %v1142
        %v1218 = vunpack.c.l.b16 %v1143
        %v1219 = vunpack.c.h.b16 %v1143
        %v1220 = vunpack.c.l.b16 %v1144
        %v1221 = vunpack.c.l.b16 %v1145
        %v1222 = vunpack.c.h.b16 %v1145
        %v1223 = vunpack.c.l.b16 %v1146
        %v1224 = vunpack.c.l.b16 %v1147
        %v1225 = vunpack.c.h.b16 %v1147
        %v1226 = vunpack.c.l.b16 %v1148
        %v1227 = vunpack.c.l.b16 %v1149
        %v1228 = vunpack.c.h.b16 %v1149
        %v1229 = vunpack.c.l.b16 %v1150
        %v1230 = vunpack.c.l.b16 %v1151
        %v1231 = vunpack.c.h.b16 %v1151
        %v1232 = vunpack.c.l.b16 %v1152
        %v1233 = vpack.c.b16 %v1188, %v1185
        %v1234 = vpack.c.b16 %v1189, %v1186
        %v1235 = vpack.c.b16 %v1190, %v1187
        %v1236 = vpack.c.b16 %v1194, %v1191
        %v1237 = vpack.c.b16 %v1195, %v1192
        %v1238 = vpack.c.b16 %v1196, %v1193
        %v1239 = vpack.c.b16 %v1200, %v1197
        %v1240 = vpack.c.b16 %v1201, %v1198
        %v1241 = vpack.c.b16 %v1202, %v1199
        %v1242 = vpack.c.b16 %v1206, %v1203
        %v1243 = vpack.c.b16 %v1207, %v1204
        %v1244 = vpack.c.b16 %v1208, %v1205
        %v1245 = vpack.c.b16 %v1212, %v1209
        %v1246 = vpack.c.b16 %v1213, %v1210
        %v1247 = vpack.c.b16 %v1214, %v1211
        %v1248 = vpack.c.b16 %v1218, %v1215
        %v1249 = vpack.c.b16 %v1219, %v1216
        %v1250 = vpack.c.b16 %v1220, %v1217
        %v1251 = vpack.c.b16 %v1224, %v1221
        %v1252 = vpack.c.b16 %v1225, %v1222
        %v1253 = vpack.c.b16 %v1226, %v1223
        %v1254 = vpack.c.b16 %v1230, %v1227
        %v1255 = vpack.c.b16 %v1231, %v1228
        %v1256 = vpack.c.b16 %v1232, %v1229
        %1281 = vmatpush.bf16.msra.mxu0 %v1254
        %1282 = vmatpush.bf16.msra.mxu0 %v1251
        %1283 = vmatpush.bf16.msra.mxu0 %v1248
        %1284 = vmatpush.bf16.msra.mxu0 %v1245
        %1285 = vmatpush.bf16.msra.mxu0 %v1242
        %1286 = vmatpush.bf16.msra.mxu0 %v1239
        %1287 = vmatpush.bf16.msra.mxu0 %v1236
        %1288 = vmatpush.bf16.msra.mxu0 %v1233
        %1289 = vmatmul.bf16.gmra.mxu0 %v1120
        %v1290 = vpop.f32.mrf.mxu0
        %v1291 = vadd.f32 0.0, %v1290
        %v1292 = vpop.f32.mrf.mxu0
        %v1293 = vadd.f32 0.0, %v1292
        %1294 = vdwg.mxu0
        %1295 = vmatpush.bf16.msra.mxu0 %v1255
        %1296 = vmatpush.bf16.msra.mxu0 %v1252
        %1297 = vmatpush.bf16.msra.mxu0 %v1249
        %1298 = vmatpush.bf16.msra.mxu0 %v1246
        %1299 = vmatpush.bf16.msra.mxu0 %v1243
        %1300 = vmatpush.bf16.msra.mxu0 %v1240
        %1301 = vmatpush.bf16.msra.mxu0 %v1237
        %1302 = vmatpush.bf16.msra.mxu0 %v1234
        %1303 = vmatmul.bf16.gmra.mxu0 %v1120
        %v1304 = vpop.f32.mrf.mxu0
        %v1305 = vadd.f32 0.0, %v1304
        %v1306 = vpop.f32.mrf.mxu0
        %v1307 = vadd.f32 0.0, %v1306
        %1308 = vdwg.mxu0
        %1309 = vmatpush.bf16.msra.mxu0 %v1256
        %1310 = vmatpush.bf16.msra.mxu0 %v1253
        %1311 = vmatpush.bf16.msra.mxu0 %v1250
        %1312 = vmatpush.bf16.msra.mxu0 %v1247
        %1313 = vmatpush.bf16.msra.mxu0 %v1244
        %1314 = vmatpush.bf16.msra.mxu0 %v1241
        %1315 = vmatpush.bf16.msra.mxu0 %v1238
        %1316 = vmatpush.bf16.msra.mxu0 %v1235
        %1317 = vmatmul.bf16.gmra.mxu0 %v1120
        %v1318 = vpop.f32.mrf.mxu0
        %v1319 = vadd.f32 0.0, %v1318
        %v1320 = vpop.f32.mrf.mxu0
        %v1321 = vadd.f32 0.0, %v1320
        %1322 = vdwg.mxu0
        %vm1323 = vcmask 261120
        %v1325 = vsel %vm1323, %v1291, 0
        %v1328 = vsel %vm1323, %v1305, 0
        %1330 = vmatpush.xpose.msra.mxu0 0.0
        %1331 = vmatpush.xpose.msra.mxu0 0.0
        %1332 = vmatpush.xpose.msra.mxu0 0.0
        %1333 = vmatpush.xpose.msra.mxu0 0.0
        %1334 = vmatpush.xpose.msra.mxu0 0.0
        %1335 = vmatpush.xpose.msra.mxu0 0.0
        %1336 = vmatpush.xpose.msra.mxu0 0.0
        %1337 = vmatpush.xpose.msra.mxu0 0.0
        %1338 = vmatpush.xpose.msra.mxu0 0.0
        %1339 = vmatpush.xpose.msra.mxu0 0.0
        %1340 = vmatpush.xpose.msra.mxu0 0.0
        %1341 = vmatpush.xpose.msra.mxu0 0.0
        %1342 = vmatpush.xpose.msra.mxu0 0.0
        %1343 = vmatpush.xpose.msra.mxu0 0.0
        %1344 = vmatpush.xpose.msra.mxu0 0.0
        %1345 = vmatpush.xpose.msra.mxu0 %v1328
        %1346 = vmatmul.f32.gmra.mxu0 %v1325
        %v1347 = vpop.f32.mrf.mxu0
        %v1348 = vadd.f32 0.0, %v1347
        %1349 = vdwg.mxu0
        %v1351 = vsel %vm1323, %v1293, 0
        %v1354 = vsel %vm1323, %v1307, 0
        %1356 = vmatpush.xpose.msra.mxu0 0.0
        %1357 = vmatpush.xpose.msra.mxu0 0.0
        %1358 = vmatpush.xpose.msra.mxu0 0.0
        %1359 = vmatpush.xpose.msra.mxu0 0.0
        %1360 = vmatpush.xpose.msra.mxu0 0.0
        %1361 = vmatpush.xpose.msra.mxu0 0.0
        %1362 = vmatpush.xpose.msra.mxu0 0.0
        %1363 = vmatpush.xpose.msra.mxu0 0.0
        %1364 = vmatpush.xpose.msra.mxu0 0.0
        %1365 = vmatpush.xpose.msra.mxu0 0.0
        %1366 = vmatpush.xpose.msra.mxu0 0.0
        %1367 = vmatpush.xpose.msra.mxu0 0.0
        %1368 = vmatpush.xpose.msra.mxu0 0.0
        %1369 = vmatpush.xpose.msra.mxu0 0.0
        %1370 = vmatpush.xpose.msra.mxu0 0.0
        %1371 = vmatpush.xpose.msra.mxu0 %v1354
        %1372 = vmatmul.f32.gmra.mxu0 %v1351
        %v1373 = vpop.f32.mrf.mxu0
        %v1374 = vadd.f32 0.0, %v1373
        %1375 = vdwg.mxu0
        %v1376 = vmul.f32 %v1348, 0.17677669
        %v1377 = vmul.f32 %v1374, 0.17677669
        %v1378 = vsel %vm1060, 1, 0
        %vm1379 = vcmp.eq.s32.totalorder %v1378, 1
        %v1380 = vsel %vm1379, %v1376, -1e+30
        %v1381 = vsel %vm1379, %v1377, -1e+30
        %vm1382 = vcmask 64512
        %v1383 = vsel %vm1382, %v1380, -inf
        %1384 = vmax.xlane.f32.xlu0 %v1383
        %v1385 = vpop.xlane.xlu0 %1384
        %v1386 = vsel %vm1382, %v1381, -inf
        %1387 = vmax.xlane.f32.xlu0 %v1386
        %v1388 = vpop.xlane.xlu0 %1387
        %v1389 = vsub.f32 %v1380, %v1385
        %v1390 = vsub.f32 %v1381, %v1388
        %v1391 = vmul.f32 %v1389, 1.442695
        %v1392 = vpow.pop %v1391
        %v1393 = vmul.f32 %v1390, 1.442695
        %v1394 = vpow.pop %v1393
        %v1395 = vsel %vm1382, %v1392, 0.0
        %1396 = vadd.xlane.f32.xlu0 %v1395
        %v1397 = vpop.xlane.xlu0 %1396
        %v1398 = vsel %vm1382, %v1394, 0.0
        %1399 = vadd.xlane.f32.xlu0 %v1398
        %v1400 = vpop.xlane.xlu0 %1399
        %v1401 = vrcp.pop %v1397
        %v1402 = vrcp.pop %v1400
        %v1403 = vmul.f32 %v1392, %v1401
        %v1404 = vmul.f32 %v1394, %v1402
        %v1406 = vsel %vm1382, %v1403, 0
        %1408 = vmatpush.msra.mxu0 0.0
        %1409 = vmatpush.msra.mxu0 0.0
        %1410 = vmatpush.msra.mxu0 0.0
        %1411 = vmatpush.msra.mxu0 0.0
        %1412 = vmatpush.msra.mxu0 0.0
        %1413 = vmatpush.msra.mxu0 0.0
        %1414 = vmatpush.msra.mxu0 0.0
        %1415 = vmatpush.msra.mxu0 0.0
        %1416 = vmatpush.msra.mxu0 0.0
        %1417 = vmatpush.msra.mxu0 0.0
        %1418 = vmatpush.msra.mxu0 0.0
        %1419 = vmatpush.msra.mxu0 0.0
        %1420 = vmatpush.msra.mxu0 0.0
        %1421 = vmatpush.msra.mxu0 0.0
        %1422 = vmatpush.msra.mxu0 0.0
        %1423 = vmatpush.msra.mxu0 %v1319
        %1424 = vmatmul.f32.gmra.mxu0 %v1406
        %v1425 = vpop.f32.mrf.mxu0
        %v1426 = vadd.f32 0.0, %v1425
        %1427 = vdwg.mxu0
        %v1429 = vsel %vm1382, %v1404, 0
        %1431 = vmatpush.msra.mxu0 0.0
        %1432 = vmatpush.msra.mxu0 0.0
        %1433 = vmatpush.msra.mxu0 0.0
        %1434 = vmatpush.msra.mxu0 0.0
        %1435 = vmatpush.msra.mxu0 0.0
        %1436 = vmatpush.msra.mxu0 0.0
        %1437 = vmatpush.msra.mxu0 0.0
        %1438 = vmatpush.msra.mxu0 0.0
        %1439 = vmatpush.msra.mxu0 0.0
        %1440 = vmatpush.msra.mxu0 0.0
        %1441 = vmatpush.msra.mxu0 0.0
        %1442 = vmatpush.msra.mxu0 0.0
        %1443 = vmatpush.msra.mxu0 0.0
        %1444 = vmatpush.msra.mxu0 0.0
        %1445 = vmatpush.msra.mxu0 0.0
        %1446 = vmatpush.msra.mxu0 %v1321
        %1447 = vmatmul.f32.gmra.mxu0 %v1429
        %v1448 = vpop.f32.mrf.mxu0
        %v1449 = vadd.f32 0.0, %v1448
        %1450 = vdwg.mxu0
        %1451 = vst.msk [vmem:[#allocation3] sm:$0xff] %vm1323, %v1426
        %1452 = vst.msk [vmem:[#allocation3 + $0x8] sm:$0xff] %vm1323, %v1449
        %1453 = vrot.lane.b32.xlu0 %v1291, 96
        %v1454 = vpop.permute.xlu0 %1453
        %1455 = vrot.lane.b32.xlu0 %v1305, 96
        %v1456 = vpop.permute.xlu0 %1455
        %v1457 = vsel %vm1323, %v1454, 0
        %v1459 = vsel %vm1323, %v1456, 0
        %1461 = vmatpush.xpose.msra.mxu0 0.0
        %1462 = vmatpush.xpose.msra.mxu0 0.0
        %1463 = vmatpush.xpose.msra.mxu0 0.0
        %1464 = vmatpush.xpose.msra.mxu0 0.0
        %1465 = vmatpush.xpose.msra.mxu0 0.0
        %1466 = vmatpush.xpose.msra.mxu0 0.0
        %1467 = vmatpush.xpose.msra.mxu0 0.0
        %1468 = vmatpush.xpose.msra.mxu0 0.0
        %1469 = vmatpush.xpose.msra.mxu0 0.0
        %1470 = vmatpush.xpose.msra.mxu0 0.0
        %1471 = vmatpush.xpose.msra.mxu0 0.0
        %1472 = vmatpush.xpose.msra.mxu0 0.0
        %1473 = vmatpush.xpose.msra.mxu0 0.0
        %1474 = vmatpush.xpose.msra.mxu0 0.0
        %1475 = vmatpush.xpose.msra.mxu0 0.0
        %1476 = vmatpush.xpose.msra.mxu0 %v1459
        %1477 = vmatmul.f32.gmra.mxu0 %v1457
        %v1478 = vpop.f32.mrf.mxu0
        %v1479 = vadd.f32 0.0, %v1478
        %1480 = vdwg.mxu0
        %1481 = vrot.lane.b32.xlu0 %v1293, 96
        %v1482 = vpop.permute.xlu0 %1481
        %1483 = vrot.lane.b32.xlu0 %v1307, 96
        %v1484 = vpop.permute.xlu0 %1483
        %v1485 = vsel %vm1323, %v1482, 0
        %v1487 = vsel %vm1323, %v1484, 0
        %1489 = vmatpush.xpose.msra.mxu0 0.0
        %1490 = vmatpush.xpose.msra.mxu0 0.0
        %1491 = vmatpush.xpose.msra.mxu0 0.0
        %1492 = vmatpush.xpose.msra.mxu0 0.0
        %1493 = vmatpush.xpose.msra.mxu0 0.0
        %1494 = vmatpush.xpose.msra.mxu0 0.0
        %1495 = vmatpush.xpose.msra.mxu0 0.0
        %1496 = vmatpush.xpose.msra.mxu0 0.0
        %1497 = vmatpush.xpose.msra.mxu0 0.0
        %1498 = vmatpush.xpose.msra.mxu0 0.0
        %1499 = vmatpush.xpose.msra.mxu0 0.0
        %1500 = vmatpush.xpose.msra.mxu0 0.0
        %1501 = vmatpush.xpose.msra.mxu0 0.0
        %1502 = vmatpush.xpose.msra.mxu0 0.0
        %1503 = vmatpush.xpose.msra.mxu0 0.0
        %1504 = vmatpush.xpose.msra.mxu0 %v1487
        %1505 = vmatmul.f32.gmra.mxu0 %v1485
        %v1506 = vpop.f32.mrf.mxu0
        %v1507 = vadd.f32 0.0, %v1506
        %1508 = vdwg.mxu0
        %v1509 = vmul.f32 %v1479, 0.17677669
        %v1510 = vmul.f32 %v1507, 0.17677669
        %v1511 = vsel %vm1379, %v1509, -1e+30
        %v1512 = vsel %vm1379, %v1510, -1e+30
        %v1513 = vsel %vm1382, %v1511, -inf
        %1514 = vmax.xlane.f32.xlu0 %v1513
        %v1515 = vpop.xlane.xlu0 %1514
        %v1516 = vsel %vm1382, %v1512, -inf
        %1517 = vmax.xlane.f32.xlu0 %v1516
        %v1518 = vpop.xlane.xlu0 %1517
        %v1519 = vsub.f32 %v1511, %v1515
        %v1520 = vsub.f32 %v1512, %v1518
        %v1521 = vmul.f32 %v1519, 1.442695
        %v1522 = vpow.pop %v1521
        %v1523 = vmul.f32 %v1520, 1.442695
        %v1524 = vpow.pop %v1523
        %v1525 = vsel %vm1382, %v1522, 0.0
        %1526 = vadd.xlane.f32.xlu0 %v1525
        %v1527 = vpop.xlane.xlu0 %1526
        %v1528 = vsel %vm1382, %v1524, 0.0
        %1529 = vadd.xlane.f32.xlu0 %v1528
        %v1530 = vpop.xlane.xlu0 %1529
        %v1531 = vrcp.pop %v1527
        %v1532 = vrcp.pop %v1530
        %v1533 = vmul.f32 %v1522, %v1531
        %v1534 = vmul.f32 %v1524, %v1532
        %1536 = vrot.lane.b32.xlu0 %v1319, 96
        %v1537 = vpop.permute.xlu0 %1536
        %v1540 = vsel %vm1382, %v1533, 0
        %1542 = vmatpush.msra.mxu0 0.0
        %1543 = vmatpush.msra.mxu0 0.0
        %1544 = vmatpush.msra.mxu0 0.0
        %1545 = vmatpush.msra.mxu0 0.0
        %1546 = vmatpush.msra.mxu0 0.0
        %1547 = vmatpush.msra.mxu0 0.0
        %1548 = vmatpush.msra.mxu0 0.0
        %1549 = vmatpush.msra.mxu0 0.0
        %1550 = vmatpush.msra.mxu0 0.0
        %1551 = vmatpush.msra.mxu0 0.0
        %1552 = vmatpush.msra.mxu0 0.0
        %1553 = vmatpush.msra.mxu0 0.0
        %1554 = vmatpush.msra.mxu0 0.0
        %1555 = vmatpush.msra.mxu0 0.0
        %1556 = vmatpush.msra.mxu0 0.0
        %1557 = vmatpush.msra.mxu0 %v1537
        %1558 = vmatmul.f32.gmra.mxu0 %v1540
        %v1559 = vpop.f32.mrf.mxu0
        %v1560 = vadd.f32 0.0, %v1559
        %1561 = vdwg.mxu0
        %1563 = vrot.lane.b32.xlu0 %v1321, 96
        %v1564 = vpop.permute.xlu0 %1563
        %v1567 = vsel %vm1382, %v1534, 0
        %1569 = vmatpush.msra.mxu0 0.0
        %1570 = vmatpush.msra.mxu0 0.0
        %1571 = vmatpush.msra.mxu0 0.0
        %1572 = vmatpush.msra.mxu0 0.0
        %1573 = vmatpush.msra.mxu0 0.0
        %1574 = vmatpush.msra.mxu0 0.0
        %1575 = vmatpush.msra.mxu0 0.0
        %1576 = vmatpush.msra.mxu0 0.0
        %1577 = vmatpush.msra.mxu0 0.0
        %1578 = vmatpush.msra.mxu0 0.0
        %1579 = vmatpush.msra.mxu0 0.0
        %1580 = vmatpush.msra.mxu0 0.0
        %1581 = vmatpush.msra.mxu0 0.0
        %1582 = vmatpush.msra.mxu0 0.0
        %1583 = vmatpush.msra.mxu0 0.0
        %1584 = vmatpush.msra.mxu0 %v1564
        %1585 = vmatmul.f32.gmra.mxu0 %v1567
        %v1586 = vpop.f32.mrf.mxu0
        %v1587 = vadd.f32 0.0, %v1586
        %1588 = vdwg.mxu0
        %1591 = vrot.lane.b32.xlu0 %v1560, 32
        %v1592 = vpop.permute.xlu0 %1591
        %1593 = vrot.lane.b32.xlu0 %v1587, 32
        %v1594 = vpop.permute.xlu0 %1593
        %vm1597 = vcmask 523520
        %1598 = vst.msk [vmem:[#allocation3] sm:$0xff] %vm1597, %v1592
        %1599 = vst.msk [vmem:[#allocation3 + $0x8] sm:$0xff] %vm1597, %v1594
        %1600 = vrot.lane.b32.xlu0 %v1291, 64
        %v1601 = vpop.permute.xlu0 %1600
        %1602 = vrot.lane.b32.xlu0 %v1305, 64
        %v1603 = vpop.permute.xlu0 %1602
        %v1604 = vsel %vm1323, %v1601, 0
        %v1606 = vsel %vm1323, %v1603, 0
        %1608 = vmatpush.xpose.msra.mxu0 0.0
        %1609 = vmatpush.xpose.msra.mxu0 0.0
        %1610 = vmatpush.xpose.msra.mxu0 0.0
        %1611 = vmatpush.xpose.msra.mxu0 0.0
        %1612 = vmatpush.xpose.msra.mxu0 0.0
        %1613 = vmatpush.xpose.msra.mxu0 0.0
        %1614 = vmatpush.xpose.msra.mxu0 0.0
        %1615 = vmatpush.xpose.msra.mxu0 0.0
        %1616 = vmatpush.xpose.msra.mxu0 0.0
        %1617 = vmatpush.xpose.msra.mxu0 0.0
        %1618 = vmatpush.xpose.msra.mxu0 0.0
        %1619 = vmatpush.xpose.msra.mxu0 0.0
        %1620 = vmatpush.xpose.msra.mxu0 0.0
        %1621 = vmatpush.xpose.msra.mxu0 0.0
        %1622 = vmatpush.xpose.msra.mxu0 0.0
        %1623 = vmatpush.xpose.msra.mxu0 %v1606
        %1624 = vmatmul.f32.gmra.mxu0 %v1604
        %v1625 = vpop.f32.mrf.mxu0
        %v1626 = vadd.f32 0.0, %v1625
        %1627 = vdwg.mxu0
        %1628 = vrot.lane.b32.xlu0 %v1293, 64
        %v1629 = vpop.permute.xlu0 %1628
        %1630 = vrot.lane.b32.xlu0 %v1307, 64
        %v1631 = vpop.permute.xlu0 %1630
        %v1632 = vsel %vm1323, %v1629, 0
        %v1634 = vsel %vm1323, %v1631, 0
        %1636 = vmatpush.xpose.msra.mxu0 0.0
        %1637 = vmatpush.xpose.msra.mxu0 0.0
        %1638 = vmatpush.xpose.msra.mxu0 0.0
        %1639 = vmatpush.xpose.msra.mxu0 0.0
        %1640 = vmatpush.xpose.msra.mxu0 0.0
        %1641 = vmatpush.xpose.msra.mxu0 0.0
        %1642 = vmatpush.xpose.msra.mxu0 0.0
        %1643 = vmatpush.xpose.msra.mxu0 0.0
        %1644 = vmatpush.xpose.msra.mxu0 0.0
        %1645 = vmatpush.xpose.msra.mxu0 0.0
        %1646 = vmatpush.xpose.msra.mxu0 0.0
        %1647 = vmatpush.xpose.msra.mxu0 0.0
        %1648 = vmatpush.xpose.msra.mxu0 0.0
        %1649 = vmatpush.xpose.msra.mxu0 0.0
        %1650 = vmatpush.xpose.msra.mxu0 0.0
        %1651 = vmatpush.xpose.msra.mxu0 %v1634
        %1652 = vmatmul.f32.gmra.mxu0 %v1632
        %v1653 = vpop.f32.mrf.mxu0
        %v1654 = vadd.f32 0.0, %v1653
        %1655 = vdwg.mxu0
        %v1656 = vmul.f32 %v1626, 0.17677669
        %v1657 = vmul.f32 %v1654, 0.17677669
        %v1658 = vsel %vm1379, %v1656, -1e+30
        %v1659 = vsel %vm1379, %v1657, -1e+30
        %v1660 = vsel %vm1382, %v1658, -inf
        %1661 = vmax.xlane.f32.xlu0 %v1660
        %v1662 = vpop.xlane.xlu0 %1661
        %v1663 = vsel %vm1382, %v1659, -inf
        %1664 = vmax.xlane.f32.xlu0 %v1663
        %v1665 = vpop.xlane.xlu0 %1664
        %v1666 = vsub.f32 %v1658, %v1662
        %v1667 = vsub.f32 %v1659, %v1665
        %v1668 = vmul.f32 %v1666, 1.442695
        %v1669 = vpow.pop %v1668
        %v1670 = vmul.f32 %v1667, 1.442695
        %v1671 = vpow.pop %v1670
        %v1672 = vsel %vm1382, %v1669, 0.0
        %1673 = vadd.xlane.f32.xlu0 %v1672
        %v1674 = vpop.xlane.xlu0 %1673
        %v1675 = vsel %vm1382, %v1671, 0.0
        %1676 = vadd.xlane.f32.xlu0 %v1675
        %v1677 = vpop.xlane.xlu0 %1676
        %v1678 = vrcp.pop %v1674
        %v1679 = vrcp.pop %v1677
        %v1680 = vmul.f32 %v1669, %v1678
        %v1681 = vmul.f32 %v1671, %v1679
        %1682 = vrot.lane.b32.xlu0 %v1319, 64
        %v1683 = vpop.permute.xlu0 %1682
        %v1686 = vsel %vm1382, %v1680, 0
        %1688 = vmatpush.msra.mxu0 0.0
        %1689 = vmatpush.msra.mxu0 0.0
        %1690 = vmatpush.msra.mxu0 0.0
        %1691 = vmatpush.msra.mxu0 0.0
        %1692 = vmatpush.msra.mxu0 0.0
        %1693 = vmatpush.msra.mxu0 0.0
        %1694 = vmatpush.msra.mxu0 0.0
        %1695 = vmatpush.msra.mxu0 0.0
        %1696 = vmatpush.msra.mxu0 0.0
        %1697 = vmatpush.msra.mxu0 0.0
        %1698 = vmatpush.msra.mxu0 0.0
        %1699 = vmatpush.msra.mxu0 0.0
        %1700 = vmatpush.msra.mxu0 0.0
        %1701 = vmatpush.msra.mxu0 0.0
        %1702 = vmatpush.msra.mxu0 0.0
        %1703 = vmatpush.msra.mxu0 %v1683
        %1704 = vmatmul.f32.gmra.mxu0 %v1686
        %v1705 = vpop.f32.mrf.mxu0
        %v1706 = vadd.f32 0.0, %v1705
        %1707 = vdwg.mxu0
        %1708 = vrot.lane.b32.xlu0 %v1321, 64
        %v1709 = vpop.permute.xlu0 %1708
        %v1712 = vsel %vm1382, %v1681, 0
        %1714 = vmatpush.msra.mxu0 0.0
        %1715 = vmatpush.msra.mxu0 0.0
        %1716 = vmatpush.msra.mxu0 0.0
        %1717 = vmatpush.msra.mxu0 0.0
        %1718 = vmatpush.msra.mxu0 0.0
        %1719 = vmatpush.msra.mxu0 0.0
        %1720 = vmatpush.msra.mxu0 0.0
        %1721 = vmatpush.msra.mxu0 0.0
        %1722 = vmatpush.msra.mxu0 0.0
        %1723 = vmatpush.msra.mxu0 0.0
        %1724 = vmatpush.msra.mxu0 0.0
        %1725 = vmatpush.msra.mxu0 0.0
        %1726 = vmatpush.msra.mxu0 0.0
        %1727 = vmatpush.msra.mxu0 0.0
        %1728 = vmatpush.msra.mxu0 0.0
        %1729 = vmatpush.msra.mxu0 %v1709
        %1730 = vmatmul.f32.gmra.mxu0 %v1712
        %v1731 = vpop.f32.mrf.mxu0
        %v1732 = vadd.f32 0.0, %v1731
        %1733 = vdwg.mxu0
        %1736 = vrot.lane.b32.xlu0 %v1706, 64
        %v1737 = vpop.permute.xlu0 %1736
        %1738 = vrot.lane.b32.xlu0 %v1732, 64
        %v1739 = vpop.permute.xlu0 %1738
        %vm1742 = vcmask 785920
        %1743 = vst.msk [vmem:[#allocation3] sm:$0xff] %vm1742, %v1737
        %1744 = vst.msk [vmem:[#allocation3 + $0x8] sm:$0xff] %vm1742, %v1739
        %1745 = vrot.lane.b32.xlu0 %v1291, 32
        %v1746 = vpop.permute.xlu0 %1745
        %1747 = vrot.lane.b32.xlu0 %v1305, 32
        %v1748 = vpop.permute.xlu0 %1747
        %v1749 = vsel %vm1323, %v1746, 0
        %v1751 = vsel %vm1323, %v1748, 0
        %1753 = vmatpush.xpose.msra.mxu0 0.0
        %1754 = vmatpush.xpose.msra.mxu0 0.0
        %1755 = vmatpush.xpose.msra.mxu0 0.0
        %1756 = vmatpush.xpose.msra.mxu0 0.0
        %1757 = vmatpush.xpose.msra.mxu0 0.0
        %1758 = vmatpush.xpose.msra.mxu0 0.0
        %1759 = vmatpush.xpose.msra.mxu0 0.0
        %1760 = vmatpush.xpose.msra.mxu0 0.0
        %1761 = vmatpush.xpose.msra.mxu0 0.0
        %1762 = vmatpush.xpose.msra.mxu0 0.0
        %1763 = vmatpush.xpose.msra.mxu0 0.0
        %1764 = vmatpush.xpose.msra.mxu0 0.0
        %1765 = vmatpush.xpose.msra.mxu0 0.0
        %1766 = vmatpush.xpose.msra.mxu0 0.0
        %1767 = vmatpush.xpose.msra.mxu0 0.0
        %1768 = vmatpush.xpose.msra.mxu0 %v1751
        %1769 = vmatmul.f32.gmra.mxu0 %v1749
        %v1770 = vpop.f32.mrf.mxu0
        %v1771 = vadd.f32 0.0, %v1770
        %1772 = vdwg.mxu0
        %1773 = vrot.lane.b32.xlu0 %v1293, 32
        %v1774 = vpop.permute.xlu0 %1773
        %1775 = vrot.lane.b32.xlu0 %v1307, 32
        %v1776 = vpop.permute.xlu0 %1775
        %v1777 = vsel %vm1323, %v1774, 0
        %v1779 = vsel %vm1323, %v1776, 0
        %1781 = vmatpush.xpose.msra.mxu0 0.0
        %1782 = vmatpush.xpose.msra.mxu0 0.0
        %1783 = vmatpush.xpose.msra.mxu0 0.0
        %1784 = vmatpush.xpose.msra.mxu0 0.0
        %1785 = vmatpush.xpose.msra.mxu0 0.0
        %1786 = vmatpush.xpose.msra.mxu0 0.0
        %1787 = vmatpush.xpose.msra.mxu0 0.0
        %1788 = vmatpush.xpose.msra.mxu0 0.0
        %1789 = vmatpush.xpose.msra.mxu0 0.0
        %1790 = vmatpush.xpose.msra.mxu0 0.0
        %1791 = vmatpush.xpose.msra.mxu0 0.0
        %1792 = vmatpush.xpose.msra.mxu0 0.0
        %1793 = vmatpush.xpose.msra.mxu0 0.0
        %1794 = vmatpush.xpose.msra.mxu0 0.0
        %1795 = vmatpush.xpose.msra.mxu0 0.0
        %1796 = vmatpush.xpose.msra.mxu0 %v1779
        %1797 = vmatmul.f32.gmra.mxu0 %v1777
        %v1798 = vpop.f32.mrf.mxu0
        %v1799 = vadd.f32 0.0, %v1798
        %1800 = vdwg.mxu0
        %v1801 = vmul.f32 %v1771, 0.17677669
        %v1802 = vmul.f32 %v1799, 0.17677669
        %v1803 = vsel %vm1379, %v1801, -1e+30
        %v1804 = vsel %vm1379, %v1802, -1e+30
        %v1805 = vsel %vm1382, %v1803, -inf
        %1806 = vmax.xlane.f32.xlu0 %v1805
        %v1807 = vpop.xlane.xlu0 %1806
        %v1808 = vsel %vm1382, %v1804, -inf
        %1809 = vmax.xlane.f32.xlu0 %v1808
        %v1810 = vpop.xlane.xlu0 %1809
        %v1811 = vsub.f32 %v1803, %v1807
        %v1812 = vsub.f32 %v1804, %v1810
        %v1813 = vmul.f32 %v1811, 1.442695
        %v1814 = vpow.pop %v1813
        %v1815 = vmul.f32 %v1812, 1.442695
        %v1816 = vpow.pop %v1815
        %v1817 = vsel %vm1382, %v1814, 0.0
        %1818 = vadd.xlane.f32.xlu0 %v1817
        %v1819 = vpop.xlane.xlu0 %1818
        %v1820 = vsel %vm1382, %v1816, 0.0
        %1821 = vadd.xlane.f32.xlu0 %v1820
        %v1822 = vpop.xlane.xlu0 %1821
        %v1823 = vrcp.pop %v1819
        %v1824 = vrcp.pop %v1822
        %v1825 = vmul.f32 %v1814, %v1823
        %v1826 = vmul.f32 %v1816, %v1824
        %1827 = vrot.lane.b32.xlu0 %v1319, 32
        %v1828 = vpop.permute.xlu0 %1827
        %v1831 = vsel %vm1382, %v1825, 0
        %1833 = vmatpush.msra.mxu0 0.0
        %1834 = vmatpush.msra.mxu0 0.0
        %1835 = vmatpush.msra.mxu0 0.0
        %1836 = vmatpush.msra.mxu0 0.0
        %1837 = vmatpush.msra.mxu0 0.0
        %1838 = vmatpush.msra.mxu0 0.0
        %1839 = vmatpush.msra.mxu0 0.0
        %1840 = vmatpush.msra.mxu0 0.0
        %1841 = vmatpush.msra.mxu0 0.0
        %1842 = vmatpush.msra.mxu0 0.0
        %1843 = vmatpush.msra.mxu0 0.0
        %1844 = vmatpush.msra.mxu0 0.0
        %1845 = vmatpush.msra.mxu0 0.0
        %1846 = vmatpush.msra.mxu0 0.0
        %1847 = vmatpush.msra.mxu0 0.0
        %1848 = vmatpush.msra.mxu0 %v1828
        %1849 = vmatmul.f32.gmra.mxu0 %v1831
        %v1850 = vpop.f32.mrf.mxu0
        %v1851 = vadd.f32 0.0, %v1850
        %1852 = vdwg.mxu0
        %1853 = vrot.lane.b32.xlu0 %v1321, 32
        %v1854 = vpop.permute.xlu0 %1853
        %v1857 = vsel %vm1382, %v1826, 0
        %1859 = vmatpush.msra.mxu0 0.0
        %1860 = vmatpush.msra.mxu0 0.0
        %1861 = vmatpush.msra.mxu0 0.0
        %1862 = vmatpush.msra.mxu0 0.0
        %1863 = vmatpush.msra.mxu0 0.0
        %1864 = vmatpush.msra.mxu0 0.0
        %1865 = vmatpush.msra.mxu0 0.0
        %1866 = vmatpush.msra.mxu0 0.0
        %1867 = vmatpush.msra.mxu0 0.0
        %1868 = vmatpush.msra.mxu0 0.0
        %1869 = vmatpush.msra.mxu0 0.0
        %1870 = vmatpush.msra.mxu0 0.0
        %1871 = vmatpush.msra.mxu0 0.0
        %1872 = vmatpush.msra.mxu0 0.0
        %1873 = vmatpush.msra.mxu0 0.0
        %1874 = vmatpush.msra.mxu0 %v1854
        %1875 = vmatmul.f32.gmra.mxu0 %v1857
        %v1876 = vpop.f32.mrf.mxu0
        %v1877 = vadd.f32 0.0, %v1876
        %1878 = vdwg.mxu0
        %1881 = vrot.lane.b32.xlu0 %v1851, 96
        %v1882 = vpop.permute.xlu0 %1881
        %1883 = vrot.lane.b32.xlu0 %v1877, 96
        %v1884 = vpop.permute.xlu0 %1883
        %vm1887 = vcmask 1048320
        %1888 = vst.msk [vmem:[#allocation3] sm:$0xff] %vm1887, %v1882
        %1889 = vst.msk [vmem:[#allocation3 + $0x8] sm:$0xff] %vm1887, %v1884
        %v1890 = vld [vmem:[#allocation3] sm:$0xff]
        %v1891 = vld [vmem:[#allocation3 + $0x8] sm:$0xff]
        %v1892 = vpack.c.bf16 %v1891, %v1890
        %v1893 = vld [vmem:[%s861] sm:$0xf]
        %v1894 = vld [vmem:[%s861 + $0x4] sm:$0xf]
        %v1895 = vld [vmem:[%s861 + $0x8] sm:$0xf]
        %v1896 = vld [vmem:[%s861 + $0xc] sm:$0xf]
        %v1897 = vld [vmem:[%s861 + $0x10] sm:$0xf]
        %v1898 = vld [vmem:[%s861 + $0x14] sm:$0xf]
        %v1899 = vld [vmem:[%s861 + $0x18] sm:$0xf]
        %v1900 = vld [vmem:[%s861 + $0x1c] sm:$0xf]
        %v1901 = vld [vmem:[%s861 + $0x20] sm:$0xf]
        %v1902 = vld [vmem:[%s861 + $0x24] sm:$0xf]
        %v1903 = vld [vmem:[%s861 + $0x28] sm:$0xf]
        %v1904 = vld [vmem:[%s861 + $0x2c] sm:$0xf]
        %v1905 = vld [vmem:[%s861 + $0x30] sm:$0xf]
        %v1906 = vld [vmem:[%s861 + $0x34] sm:$0xf]
        %v1907 = vld [vmem:[%s861 + $0x38] sm:$0xf]
        %v1908 = vld [vmem:[%s861 + $0x3c] sm:$0xf]
        %v1925 = vunpack.c.l.b16 %v1893
        %v1926 = vunpack.c.l.b16 %v1894
        %v1927 = vunpack.c.l.b16 %v1895
        %v1928 = vunpack.c.l.b16 %v1896
        %v1929 = vunpack.c.l.b16 %v1897
        %v1930 = vunpack.c.l.b16 %v1898
        %v1931 = vunpack.c.l.b16 %v1899
        %v1932 = vunpack.c.l.b16 %v1900
        %v1933 = vunpack.c.l.b16 %v1901
        %v1934 = vunpack.c.l.b16 %v1902
        %v1935 = vunpack.c.l.b16 %v1903
        %v1936 = vunpack.c.l.b16 %v1904
        %v1937 = vunpack.c.l.b16 %v1905
        %v1938 = vunpack.c.l.b16 %v1906
        %v1939 = vunpack.c.l.b16 %v1907
        %v1940 = vunpack.c.l.b16 %v1908
        %v1941 = vpack.c.b16 %v1926, %v1925
        %v1942 = vpack.c.b16 %v1928, %v1927
        %v1943 = vpack.c.b16 %v1930, %v1929
        %v1944 = vpack.c.b16 %v1932, %v1931
        %v1945 = vpack.c.b16 %v1934, %v1933
        %v1946 = vpack.c.b16 %v1936, %v1935
        %v1947 = vpack.c.b16 %v1938, %v1937
        %v1948 = vpack.c.b16 %v1940, %v1939
        %1957 = vmatpush.bf16.msra.mxu0 %v1948
        %1958 = vmatpush.bf16.msra.mxu0 %v1947
        %1959 = vmatpush.bf16.msra.mxu0 %v1946
        %1960 = vmatpush.bf16.msra.mxu0 %v1945
        %1961 = vmatpush.bf16.msra.mxu0 %v1944
        %1962 = vmatpush.bf16.msra.mxu0 %v1943
        %1963 = vmatpush.bf16.msra.mxu0 %v1942
        %1964 = vmatpush.bf16.msra.mxu0 %v1941
        %1965 = vmatmul.bf16.gmra.mxu0 %v1892
        %v1966 = vpop.f32.mrf.mxu0
        %v1967 = vadd.f32 0.0, %v1966
        %v1968 = vpop.f32.mrf.mxu0
        %v1969 = vadd.f32 0.0, %v1968
        %1970 = vdwg.mxu0
        %v1971 = vadd.f32 %v1054, %v1967
        %v1972 = vadd.f32 %v1055, %v1969
        %v1973 = vld [vmem:[%s1037] sm:$0x1]
        %v1974 = vld [vmem:[%s870] sm:$0x1]
        %1975 = vadd.xlane.f32.xlu0 %v1971
        %v1976 = vpop.xlane.xlu0 %1975
        %1977 = vadd.xlane.f32.xlu0 %v1972
        %v1978 = vpop.xlane.xlu0 %1977
        %v1979 = vmul.f32 %v1976, %v1073
        %v1980 = vmul.f32 %v1978, %v1073
        %v1981 = vsub.f32 %v1971, %v1979
        %v1982 = vsub.f32 %v1972, %v1980
        %v1983 = vmul.f32 %v1981, %v1981
        %v1984 = vmul.f32 %v1982, %v1982
        %1985 = vadd.xlane.f32.xlu0 %v1983
        %v1986 = vpop.xlane.xlu0 %1985
        %1987 = vadd.xlane.f32.xlu0 %v1984
        %v1988 = vpop.xlane.xlu0 %1987
        %v1989 = vmul.f32 %v1986, %v1073
        %v1990 = vmul.f32 %v1988, %v1073
        %v1991 = vadd.f32 %v1989, 1e-05
        %v1992 = vadd.f32 %v1990, 1e-05
        %v1993 = vrsqrt.pop %v1991
        %v1994 = vmul.f32 %v1993, %v1991
        %v1995 = vmul.f32 %v1994, %v1993
        %v1996 = vmul.f32 0.5, %v1995
        %v1997 = vsub.f32 1.5, %v1996
        %v1998 = vmul.f32 %v1993, %v1997
        %vm1999 = vweird.f32 %v1991
        %vm2000 = vweird.f32 %v1993
        %vm2001 = vmor %vm1999, %vm2000
        %v2002 = vsel %vm2001, %v1993, %v1998
        %v2003 = vrsqrt.pop %v1992
        %v2004 = vmul.f32 %v2003, %v1992
        %v2005 = vmul.f32 %v2004, %v2003
        %v2006 = vmul.f32 0.5, %v2005
        %v2007 = vsub.f32 1.5, %v2006
        %v2008 = vmul.f32 %v2003, %v2007
        %vm2009 = vweird.f32 %v1992
        %vm2010 = vweird.f32 %v2003
        %vm2011 = vmor %vm2009, %vm2010
        %v2012 = vsel %vm2011, %v2003, %v2008
        %v2013 = vmul.f32 %v1981, %v2002
        %v2014 = vmul.f32 %v1982, %v2012
        %v2016 = vperm.slane %v1973, 0
        %v2018 = vmul.f32 %v2013, %v2016
        %v2019 = vmul.f32 %v2014, %v2016
        %v2021 = vperm.slane %v1974, 0
        %v2023 = vadd.f32 %v2018, %v2021
        %v2024 = vadd.f32 %v2019, %v2021
        %v2025 = vpack.c.bf16 %v2024, %v2023
        %v2026 = vld [vmem:[%s880] sm:$0xf]
        %v2027 = vld [vmem:[%s880 + $0x4] sm:$0xf]
        %v2028 = vld [vmem:[%s880 + $0x8] sm:$0xf]
        %v2029 = vld [vmem:[%s880 + $0xc] sm:$0xf]
        %v2030 = vld [vmem:[%s880 + $0x10] sm:$0xf]
        %v2031 = vld [vmem:[%s880 + $0x14] sm:$0xf]
        %v2032 = vld [vmem:[%s880 + $0x18] sm:$0xf]
        %v2033 = vld [vmem:[%s880 + $0x1c] sm:$0xf]
        %v2034 = vld [vmem:[%s880 + $0x20] sm:$0xf]
        %v2035 = vld [vmem:[%s880 + $0x24] sm:$0xf]
        %v2036 = vld [vmem:[%s880 + $0x28] sm:$0xf]
        %v2037 = vld [vmem:[%s880 + $0x2c] sm:$0xf]
        %v2038 = vld [vmem:[%s880 + $0x30] sm:$0xf]
        %v2039 = vld [vmem:[%s880 + $0x34] sm:$0xf]
        %v2040 = vld [vmem:[%s880 + $0x38] sm:$0xf]
        %v2041 = vld [vmem:[%s880 + $0x3c] sm:$0xf]
        %v2058 = vunpack.c.l.b16 %v2026
        %v2059 = vunpack.c.l.b16 %v2027
        %v2060 = vunpack.c.l.b16 %v2028
        %v2061 = vunpack.c.l.b16 %v2029
        %v2062 = vunpack.c.l.b16 %v2030
        %v2063 = vunpack.c.l.b16 %v2031
        %v2064 = vunpack.c.l.b16 %v2032
        %v2065 = vunpack.c.l.b16 %v2033
        %v2066 = vunpack.c.l.b16 %v2034
        %v2067 = vunpack.c.l.b16 %v2035
        %v2068 = vunpack.c.l.b16 %v2036
        %v2069 = vunpack.c.l.b16 %v2037
        %v2070 = vunpack.c.l.b16 %v2038
        %v2071 = vunpack.c.l.b16 %v2039
        %v2072 = vunpack.c.l.b16 %v2040
        %v2073 = vunpack.c.l.b16 %v2041
        %v2074 = vpack.c.b16 %v2059, %v2058
        %v2075 = vpack.c.b16 %v2061, %v2060
        %v2076 = vpack.c.b16 %v2063, %v2062
        %v2077 = vpack.c.b16 %v2065, %v2064
        %v2078 = vpack.c.b16 %v2067, %v2066
        %v2079 = vpack.c.b16 %v2069, %v2068
        %v2080 = vpack.c.b16 %v2071, %v2070
        %v2081 = vpack.c.b16 %v2073, %v2072
        %2090 = vmatpush.bf16.msra.mxu0 %v2081
        %2091 = vmatpush.bf16.msra.mxu0 %v2080
        %2092 = vmatpush.bf16.msra.mxu0 %v2079
        %2093 = vmatpush.bf16.msra.mxu0 %v2078
        %2094 = vmatpush.bf16.msra.mxu0 %v2077
        %2095 = vmatpush.bf16.msra.mxu0 %v2076
        %2096 = vmatpush.bf16.msra.mxu0 %v2075
        %2097 = vmatpush.bf16.msra.mxu0 %v2074
        %2098 = vmatmul.bf16.gmra.mxu0 %v2025
        %v2099 = vpop.f32.mrf.mxu0
        %v2100 = vadd.f32 0.0, %v2099
        %v2101 = vpop.f32.mrf.mxu0
        %v2102 = vadd.f32 0.0, %v2101
        %2103 = vdwg.mxu0
        %v2104 = vld [vmem:[#allocation7] sm:$0xff]
        %v2105 = vld [vmem:[#allocation7 + $0x8] sm:$0xff]
        %v2106 = vld [vmem:[#allocation9] sm:$0xff]
        %v2107 = vld [vmem:[#allocation9 + $0x8] sm:$0xff]
        %v2109 = vsel %vm1323, %v2104, 0
        %v2112 = vsel %vm1323, %v2106, 0
        %2114 = vmatpush.xpose.msra.mxu0 0.0
        %2115 = vmatpush.xpose.msra.mxu0 0.0
        %2116 = vmatpush.xpose.msra.mxu0 0.0
        %2117 = vmatpush.xpose.msra.mxu0 0.0
        %2118 = vmatpush.xpose.msra.mxu0 0.0
        %2119 = vmatpush.xpose.msra.mxu0 0.0
        %2120 = vmatpush.xpose.msra.mxu0 0.0
        %2121 = vmatpush.xpose.msra.mxu0 0.0
        %2122 = vmatpush.xpose.msra.mxu0 0.0
        %2123 = vmatpush.xpose.msra.mxu0 0.0
        %2124 = vmatpush.xpose.msra.mxu0 0.0
        %2125 = vmatpush.xpose.msra.mxu0 0.0
        %2126 = vmatpush.xpose.msra.mxu0 0.0
        %2127 = vmatpush.xpose.msra.mxu0 0.0
        %2128 = vmatpush.xpose.msra.mxu0 0.0
        %2129 = vmatpush.xpose.msra.mxu0 %v2112
        %2130 = vmatmul.f32.gmra.mxu0 %v2109
        %v2131 = vpop.f32.mrf.mxu0
        %v2132 = vadd.f32 0.0, %v2131
        %2133 = vdwg.mxu0
        %v2135 = vsel %vm1323, %v2105, 0
        %v2138 = vsel %vm1323, %v2107, 0
        %2140 = vmatpush.xpose.msra.mxu0 0.0
        %2141 = vmatpush.xpose.msra.mxu0 0.0
        %2142 = vmatpush.xpose.msra.mxu0 0.0
        %2143 = vmatpush.xpose.msra.mxu0 0.0
        %2144 = vmatpush.xpose.msra.mxu0 0.0
        %2145 = vmatpush.xpose.msra.mxu0 0.0
        %2146 = vmatpush.xpose.msra.mxu0 0.0
        %2147 = vmatpush.xpose.msra.mxu0 0.0
        %2148 = vmatpush.xpose.msra.mxu0 0.0
        %2149 = vmatpush.xpose.msra.mxu0 0.0
        %2150 = vmatpush.xpose.msra.mxu0 0.0
        %2151 = vmatpush.xpose.msra.mxu0 0.0
        %2152 = vmatpush.xpose.msra.mxu0 0.0
        %2153 = vmatpush.xpose.msra.mxu0 0.0
        %2154 = vmatpush.xpose.msra.mxu0 0.0
        %2155 = vmatpush.xpose.msra.mxu0 %v2138
        %2156 = vmatmul.f32.gmra.mxu0 %v2135
        %v2157 = vpop.f32.mrf.mxu0
        %v2158 = vadd.f32 0.0, %v2157
        %2159 = vdwg.mxu0
        %v2160 = vmul.f32 %v2132, 0.17677669
        %v2161 = vmul.f32 %v2158, 0.17677669
        %v2162 = vsel %vm1382, %v2160, -inf
        %2163 = vmax.xlane.f32.xlu0 %v2162
        %v2164 = vpop.xlane.xlu0 %2163
        %v2165 = vsel %vm1382, %v2161, -inf
        %2166 = vmax.xlane.f32.xlu0 %v2165
        %v2167 = vpop.xlane.xlu0 %2166
        %v2168 = vsub.f32 %v2160, %v2164
        %v2169 = vsub.f32 %v2161, %v2167
        %v2170 = vmul.f32 %v2168, 1.442695
        %v2171 = vpow.pop %v2170
        %v2172 = vmul.f32 %v2169, 1.442695
        %v2173 = vpow.pop %v2172
        %v2174 = vsel %vm1382, %v2171, 0.0
        %2175 = vadd.xlane.f32.xlu0 %v2174
        %v2176 = vpop.xlane.xlu0 %2175
        %v2177 = vsel %vm1382, %v2173, 0.0
        %2178 = vadd.xlane.f32.xlu0 %v2177
        %v2179 = vpop.xlane.xlu0 %2178
        %v2180 = vrcp.pop %v2176
        %v2181 = vrcp.pop %v2179
        %v2182 = vmul.f32 %v2171, %v2180
        %v2183 = vmul.f32 %v2173, %v2181
        %v2185 = vsel %vm1382, %v2182, 0
        %2187 = vmatpush.msra.mxu0 0.0
        %2188 = vmatpush.msra.mxu0 0.0
        %2189 = vmatpush.msra.mxu0 0.0
        %2190 = vmatpush.msra.mxu0 0.0
        %2191 = vmatpush.msra.mxu0 0.0
        %2192 = vmatpush.msra.mxu0 0.0
        %2193 = vmatpush.msra.mxu0 0.0
        %2194 = vmatpush.msra.mxu0 0.0
        %2195 = vmatpush.msra.mxu0 0.0
        %2196 = vmatpush.msra.mxu0 0.0
        %2197 = vmatpush.msra.mxu0 0.0
        %2198 = vmatpush.msra.mxu0 0.0
        %2199 = vmatpush.msra.mxu0 0.0
        %2200 = vmatpush.msra.mxu0 0.0
        %2201 = vmatpush.msra.mxu0 0.0
        %2202 = vmatpush.msra.mxu0 %v2100
        %2203 = vmatmul.f32.gmra.mxu0 %v2185
        %v2204 = vpop.f32.mrf.mxu0
        %v2205 = vadd.f32 0.0, %v2204
        %2206 = vdwg.mxu0
        %v2208 = vsel %vm1382, %v2183, 0
        %2210 = vmatpush.msra.mxu0 0.0
        %2211 = vmatpush.msra.mxu0 0.0
        %2212 = vmatpush.msra.mxu0 0.0
        %2213 = vmatpush.msra.mxu0 0.0
        %2214 = vmatpush.msra.mxu0 0.0
        %2215 = vmatpush.msra.mxu0 0.0
        %2216 = vmatpush.msra.mxu0 0.0
        %2217 = vmatpush.msra.mxu0 0.0
        %2218 = vmatpush.msra.mxu0 0.0
        %2219 = vmatpush.msra.mxu0 0.0
        %2220 = vmatpush.msra.mxu0 0.0
        %2221 = vmatpush.msra.mxu0 0.0
        %2222 = vmatpush.msra.mxu0 0.0
        %2223 = vmatpush.msra.mxu0 0.0
        %2224 = vmatpush.msra.mxu0 0.0
        %2225 = vmatpush.msra.mxu0 %v2102
        %2226 = vmatmul.f32.gmra.mxu0 %v2208
        %v2227 = vpop.f32.mrf.mxu0
        %v2228 = vadd.f32 0.0, %v2227
        %2229 = vdwg.mxu0
        %2230 = vst.msk [vmem:[#allocation3] sm:$0xff] %vm1323, %v2205
        %2231 = vst.msk [vmem:[#allocation3 + $0x8] sm:$0xff] %vm1323, %v2228
        %2232 = vrot.lane.b32.xlu0 %v2104, 96
        %v2233 = vpop.permute.xlu0 %2232
        %2234 = vrot.lane.b32.xlu0 %v2106, 96
        %v2235 = vpop.permute.xlu0 %2234
        %v2236 = vsel %vm1323, %v2233, 0
        %v2238 = vsel %vm1323, %v2235, 0
        %2240 = vmatpush.xpose.msra.mxu0 0.0
        %2241 = vmatpush.xpose.msra.mxu0 0.0
        %2242 = vmatpush.xpose.msra.mxu0 0.0
        %2243 = vmatpush.xpose.msra.mxu0 0.0
        %2244 = vmatpush.xpose.msra.mxu0 0.0
        %2245 = vmatpush.xpose.msra.mxu0 0.0
        %2246 = vmatpush.xpose.msra.mxu0 0.0
        %2247 = vmatpush.xpose.msra.mxu0 0.0
        %2248 = vmatpush.xpose.msra.mxu0 0.0
        %2249 = vmatpush.xpose.msra.mxu0 0.0
        %2250 = vmatpush.xpose.msra.mxu0 0.0
        %2251 = vmatpush.xpose.msra.mxu0 0.0
        %2252 = vmatpush.xpose.msra.mxu0 0.0
        %2253 = vmatpush.xpose.msra.mxu0 0.0
        %2254 = vmatpush.xpose.msra.mxu0 0.0
        %2255 = vmatpush.xpose.msra.mxu0 %v2238
        %2256 = vmatmul.f32.gmra.mxu0 %v2236
        %v2257 = vpop.f32.mrf.mxu0
        %v2258 = vadd.f32 0.0, %v2257
        %2259 = vdwg.mxu0
        %2260 = vrot.lane.b32.xlu0 %v2105, 96
        %v2261 = vpop.permute.xlu0 %2260
        %2262 = vrot.lane.b32.xlu0 %v2107, 96
        %v2263 = vpop.permute.xlu0 %2262
        %v2264 = vsel %vm1323, %v2261, 0
        %v2266 = vsel %vm1323, %v2263, 0
        %2268 = vmatpush.xpose.msra.mxu0 0.0
        %2269 = vmatpush.xpose.msra.mxu0 0.0
        %2270 = vmatpush.xpose.msra.mxu0 0.0
        %2271 = vmatpush.xpose.msra.mxu0 0.0
        %2272 = vmatpush.xpose.msra.mxu0 0.0
        %2273 = vmatpush.xpose.msra.mxu0 0.0
        %2274 = vmatpush.xpose.msra.mxu0 0.0
        %2275 = vmatpush.xpose.msra.mxu0 0.0
        %2276 = vmatpush.xpose.msra.mxu0 0.0
        %2277 = vmatpush.xpose.msra.mxu0 0.0
        %2278 = vmatpush.xpose.msra.mxu0 0.0
        %2279 = vmatpush.xpose.msra.mxu0 0.0
        %2280 = vmatpush.xpose.msra.mxu0 0.0
        %2281 = vmatpush.xpose.msra.mxu0 0.0
        %2282 = vmatpush.xpose.msra.mxu0 0.0
        %2283 = vmatpush.xpose.msra.mxu0 %v2266
        %2284 = vmatmul.f32.gmra.mxu0 %v2264
        %v2285 = vpop.f32.mrf.mxu0
        %v2286 = vadd.f32 0.0, %v2285
        %2287 = vdwg.mxu0
        %v2288 = vmul.f32 %v2258, 0.17677669
        %v2289 = vmul.f32 %v2286, 0.17677669
        %v2290 = vsel %vm1382, %v2288, -inf
        %2291 = vmax.xlane.f32.xlu0 %v2290
        %v2292 = vpop.xlane.xlu0 %2291
        %v2293 = vsel %vm1382, %v2289, -inf
        %2294 = vmax.xlane.f32.xlu0 %v2293
        %v2295 = vpop.xlane.xlu0 %2294
        %v2296 = vsub.f32 %v2288, %v2292
        %v2297 = vsub.f32 %v2289, %v2295
        %v2298 = vmul.f32 %v2296, 1.442695
        %v2299 = vpow.pop %v2298
        %v2300 = vmul.f32 %v2297, 1.442695
        %v2301 = vpow.pop %v2300
        %v2302 = vsel %vm1382, %v2299, 0.0
        %2303 = vadd.xlane.f32.xlu0 %v2302
        %v2304 = vpop.xlane.xlu0 %2303
        %v2305 = vsel %vm1382, %v2301, 0.0
        %2306 = vadd.xlane.f32.xlu0 %v2305
        %v2307 = vpop.xlane.xlu0 %2306
        %v2308 = vrcp.pop %v2304
        %v2309 = vrcp.pop %v2307
        %v2310 = vmul.f32 %v2299, %v2308
        %v2311 = vmul.f32 %v2301, %v2309
        %2313 = vrot.lane.b32.xlu0 %v2100, 96
        %v2314 = vpop.permute.xlu0 %2313
        %v2317 = vsel %vm1382, %v2310, 0
        %2319 = vmatpush.msra.mxu0 0.0
        %2320 = vmatpush.msra.mxu0 0.0
        %2321 = vmatpush.msra.mxu0 0.0
        %2322 = vmatpush.msra.mxu0 0.0
        %2323 = vmatpush.msra.mxu0 0.0
        %2324 = vmatpush.msra.mxu0 0.0
        %2325 = vmatpush.msra.mxu0 0.0
        %2326 = vmatpush.msra.mxu0 0.0
        %2327 = vmatpush.msra.mxu0 0.0
        %2328 = vmatpush.msra.mxu0 0.0
        %2329 = vmatpush.msra.mxu0 0.0
        %2330 = vmatpush.msra.mxu0 0.0
        %2331 = vmatpush.msra.mxu0 0.0
        %2332 = vmatpush.msra.mxu0 0.0
        %2333 = vmatpush.msra.mxu0 0.0
        %2334 = vmatpush.msra.mxu0 %v2314
        %2335 = vmatmul.f32.gmra.mxu0 %v2317
        %v2336 = vpop.f32.mrf.mxu0
        %v2337 = vadd.f32 0.0, %v2336
        %2338 = vdwg.mxu0
        %2340 = vrot.lane.b32.xlu0 %v2102, 96
        %v2341 = vpop.permute.xlu0 %2340
        %v2344 = vsel %vm1382, %v2311, 0
        %2346 = vmatpush.msra.mxu0 0.0
        %2347 = vmatpush.msra.mxu0 0.0
        %2348 = vmatpush.msra.mxu0 0.0
        %2349 = vmatpush.msra.mxu0 0.0
        %2350 = vmatpush.msra.mxu0 0.0
        %2351 = vmatpush.msra.mxu0 0.0
        %2352 = vmatpush.msra.mxu0 0.0
        %2353 = vmatpush.msra.mxu0 0.0
        %2354 = vmatpush.msra.mxu0 0.0
        %2355 = vmatpush.msra.mxu0 0.0
        %2356 = vmatpush.msra.mxu0 0.0
        %2357 = vmatpush.msra.mxu0 0.0
        %2358 = vmatpush.msra.mxu0 0.0
        %2359 = vmatpush.msra.mxu0 0.0
        %2360 = vmatpush.msra.mxu0 0.0
        %2361 = vmatpush.msra.mxu0 %v2341
        %2362 = vmatmul.f32.gmra.mxu0 %v2344
        %v2363 = vpop.f32.mrf.mxu0
        %v2364 = vadd.f32 0.0, %v2363
        %2365 = vdwg.mxu0
        %2368 = vrot.lane.b32.xlu0 %v2337, 32
        %v2369 = vpop.permute.xlu0 %2368
        %2370 = vrot.lane.b32.xlu0 %v2364, 32
        %v2371 = vpop.permute.xlu0 %2370
        %2374 = vst.msk [vmem:[#allocation3] sm:$0xff] %vm1597, %v2369
        %2375 = vst.msk [vmem:[#allocation3 + $0x8] sm:$0xff] %vm1597, %v2371
        %2376 = vrot.lane.b32.xlu0 %v2104, 64
        %v2377 = vpop.permute.xlu0 %2376
        %2378 = vrot.lane.b32.xlu0 %v2106, 64
        %v2379 = vpop.permute.xlu0 %2378
        %v2380 = vsel %vm1323, %v2377, 0
        %v2382 = vsel %vm1323, %v2379, 0
        %2384 = vmatpush.xpose.msra.mxu0 0.0
        %2385 = vmatpush.xpose.msra.mxu0 0.0
        %2386 = vmatpush.xpose.msra.mxu0 0.0
        %2387 = vmatpush.xpose.msra.mxu0 0.0
        %2388 = vmatpush.xpose.msra.mxu0 0.0
        %2389 = vmatpush.xpose.msra.mxu0 0.0
        %2390 = vmatpush.xpose.msra.mxu0 0.0
        %2391 = vmatpush.xpose.msra.mxu0 0.0
        %2392 = vmatpush.xpose.msra.mxu0 0.0
        %2393 = vmatpush.xpose.msra.mxu0 0.0
        %2394 = vmatpush.xpose.msra.mxu0 0.0
        %2395 = vmatpush.xpose.msra.mxu0 0.0
        %2396 = vmatpush.xpose.msra.mxu0 0.0
        %2397 = vmatpush.xpose.msra.mxu0 0.0
        %2398 = vmatpush.xpose.msra.mxu0 0.0
        %2399 = vmatpush.xpose.msra.mxu0 %v2382
        %2400 = vmatmul.f32.gmra.mxu0 %v2380
        %v2401 = vpop.f32.mrf.mxu0
        %v2402 = vadd.f32 0.0, %v2401
        %2403 = vdwg.mxu0
        %2404 = vrot.lane.b32.xlu0 %v2105, 64
        %v2405 = vpop.permute.xlu0 %2404
        %2406 = vrot.lane.b32.xlu0 %v2107, 64
        %v2407 = vpop.permute.xlu0 %2406
        %v2408 = vsel %vm1323, %v2405, 0
        %v2410 = vsel %vm1323, %v2407, 0
        %2412 = vmatpush.xpose.msra.mxu0 0.0
        %2413 = vmatpush.xpose.msra.mxu0 0.0
        %2414 = vmatpush.xpose.msra.mxu0 0.0
        %2415 = vmatpush.xpose.msra.mxu0 0.0
        %2416 = vmatpush.xpose.msra.mxu0 0.0
        %2417 = vmatpush.xpose.msra.mxu0 0.0
        %2418 = vmatpush.xpose.msra.mxu0 0.0
        %2419 = vmatpush.xpose.msra.mxu0 0.0
        %2420 = vmatpush.xpose.msra.mxu0 0.0
        %2421 = vmatpush.xpose.msra.mxu0 0.0
        %2422 = vmatpush.xpose.msra.mxu0 0.0
        %2423 = vmatpush.xpose.msra.mxu0 0.0
        %2424 = vmatpush.xpose.msra.mxu0 0.0
        %2425 = vmatpush.xpose.msra.mxu0 0.0
        %2426 = vmatpush.xpose.msra.mxu0 0.0
        %2427 = vmatpush.xpose.msra.mxu0 %v2410
        %2428 = vmatmul.f32.gmra.mxu0 %v2408
        %v2429 = vpop.f32.mrf.mxu0
        %v2430 = vadd.f32 0.0, %v2429
        %2431 = vdwg.mxu0
        %v2432 = vmul.f32 %v2402, 0.17677669
        %v2433 = vmul.f32 %v2430, 0.17677669
        %v2434 = vsel %vm1382, %v2432, -inf
        %2435 = vmax.xlane.f32.xlu0 %v2434
        %v2436 = vpop.xlane.xlu0 %2435
        %v2437 = vsel %vm1382, %v2433, -inf
        %2438 = vmax.xlane.f32.xlu0 %v2437
        %v2439 = vpop.xlane.xlu0 %2438
        %v2440 = vsub.f32 %v2432, %v2436
        %v2441 = vsub.f32 %v2433, %v2439
        %v2442 = vmul.f32 %v2440, 1.442695
        %v2443 = vpow.pop %v2442
        %v2444 = vmul.f32 %v2441, 1.442695
        %v2445 = vpow.pop %v2444
        %v2446 = vsel %vm1382, %v2443, 0.0
        %2447 = vadd.xlane.f32.xlu0 %v2446
        %v2448 = vpop.xlane.xlu0 %2447
        %v2449 = vsel %vm1382, %v2445, 0.0
        %2450 = vadd.xlane.f32.xlu0 %v2449
        %v2451 = vpop.xlane.xlu0 %2450
        %v2452 = vrcp.pop %v2448
        %v2453 = vrcp.pop %v2451
        %v2454 = vmul.f32 %v2443, %v2452
        %v2455 = vmul.f32 %v2445, %v2453
        %2456 = vrot.lane.b32.xlu0 %v2100, 64
        %v2457 = vpop.permute.xlu0 %2456
        %v2460 = vsel %vm1382, %v2454, 0
        %2462 = vmatpush.msra.mxu0 0.0
        %2463 = vmatpush.msra.mxu0 0.0
        %2464 = vmatpush.msra.mxu0 0.0
        %2465 = vmatpush.msra.mxu0 0.0
        %2466 = vmatpush.msra.mxu0 0.0
        %2467 = vmatpush.msra.mxu0 0.0
        %2468 = vmatpush.msra.mxu0 0.0
        %2469 = vmatpush.msra.mxu0 0.0
        %2470 = vmatpush.msra.mxu0 0.0
        %2471 = vmatpush.msra.mxu0 0.0
        %2472 = vmatpush.msra.mxu0 0.0
        %2473 = vmatpush.msra.mxu0 0.0
        %2474 = vmatpush.msra.mxu0 0.0
        %2475 = vmatpush.msra.mxu0 0.0
        %2476 = vmatpush.msra.mxu0 0.0
        %2477 = vmatpush.msra.mxu0 %v2457
        %2478 = vmatmul.f32.gmra.mxu0 %v2460
        %v2479 = vpop.f32.mrf.mxu0
        %v2480 = vadd.f32 0.0, %v2479
        %2481 = vdwg.mxu0
        %2482 = vrot.lane.b32.xlu0 %v2102, 64
        %v2483 = vpop.permute.xlu0 %2482
        %v2486 = vsel %vm1382, %v2455, 0
        %2488 = vmatpush.msra.mxu0 0.0
        %2489 = vmatpush.msra.mxu0 0.0
        %2490 = vmatpush.msra.mxu0 0.0
        %2491 = vmatpush.msra.mxu0 0.0
        %2492 = vmatpush.msra.mxu0 0.0
        %2493 = vmatpush.msra.mxu0 0.0
        %2494 = vmatpush.msra.mxu0 0.0
        %2495 = vmatpush.msra.mxu0 0.0
        %2496 = vmatpush.msra.mxu0 0.0
        %2497 = vmatpush.msra.mxu0 0.0
        %2498 = vmatpush.msra.mxu0 0.0
        %2499 = vmatpush.msra.mxu0 0.0
        %2500 = vmatpush.msra.mxu0 0.0
        %2501 = vmatpush.msra.mxu0 0.0
        %2502 = vmatpush.msra.mxu0 0.0
        %2503 = vmatpush.msra.mxu0 %v2483
        %2504 = vmatmul.f32.gmra.mxu0 %v2486
        %v2505 = vpop.f32.mrf.mxu0
        %v2506 = vadd.f32 0.0, %v2505
        %2507 = vdwg.mxu0
        %2510 = vrot.lane.b32.xlu0 %v2480, 64
        %v2511 = vpop.permute.xlu0 %2510
        %2512 = vrot.lane.b32.xlu0 %v2506, 64
        %v2513 = vpop.permute.xlu0 %2512
        %2516 = vst.msk [vmem:[#allocation3] sm:$0xff] %vm1742, %v2511
        %2517 = vst.msk [vmem:[#allocation3 + $0x8] sm:$0xff] %vm1742, %v2513
        %2518 = vrot.lane.b32.xlu0 %v2104, 32
        %v2519 = vpop.permute.xlu0 %2518
        %2520 = vrot.lane.b32.xlu0 %v2106, 32
        %v2521 = vpop.permute.xlu0 %2520
        %v2522 = vsel %vm1323, %v2519, 0
        %v2524 = vsel %vm1323, %v2521, 0
        %2526 = vmatpush.xpose.msra.mxu0 0.0
        %2527 = vmatpush.xpose.msra.mxu0 0.0
        %2528 = vmatpush.xpose.msra.mxu0 0.0
        %2529 = vmatpush.xpose.msra.mxu0 0.0
        %2530 = vmatpush.xpose.msra.mxu0 0.0
        %2531 = vmatpush.xpose.msra.mxu0 0.0
        %2532 = vmatpush.xpose.msra.mxu0 0.0
        %2533 = vmatpush.xpose.msra.mxu0 0.0
        %2534 = vmatpush.xpose.msra.mxu0 0.0
        %2535 = vmatpush.xpose.msra.mxu0 0.0
        %2536 = vmatpush.xpose.msra.mxu0 0.0
        %2537 = vmatpush.xpose.msra.mxu0 0.0
        %2538 = vmatpush.xpose.msra.mxu0 0.0
        %2539 = vmatpush.xpose.msra.mxu0 0.0
        %2540 = vmatpush.xpose.msra.mxu0 0.0
        %2541 = vmatpush.xpose.msra.mxu0 %v2524
        %2542 = vmatmul.f32.gmra.mxu0 %v2522
        %v2543 = vpop.f32.mrf.mxu0
        %v2544 = vadd.f32 0.0, %v2543
        %2545 = vdwg.mxu0
        %2546 = vrot.lane.b32.xlu0 %v2105, 32
        %v2547 = vpop.permute.xlu0 %2546
        %2548 = vrot.lane.b32.xlu0 %v2107, 32
        %v2549 = vpop.permute.xlu0 %2548
        %v2550 = vsel %vm1323, %v2547, 0
        %v2552 = vsel %vm1323, %v2549, 0
        %2554 = vmatpush.xpose.msra.mxu0 0.0
        %2555 = vmatpush.xpose.msra.mxu0 0.0
        %2556 = vmatpush.xpose.msra.mxu0 0.0
        %2557 = vmatpush.xpose.msra.mxu0 0.0
        %2558 = vmatpush.xpose.msra.mxu0 0.0
        %2559 = vmatpush.xpose.msra.mxu0 0.0
        %2560 = vmatpush.xpose.msra.mxu0 0.0
        %2561 = vmatpush.xpose.msra.mxu0 0.0
        %2562 = vmatpush.xpose.msra.mxu0 0.0
        %2563 = vmatpush.xpose.msra.mxu0 0.0
        %2564 = vmatpush.xpose.msra.mxu0 0.0
        %2565 = vmatpush.xpose.msra.mxu0 0.0
        %2566 = vmatpush.xpose.msra.mxu0 0.0
        %2567 = vmatpush.xpose.msra.mxu0 0.0
        %2568 = vmatpush.xpose.msra.mxu0 0.0
        %2569 = vmatpush.xpose.msra.mxu0 %v2552
        %2570 = vmatmul.f32.gmra.mxu0 %v2550
        %v2571 = vpop.f32.mrf.mxu0
        %v2572 = vadd.f32 0.0, %v2571
        %2573 = vdwg.mxu0
        %v2574 = vmul.f32 %v2544, 0.17677669
        %v2575 = vmul.f32 %v2572, 0.17677669
        %v2576 = vsel %vm1382, %v2574, -inf
        %2577 = vmax.xlane.f32.xlu0 %v2576
        %v2578 = vpop.xlane.xlu0 %2577
        %v2579 = vsel %vm1382, %v2575, -inf
        %2580 = vmax.xlane.f32.xlu0 %v2579
        %v2581 = vpop.xlane.xlu0 %2580
        %v2582 = vsub.f32 %v2574, %v2578
        %v2583 = vsub.f32 %v2575, %v2581
        %v2584 = vmul.f32 %v2582, 1.442695
        %v2585 = vpow.pop %v2584
        %v2586 = vmul.f32 %v2583, 1.442695
        %v2587 = vpow.pop %v2586
        %v2588 = vsel %vm1382, %v2585, 0.0
        %2589 = vadd.xlane.f32.xlu0 %v2588
        %v2590 = vpop.xlane.xlu0 %2589
        %v2591 = vsel %vm1382, %v2587, 0.0
        %2592 = vadd.xlane.f32.xlu0 %v2591
        %v2593 = vpop.xlane.xlu0 %2592
        %v2594 = vrcp.pop %v2590
        %v2595 = vrcp.pop %v2593
        %v2596 = vmul.f32 %v2585, %v2594
        %v2597 = vmul.f32 %v2587, %v2595
        %2598 = vrot.lane.b32.xlu0 %v2100, 32
        %v2599 = vpop.permute.xlu0 %2598
        %v2602 = vsel %vm1382, %v2596, 0
        %2604 = vmatpush.msra.mxu0 0.0
        %2605 = vmatpush.msra.mxu0 0.0
        %2606 = vmatpush.msra.mxu0 0.0
        %2607 = vmatpush.msra.mxu0 0.0
        %2608 = vmatpush.msra.mxu0 0.0
        %2609 = vmatpush.msra.mxu0 0.0
        %2610 = vmatpush.msra.mxu0 0.0
        %2611 = vmatpush.msra.mxu0 0.0
        %2612 = vmatpush.msra.mxu0 0.0
        %2613 = vmatpush.msra.mxu0 0.0
        %2614 = vmatpush.msra.mxu0 0.0
        %2615 = vmatpush.msra.mxu0 0.0
        %2616 = vmatpush.msra.mxu0 0.0
        %2617 = vmatpush.msra.mxu0 0.0
        %2618 = vmatpush.msra.mxu0 0.0
        %2619 = vmatpush.msra.mxu0 %v2599
        %2620 = vmatmul.f32.gmra.mxu0 %v2602
        %v2621 = vpop.f32.mrf.mxu0
        %v2622 = vadd.f32 0.0, %v2621
        %2623 = vdwg.mxu0
        %2624 = vrot.lane.b32.xlu0 %v2102, 32
        %v2625 = vpop.permute.xlu0 %2624
        %v2628 = vsel %vm1382, %v2597, 0
        %2630 = vmatpush.msra.mxu0 0.0
        %2631 = vmatpush.msra.mxu0 0.0
        %2632 = vmatpush.msra.mxu0 0.0
        %2633 = vmatpush.msra.mxu0 0.0
        %2634 = vmatpush.msra.mxu0 0.0
        %2635 = vmatpush.msra.mxu0 0.0
        %2636 = vmatpush.msra.mxu0 0.0
        %2637 = vmatpush.msra.mxu0 0.0
        %2638 = vmatpush.msra.mxu0 0.0
        %2639 = vmatpush.msra.mxu0 0.0
        %2640 = vmatpush.msra.mxu0 0.0
        %2641 = vmatpush.msra.mxu0 0.0
        %2642 = vmatpush.msra.mxu0 0.0
        %2643 = vmatpush.msra.mxu0 0.0
        %2644 = vmatpush.msra.mxu0 0.0
        %2645 = vmatpush.msra.mxu0 %v2625
        %2646 = vmatmul.f32.gmra.mxu0 %v2628
        %v2647 = vpop.f32.mrf.mxu0
        %v2648 = vadd.f32 0.0, %v2647
        %2649 = vdwg.mxu0
        %2652 = vrot.lane.b32.xlu0 %v2622, 96
        %v2653 = vpop.permute.xlu0 %2652
        %2654 = vrot.lane.b32.xlu0 %v2648, 96
        %v2655 = vpop.permute.xlu0 %2654
        %2658 = vst.msk [vmem:[#allocation3] sm:$0xff] %vm1887, %v2653
        %2659 = vst.msk [vmem:[#allocation3 + $0x8] sm:$0xff] %vm1887, %v2655
        %v2660 = vld [vmem:[#allocation3] sm:$0xff]
        %v2661 = vld [vmem:[#allocation3 + $0x8] sm:$0xff]
        %v2662 = vpack.c.bf16 %v2661, %v2660
        %v2663 = vld [vmem:[%s890] sm:$0xf]
        %v2664 = vld [vmem:[%s890 + $0x4] sm:$0xf]
        %v2665 = vld [vmem:[%s890 + $0x8] sm:$0xf]
        %v2666 = vld [vmem:[%s890 + $0xc] sm:$0xf]
        %v2667 = vld [vmem:[%s890 + $0x10] sm:$0xf]
        %v2668 = vld [vmem:[%s890 + $0x14] sm:$0xf]
        %v2669 = vld [vmem:[%s890 + $0x18] sm:$0xf]
        %v2670 = vld [vmem:[%s890 + $0x1c] sm:$0xf]
        %v2671 = vld [vmem:[%s890 + $0x20] sm:$0xf]
        %v2672 = vld [vmem:[%s890 + $0x24] sm:$0xf]
        %v2673 = vld [vmem:[%s890 + $0x28] sm:$0xf]
        %v2674 = vld [vmem:[%s890 + $0x2c] sm:$0xf]
        %v2675 = vld [vmem:[%s890 + $0x30] sm:$0xf]
        %v2676 = vld [vmem:[%s890 + $0x34] sm:$0xf]
        %v2677 = vld [vmem:[%s890 + $0x38] sm:$0xf]
        %v2678 = vld [vmem:[%s890 + $0x3c] sm:$0xf]
        %v2695 = vunpack.c.l.b16 %v2663
        %v2696 = vunpack.c.l.b16 %v2664
        %v2697 = vunpack.c.l.b16 %v2665
        %v2698 = vunpack.c.l.b16 %v2666
        %v2699 = vunpack.c.l.b16 %v2667
        %v2700 = vunpack.c.l.b16 %v2668
        %v2701 = vunpack.c.l.b16 %v2669
        %v2702 = vunpack.c.l.b16 %v2670
        %v2703 = vunpack.c.l.b16 %v2671
        %v2704 = vunpack.c.l.b16 %v2672
        %v2705 = vunpack.c.l.b16 %v2673
        %v2706 = vunpack.c.l.b16 %v2674
        %v2707 = vunpack.c.l.b16 %v2675
        %v2708 = vunpack.c.l.b16 %v2676
        %v2709 = vunpack.c.l.b16 %v2677
        %v2710 = vunpack.c.l.b16 %v2678
        %v2711 = vpack.c.b16 %v2696, %v2695
        %v2712 = vpack.c.b16 %v2698, %v2697
        %v2713 = vpack.c.b16 %v2700, %v2699
        %v2714 = vpack.c.b16 %v2702, %v2701
        %v2715 = vpack.c.b16 %v2704, %v2703
        %v2716 = vpack.c.b16 %v2706, %v2705
        %v2717 = vpack.c.b16 %v2708, %v2707
        %v2718 = vpack.c.b16 %v2710, %v2709
        %2727 = vmatpush.bf16.msra.mxu0 %v2718
        %2728 = vmatpush.bf16.msra.mxu0 %v2717
        %2729 = vmatpush.bf16.msra.mxu0 %v2716
        %2730 = vmatpush.bf16.msra.mxu0 %v2715
        %2731 = vmatpush.bf16.msra.mxu0 %v2714
        %2732 = vmatpush.bf16.msra.mxu0 %v2713
        %2733 = vmatpush.bf16.msra.mxu0 %v2712
        %2734 = vmatpush.bf16.msra.mxu0 %v2711
        %2735 = vmatmul.bf16.gmra.mxu0 %v2662
        %v2736 = vpop.f32.mrf.mxu0
        %v2737 = vadd.f32 0.0, %v2736
        %v2738 = vpop.f32.mrf.mxu0
        %v2739 = vadd.f32 0.0, %v2738
        %2740 = vdwg.mxu0
        %v2741 = vadd.f32 %v1971, %v2737
        %v2742 = vadd.f32 %v1972, %v2739
        %v2743 = vld [vmem:[%s899] sm:$0x1]
        %v2744 = vld [vmem:[%s908] sm:$0x1]
        %2745 = vadd.xlane.f32.xlu0 %v2741
        %v2746 = vpop.xlane.xlu0 %2745
        %2747 = vadd.xlane.f32.xlu0 %v2742
        %v2748 = vpop.xlane.xlu0 %2747
        %v2749 = vmul.f32 %v2746, %v1073
        %v2750 = vmul.f32 %v2748, %v1073
        %v2751 = vsub.f32 %v2741, %v2749
        %v2752 = vsub.f32 %v2742, %v2750
        %v2753 = vmul.f32 %v2751, %v2751
        %v2754 = vmul.f32 %v2752, %v2752
        %2755 = vadd.xlane.f32.xlu0 %v2753
        %v2756 = vpop.xlane.xlu0 %2755
        %2757 = vadd.xlane.f32.xlu0 %v2754
        %v2758 = vpop.xlane.xlu0 %2757
        %v2759 = vmul.f32 %v2756, %v1073
        %v2760 = vmul.f32 %v2758, %v1073
        %v2761 = vadd.f32 %v2759, 1e-05
        %v2762 = vadd.f32 %v2760, 1e-05
        %v2763 = vrsqrt.pop %v2761
        %v2764 = vmul.f32 %v2763, %v2761
        %v2765 = vmul.f32 %v2764, %v2763
        %v2766 = vmul.f32 0.5, %v2765
        %v2767 = vsub.f32 1.5, %v2766
        %v2768 = vmul.f32 %v2763, %v2767
        %vm2769 = vweird.f32 %v2761
        %vm2770 = vweird.f32 %v2763
        %vm2771 = vmor %vm2769, %vm2770
        %v2772 = vsel %vm2771, %v2763, %v2768
        %v2773 = vrsqrt.pop %v2762
        %v2774 = vmul.f32 %v2773, %v2762
        %v2775 = vmul.f32 %v2774, %v2773
        %v2776 = vmul.f32 0.5, %v2775
        %v2777 = vsub.f32 1.5, %v2776
        %v2778 = vmul.f32 %v2773, %v2777
        %vm2779 = vweird.f32 %v2762
        %vm2780 = vweird.f32 %v2773
        %vm2781 = vmor %vm2779, %vm2780
        %v2782 = vsel %vm2781, %v2773, %v2778
        %v2783 = vmul.f32 %v2751, %v2772
        %v2784 = vmul.f32 %v2752, %v2782
        %v2786 = vperm.slane %v2743, 0
        %v2788 = vmul.f32 %v2783, %v2786
        %v2789 = vmul.f32 %v2784, %v2786
        %v2791 = vperm.slane %v2744, 0
        %v2793 = vadd.f32 %v2788, %v2791
        %v2794 = vadd.f32 %v2789, %v2791
        %v2795 = vpack.c.bf16 %v2794, %v2793
        %v2796 = vld [vmem:[%s918] sm:$0xf]
        %v2797 = vld [vmem:[%s918 + $0x10] sm:$0xf]
        %v2798 = vld [vmem:[%s918 + $0x20] sm:$0xf]
        %v2799 = vld [vmem:[%s918 + $0x30] sm:$0xf]
        %v2800 = vld [vmem:[%s918 + $0x40] sm:$0xf]
        %v2801 = vld [vmem:[%s918 + $0x50] sm:$0xf]
        %v2802 = vld [vmem:[%s918 + $0x60] sm:$0xf]
        %v2803 = vld [vmem:[%s918 + $0x70] sm:$0xf]
        %v2804 = vld [vmem:[%s918 + $0x80] sm:$0xf]
        %v2805 = vld [vmem:[%s918 + $0x90] sm:$0xf]
        %v2806 = vld [vmem:[%s918 + $0xa0] sm:$0xf]
        %v2807 = vld [vmem:[%s918 + $0xb0] sm:$0xf]
        %v2808 = vld [vmem:[%s918 + $0xc0] sm:$0xf]
        %v2809 = vld [vmem:[%s918 + $0xd0] sm:$0xf]
        %v2810 = vld [vmem:[%s918 + $0xe0] sm:$0xf]
        %v2811 = vld [vmem:[%s918 + $0xf0] sm:$0xf]
        %v2812 = vld [vmem:[%s1041] sm:$0x1]
        %v2814 = vperm.slane %v2812, 0
        %v2832 = vunpack.c.l.b16 %v2796
        %v2833 = vunpack.c.l.b16 %v2797
        %v2834 = vunpack.c.l.b16 %v2798
        %v2835 = vunpack.c.l.b16 %v2799
        %v2836 = vunpack.c.l.b16 %v2800
        %v2837 = vunpack.c.l.b16 %v2801
        %v2838 = vunpack.c.l.b16 %v2802
        %v2839 = vunpack.c.l.b16 %v2803
        %v2840 = vunpack.c.l.b16 %v2804
        %v2841 = vunpack.c.l.b16 %v2805
        %v2842 = vunpack.c.l.b16 %v2806
        %v2843 = vunpack.c.l.b16 %v2807
        %v2844 = vunpack.c.l.b16 %v2808
        %v2845 = vunpack.c.l.b16 %v2809
        %v2846 = vunpack.c.l.b16 %v2810
        %v2847 = vunpack.c.l.b16 %v2811
        %v2848 = vpack.c.b16 %v2833, %v2832
        %v2849 = vpack.c.b16 %v2835, %v2834
        %v2850 = vpack.c.b16 %v2837, %v2836
        %v2851 = vpack.c.b16 %v2839, %v2838
        %v2852 = vpack.c.b16 %v2841, %v2840
        %v2853 = vpack.c.b16 %v2843, %v2842
        %v2854 = vpack.c.b16 %v2845, %v2844
        %v2855 = vpack.c.b16 %v2847, %v2846
        %2864 = vmatpush.bf16.msra.mxu0 %v2855
        %2865 = vmatpush.bf16.msra.mxu0 %v2854
        %2866 = vmatpush.bf16.msra.mxu0 %v2853
        %2867 = vmatpush.bf16.msra.mxu0 %v2852
        %2868 = vmatpush.bf16.msra.mxu0 %v2851
        %2869 = vmatpush.bf16.msra.mxu0 %v2850
        %2870 = vmatpush.bf16.msra.mxu0 %v2849
        %2871 = vmatpush.bf16.msra.mxu0 %v2848
        %2872 = vmatmul.bf16.gmra.mxu0 %v2795
        %v2873 = vpop.f32.mrf.mxu0
        %v2874 = vadd.f32 %v2814, %v2873
        %v2875 = vpop.f32.mrf.mxu0
        %v2876 = vadd.f32 %v2814, %v2875
        %2877 = vdwg.mxu0
        %v2878 = vmul.f32 %v2874, %v2874
        %v2879 = vmul.f32 %v2876, %v2876
        %v2880 = vmul.f32 %v2874, %v2878
        %v2881 = vmul.f32 %v2876, %v2879
        %v2882 = vmul.f32 %v2880, 0.044715
        %v2883 = vmul.f32 %v2881, 0.044715
        %v2884 = vadd.f32 %v2874, %v2882
        %v2885 = vadd.f32 %v2876, %v2883
        %v2886 = vmul.f32 %v2884, 0.7978846
        %v2887 = vmul.f32 %v2885, 0.7978846
        %v2888 = vtanh.pop %v2886
        %v2889 = vtanh.pop %v2887
        %v2890 = vadd.f32 %v2888, 1.0
        %v2891 = vadd.f32 %v2889, 1.0
        %v2892 = vmul.f32 %v2890, 0.5
        %v2893 = vmul.f32 %v2891, 0.5
        %v2894 = vmul.f32 %v2874, %v2892
        %v2895 = vmul.f32 %v2876, %v2893
        %v2896 = vpack.c.bf16 %v2895, %v2894
        %v2897 = vld [vmem:[%s928] sm:$0xf]
        %v2898 = vld [vmem:[%s928 + $0x4] sm:$0xf]
        %v2899 = vld [vmem:[%s928 + $0x8] sm:$0xf]
        %v2900 = vld [vmem:[%s928 + $0xc] sm:$0xf]
        %v2901 = vld [vmem:[%s928 + $0x10] sm:$0xf]
        %v2902 = vld [vmem:[%s928 + $0x14] sm:$0xf]
        %v2903 = vld [vmem:[%s928 + $0x18] sm:$0xf]
        %v2904 = vld [vmem:[%s928 + $0x1c] sm:$0xf]
        %v2905 = vld [vmem:[%s928 + $0x20] sm:$0xf]
        %v2906 = vld [vmem:[%s928 + $0x24] sm:$0xf]
        %v2907 = vld [vmem:[%s928 + $0x28] sm:$0xf]
        %v2908 = vld [vmem:[%s928 + $0x2c] sm:$0xf]
        %v2909 = vld [vmem:[%s928 + $0x30] sm:$0xf]
        %v2910 = vld [vmem:[%s928 + $0x34] sm:$0xf]
        %v2911 = vld [vmem:[%s928 + $0x38] sm:$0xf]
        %v2912 = vld [vmem:[%s928 + $0x3c] sm:$0xf]
        %v2913 = vld [vmem:[%s918 + $0x4] sm:$0xf]
        %v2914 = vld [vmem:[%s918 + $0x14] sm:$0xf]
        %v2915 = vld [vmem:[%s918 + $0x24] sm:$0xf]
        %v2916 = vld [vmem:[%s918 + $0x34] sm:$0xf]
        %v2917 = vld [vmem:[%s918 + $0x44] sm:$0xf]
        %v2918 = vld [vmem:[%s918 + $0x54] sm:$0xf]
        %v2919 = vld [vmem:[%s918 + $0x64] sm:$0xf]
        %v2920 = vld [vmem:[%s918 + $0x74] sm:$0xf]
        %v2921 = vld [vmem:[%s918 + $0x84] sm:$0xf]
        %v2922 = vld [vmem:[%s918 + $0x94] sm:$0xf]
        %v2923 = vld [vmem:[%s918 + $0xa4] sm:$0xf]
        %v2924 = vld [vmem:[%s918 + $0xb4] sm:$0xf]
        %v2925 = vld [vmem:[%s918 + $0xc4] sm:$0xf]
        %v2926 = vld [vmem:[%s918 + $0xd4] sm:$0xf]
        %v2927 = vld [vmem:[%s918 + $0xe4] sm:$0xf]
        %v2928 = vld [vmem:[%s918 + $0xf4] sm:$0xf]
        %v2929 = vld [vmem:[%s1041 + $0x1] sm:$0x1]
        %v2931 = vperm.slane %v2929, 0
        %v2949 = vunpack.c.l.b16 %v2913
        %v2950 = vunpack.c.l.b16 %v2914
        %v2951 = vunpack.c.l.b16 %v2915
        %v2952 = vunpack.c.l.b16 %v2916
        %v2953 = vunpack.c.l.b16 %v2917
        %v2954 = vunpack.c.l.b16 %v2918
        %v2955 = vunpack.c.l.b16 %v2919
        %v2956 = vunpack.c.l.b16 %v2920
        %v2957 = vunpack.c.l.b16 %v2921
        %v2958 = vunpack.c.l.b16 %v2922
        %v2959 = vunpack.c.l.b16 %v2923
        %v2960 = vunpack.c.l.b16 %v2924
        %v2961 = vunpack.c.l.b16 %v2925
        %v2962 = vunpack.c.l.b16 %v2926
        %v2963 = vunpack.c.l.b16 %v2927
        %v2964 = vunpack.c.l.b16 %v2928
        %v2965 = vpack.c.b16 %v2950, %v2949
        %v2966 = vpack.c.b16 %v2952, %v2951
        %v2967 = vpack.c.b16 %v2954, %v2953
        %v2968 = vpack.c.b16 %v2956, %v2955
        %v2969 = vpack.c.b16 %v2958, %v2957
        %v2970 = vpack.c.b16 %v2960, %v2959
        %v2971 = vpack.c.b16 %v2962, %v2961
        %v2972 = vpack.c.b16 %v2964, %v2963
        %2981 = vmatpush.bf16.msra.mxu0 %v2972
        %2982 = vmatpush.bf16.msra.mxu0 %v2971
        %2983 = vmatpush.bf16.msra.mxu0 %v2970
        %2984 = vmatpush.bf16.msra.mxu0 %v2969
        %2985 = vmatpush.bf16.msra.mxu0 %v2968
        %2986 = vmatpush.bf16.msra.mxu0 %v2967
        %2987 = vmatpush.bf16.msra.mxu0 %v2966
        %2988 = vmatpush.bf16.msra.mxu0 %v2965
        %2989 = vmatmul.bf16.gmra.mxu0 %v2795
        %v2990 = vpop.f32.mrf.mxu0
        %v2991 = vadd.f32 %v2931, %v2990
        %v2992 = vpop.f32.mrf.mxu0
        %v2993 = vadd.f32 %v2931, %v2992
        %2994 = vdwg.mxu0
        %v2995 = vmul.f32 %v2991, %v2991
        %v2996 = vmul.f32 %v2993, %v2993
        %v2997 = vmul.f32 %v2991, %v2995
        %v2998 = vmul.f32 %v2993, %v2996
        %v2999 = vmul.f32 %v2997, 0.044715
        %v3000 = vmul.f32 %v2998, 0.044715
        %v3001 = vadd.f32 %v2991, %v2999
        %v3002 = vadd.f32 %v2993, %v3000
        %v3003 = vmul.f32 %v3001, 0.7978846
        %v3004 = vmul.f32 %v3002, 0.7978846
        %v3005 = vtanh.pop %v3003
        %v3006 = vtanh.pop %v3004
        %v3007 = vadd.f32 %v3005, 1.0
        %v3008 = vadd.f32 %v3006, 1.0
        %v3009 = vmul.f32 %v3007, 0.5
        %v3010 = vmul.f32 %v3008, 0.5
        %v3011 = vmul.f32 %v2991, %v3009
        %v3012 = vmul.f32 %v2993, %v3010
        %v3013 = vpack.c.bf16 %v3012, %v3011
        %v3014 = vld [vmem:[%s928 + $0x40] sm:$0xf]
        %v3015 = vld [vmem:[%s928 + $0x44] sm:$0xf]
        %v3016 = vld [vmem:[%s928 + $0x48] sm:$0xf]
        %v3017 = vld [vmem:[%s928 + $0x4c] sm:$0xf]
        %v3018 = vld [vmem:[%s928 + $0x50] sm:$0xf]
        %v3019 = vld [vmem:[%s928 + $0x54] sm:$0xf]
        %v3020 = vld [vmem:[%s928 + $0x58] sm:$0xf]
        %v3021 = vld [vmem:[%s928 + $0x5c] sm:$0xf]
        %v3022 = vld [vmem:[%s928 + $0x60] sm:$0xf]
        %v3023 = vld [vmem:[%s928 + $0x64] sm:$0xf]
        %v3024 = vld [vmem:[%s928 + $0x68] sm:$0xf]
        %v3025 = vld [vmem:[%s928 + $0x6c] sm:$0xf]
        %v3026 = vld [vmem:[%s928 + $0x70] sm:$0xf]
        %v3027 = vld [vmem:[%s928 + $0x74] sm:$0xf]
        %v3028 = vld [vmem:[%s928 + $0x78] sm:$0xf]
        %v3029 = vld [vmem:[%s928 + $0x7c] sm:$0xf]
        %v3046 = vunpack.c.l.b16 %v3014
        %v3047 = vunpack.c.l.b16 %v3015
        %v3048 = vunpack.c.l.b16 %v3016
        %v3049 = vunpack.c.l.b16 %v3017
        %v3050 = vunpack.c.l.b16 %v3018
        %v3051 = vunpack.c.l.b16 %v3019
        %v3052 = vunpack.c.l.b16 %v3020
        %v3053 = vunpack.c.l.b16 %v3021
        %v3054 = vunpack.c.l.b16 %v3022
        %v3055 = vunpack.c.l.b16 %v3023
        %v3056 = vunpack.c.l.b16 %v3024
        %v3057 = vunpack.c.l.b16 %v3025
        %v3058 = vunpack.c.l.b16 %v3026
        %v3059 = vunpack.c.l.b16 %v3027
        %v3060 = vunpack.c.l.b16 %v3028
        %v3061 = vunpack.c.l.b16 %v3029
        %v3062 = vpack.c.b16 %v3047, %v3046
        %v3063 = vpack.c.b16 %v3049, %v3048
        %v3064 = vpack.c.b16 %v3051, %v3050
        %v3065 = vpack.c.b16 %v3053, %v3052
        %v3066 = vpack.c.b16 %v3055, %v3054
        %v3067 = vpack.c.b16 %v3057, %v3056
        %v3068 = vpack.c.b16 %v3059, %v3058
        %v3069 = vpack.c.b16 %v3061, %v3060
        %3078 = vmatpush.bf16.msra.mxu0 %v3069
        %3079 = vmatpush.bf16.msra.mxu0 %v3068
        %3080 = vmatpush.bf16.msra.mxu0 %v3067
        %3081 = vmatpush.bf16.msra.mxu0 %v3066
        %3082 = vmatpush.bf16.msra.mxu0 %v3065
        %3083 = vmatpush.bf16.msra.mxu0 %v3064
        %3084 = vmatpush.bf16.msra.mxu0 %v3063
        %3085 = vmatpush.bf16.msra.mxu0 %v3062
        %3086 = vmatmul.bf16.gmra.mxu0 %v3013
        %v3087 = vpop.f32.mrf.mxu0
        %v3088 = vadd.f32 0.0, %v3087
        %v3089 = vpop.f32.mrf.mxu0
        %v3090 = vadd.f32 0.0, %v3089
        %3091 = vdwg.mxu0
        %v3108 = vunpack.c.l.b16 %v2897
        %v3109 = vunpack.c.l.b16 %v2898
        %v3110 = vunpack.c.l.b16 %v2899
        %v3111 = vunpack.c.l.b16 %v2900
        %v3112 = vunpack.c.l.b16 %v2901
        %v3113 = vunpack.c.l.b16 %v2902
        %v3114 = vunpack.c.l.b16 %v2903
        %v3115 = vunpack.c.l.b16 %v2904
        %v3116 = vunpack.c.l.b16 %v2905
        %v3117 = vunpack.c.l.b16 %v2906
        %v3118 = vunpack.c.l.b16 %v2907
        %v3119 = vunpack.c.l.b16 %v2908
        %v3120 = vunpack.c.l.b16 %v2909
        %v3121 = vunpack.c.l.b16 %v2910
        %v3122 = vunpack.c.l.b16 %v2911
        %v3123 = vunpack.c.l.b16 %v2912
        %v3124 = vpack.c.b16 %v3109, %v3108
        %v3125 = vpack.c.b16 %v3111, %v3110
        %v3126 = vpack.c.b16 %v3113, %v3112
        %v3127 = vpack.c.b16 %v3115, %v3114
        %v3128 = vpack.c.b16 %v3117, %v3116
        %v3129 = vpack.c.b16 %v3119, %v3118
        %v3130 = vpack.c.b16 %v3121, %v3120
        %v3131 = vpack.c.b16 %v3123, %v3122
        %3140 = vmatpush.bf16.msra.mxu0 %v3131
        %3141 = vmatpush.bf16.msra.mxu0 %v3130
        %3142 = vmatpush.bf16.msra.mxu0 %v3129
        %3143 = vmatpush.bf16.msra.mxu0 %v3128
        %3144 = vmatpush.bf16.msra.mxu0 %v3127
        %3145 = vmatpush.bf16.msra.mxu0 %v3126
        %3146 = vmatpush.bf16.msra.mxu0 %v3125
        %3147 = vmatpush.bf16.msra.mxu0 %v3124
        %3148 = vmatmul.bf16.gmra.mxu0 %v2896
        %v3149 = vpop.f32.mrf.mxu0
        %v3150 = vadd.f32 %v3088, %v3149
        %v3151 = vpop.f32.mrf.mxu0
        %v3152 = vadd.f32 %v3090, %v3151
        %3153 = vdwg.mxu0
        %v3154 = vld [vmem:[%s918 + $0x8] sm:$0xf]
        %v3155 = vld [vmem:[%s918 + $0x18] sm:$0xf]
        %v3156 = vld [vmem:[%s918 + $0x28] sm:$0xf]
        %v3157 = vld [vmem:[%s918 + $0x38] sm:$0xf]
        %v3158 = vld [vmem:[%s918 + $0x48] sm:$0xf]
        %v3159 = vld [vmem:[%s918 + $0x58] sm:$0xf]
        %v3160 = vld [vmem:[%s918 + $0x68] sm:$0xf]
        %v3161 = vld [vmem:[%s918 + $0x78] sm:$0xf]
        %v3162 = vld [vmem:[%s918 + $0x88] sm:$0xf]
        %v3163 = vld [vmem:[%s918 + $0x98] sm:$0xf]
        %v3164 = vld [vmem:[%s918 + $0xa8] sm:$0xf]
        %v3165 = vld [vmem:[%s918 + $0xb8] sm:$0xf]
        %v3166 = vld [vmem:[%s918 + $0xc8] sm:$0xf]
        %v3167 = vld [vmem:[%s918 + $0xd8] sm:$0xf]
        %v3168 = vld [vmem:[%s918 + $0xe8] sm:$0xf]
        %v3169 = vld [vmem:[%s918 + $0xf8] sm:$0xf]
        %v3170 = vld [vmem:[%s1041 + $0x2] sm:$0x1]
        %v3172 = vperm.slane %v3170, 0
        %v3190 = vunpack.c.l.b16 %v3154
        %v3191 = vunpack.c.l.b16 %v3155
        %v3192 = vunpack.c.l.b16 %v3156
        %v3193 = vunpack.c.l.b16 %v3157
        %v3194 = vunpack.c.l.b16 %v3158
        %v3195 = vunpack.c.l.b16 %v3159
        %v3196 = vunpack.c.l.b16 %v3160
        %v3197 = vunpack.c.l.b16 %v3161
        %v3198 = vunpack.c.l.b16 %v3162
        %v3199 = vunpack.c.l.b16 %v3163
        %v3200 = vunpack.c.l.b16 %v3164
        %v3201 = vunpack.c.l.b16 %v3165
        %v3202 = vunpack.c.l.b16 %v3166
        %v3203 = vunpack.c.l.b16 %v3167
        %v3204 = vunpack.c.l.b16 %v3168
        %v3205 = vunpack.c.l.b16 %v3169
        %v3206 = vpack.c.b16 %v3191, %v3190
        %v3207 = vpack.c.b16 %v3193, %v3192
        %v3208 = vpack.c.b16 %v3195, %v3194
        %v3209 = vpack.c.b16 %v3197, %v3196
        %v3210 = vpack.c.b16 %v3199, %v3198
        %v3211 = vpack.c.b16 %v3201, %v3200
        %v3212 = vpack.c.b16 %v3203, %v3202
        %v3213 = vpack.c.b16 %v3205, %v3204
        %3222 = vmatpush.bf16.msra.mxu0 %v3213
        %3223 = vmatpush.bf16.msra.mxu0 %v3212
        %3224 = vmatpush.bf16.msra.mxu0 %v3211
        %3225 = vmatpush.bf16.msra.mxu0 %v3210
        %3226 = vmatpush.bf16.msra.mxu0 %v3209
        %3227 = vmatpush.bf16.msra.mxu0 %v3208
        %3228 = vmatpush.bf16.msra.mxu0 %v3207
        %3229 = vmatpush.bf16.msra.mxu0 %v3206
        %3230 = vmatmul.bf16.gmra.mxu0 %v2795
        %v3231 = vpop.f32.mrf.mxu0
        %v3232 = vadd.f32 %v3172, %v3231
        %v3233 = vpop.f32.mrf.mxu0
        %v3234 = vadd.f32 %v3172, %v3233
        %3235 = vdwg.mxu0
        %v3236 = vmul.f32 %v3232, %v3232
        %v3237 = vmul.f32 %v3234, %v3234
        %v3238 = vmul.f32 %v3232, %v3236
        %v3239 = vmul.f32 %v3234, %v3237
        %v3240 = vmul.f32 %v3238, 0.044715
        %v3241 = vmul.f32 %v3239, 0.044715
        %v3242 = vadd.f32 %v3232, %v3240
        %v3243 = vadd.f32 %v3234, %v3241
        %v3244 = vmul.f32 %v3242, 0.7978846
        %v3245 = vmul.f32 %v3243, 0.7978846
        %v3246 = vtanh.pop %v3244
        %v3247 = vtanh.pop %v3245
        %v3248 = vadd.f32 %v3246, 1.0
        %v3249 = vadd.f32 %v3247, 1.0
        %v3250 = vmul.f32 %v3248, 0.5
        %v3251 = vmul.f32 %v3249, 0.5
        %v3252 = vmul.f32 %v3232, %v3250
        %v3253 = vmul.f32 %v3234, %v3251
        %v3254 = vpack.c.bf16 %v3253, %v3252
        %v3255 = vld [vmem:[%s928 + $0x80] sm:$0xf]
        %v3256 = vld [vmem:[%s928 + $0x84] sm:$0xf]
        %v3257 = vld [vmem:[%s928 + $0x88] sm:$0xf]
        %v3258 = vld [vmem:[%s928 + $0x8c] sm:$0xf]
        %v3259 = vld [vmem:[%s928 + $0x90] sm:$0xf]
        %v3260 = vld [vmem:[%s928 + $0x94] sm:$0xf]
        %v3261 = vld [vmem:[%s928 + $0x98] sm:$0xf]
        %v3262 = vld [vmem:[%s928 + $0x9c] sm:$0xf]
        %v3263 = vld [vmem:[%s928 + $0xa0] sm:$0xf]
        %v3264 = vld [vmem:[%s928 + $0xa4] sm:$0xf]
        %v3265 = vld [vmem:[%s928 + $0xa8] sm:$0xf]
        %v3266 = vld [vmem:[%s928 + $0xac] sm:$0xf]
        %v3267 = vld [vmem:[%s928 + $0xb0] sm:$0xf]
        %v3268 = vld [vmem:[%s928 + $0xb4] sm:$0xf]
        %v3269 = vld [vmem:[%s928 + $0xb8] sm:$0xf]
        %v3270 = vld [vmem:[%s928 + $0xbc] sm:$0xf]
        %v3287 = vunpack.c.l.b16 %v3255
        %v3288 = vunpack.c.l.b16 %v3256
        %v3289 = vunpack.c.l.b16 %v3257
        %v3290 = vunpack.c.l.b16 %v3258
        %v3291 = vunpack.c.l.b16 %v3259
        %v3292 = vunpack.c.l.b16 %v3260
        %v3293 = vunpack.c.l.b16 %v3261
        %v3294 = vunpack.c.l.b16 %v3262
        %v3295 = vunpack.c.l.b16 %v3263
        %v3296 = vunpack.c.l.b16 %v3264
        %v3297 = vunpack.c.l.b16 %v3265
        %v3298 = vunpack.c.l.b16 %v3266
        %v3299 = vunpack.c.l.b16 %v3267
        %v3300 = vunpack.c.l.b16 %v3268
        %v3301 = vunpack.c.l.b16 %v3269
        %v3302 = vunpack.c.l.b16 %v3270
        %v3303 = vpack.c.b16 %v3288, %v3287
        %v3304 = vpack.c.b16 %v3290, %v3289
        %v3305 = vpack.c.b16 %v3292, %v3291
        %v3306 = vpack.c.b16 %v3294, %v3293
        %v3307 = vpack.c.b16 %v3296, %v3295
        %v3308 = vpack.c.b16 %v3298, %v3297
        %v3309 = vpack.c.b16 %v3300, %v3299
        %v3310 = vpack.c.b16 %v3302, %v3301
        %3319 = vmatpush.bf16.msra.mxu0 %v3310
        %3320 = vmatpush.bf16.msra.mxu0 %v3309
        %3321 = vmatpush.bf16.msra.mxu0 %v3308
        %3322 = vmatpush.bf16.msra.mxu0 %v3307
        %3323 = vmatpush.bf16.msra.mxu0 %v3306
        %3324 = vmatpush.bf16.msra.mxu0 %v3305
        %3325 = vmatpush.bf16.msra.mxu0 %v3304
        %3326 = vmatpush.bf16.msra.mxu0 %v3303
        %3327 = vmatmul.bf16.gmra.mxu0 %v3254
        %v3328 = vpop.f32.mrf.mxu0
        %v3329 = vadd.f32 0.0, %v3328
        %v3330 = vpop.f32.mrf.mxu0
        %v3331 = vadd.f32 0.0, %v3330
        %3332 = vdwg.mxu0
        %v3333 = vadd.f32 %v3150, %v3329
        %v3334 = vadd.f32 %v3152, %v3331
        %v3335 = vld [vmem:[%s918 + $0xc] sm:$0xf]
        %v3336 = vld [vmem:[%s918 + $0x1c] sm:$0xf]
        %v3337 = vld [vmem:[%s918 + $0x2c] sm:$0xf]
        %v3338 = vld [vmem:[%s918 + $0x3c] sm:$0xf]
        %v3339 = vld [vmem:[%s918 + $0x4c] sm:$0xf]
        %v3340 = vld [vmem:[%s918 + $0x5c] sm:$0xf]
        %v3341 = vld [vmem:[%s918 + $0x6c] sm:$0xf]
        %v3342 = vld [vmem:[%s918 + $0x7c] sm:$0xf]
        %v3343 = vld [vmem:[%s918 + $0x8c] sm:$0xf]
        %v3344 = vld [vmem:[%s918 + $0x9c] sm:$0xf]
        %v3345 = vld [vmem:[%s918 + $0xac] sm:$0xf]
        %v3346 = vld [vmem:[%s918 + $0xbc] sm:$0xf]
        %v3347 = vld [vmem:[%s918 + $0xcc] sm:$0xf]
        %v3348 = vld [vmem:[%s918 + $0xdc] sm:$0xf]
        %v3349 = vld [vmem:[%s918 + $0xec] sm:$0xf]
        %v3350 = vld [vmem:[%s918 + $0xfc] sm:$0xf]
        %v3351 = vld [vmem:[%s1041 + $0x3] sm:$0x1]
        %v3353 = vperm.slane %v3351, 0
        %v3371 = vunpack.c.l.b16 %v3335
        %v3372 = vunpack.c.l.b16 %v3336
        %v3373 = vunpack.c.l.b16 %v3337
        %v3374 = vunpack.c.l.b16 %v3338
        %v3375 = vunpack.c.l.b16 %v3339
        %v3376 = vunpack.c.l.b16 %v3340
        %v3377 = vunpack.c.l.b16 %v3341
        %v3378 = vunpack.c.l.b16 %v3342
        %v3379 = vunpack.c.l.b16 %v3343
        %v3380 = vunpack.c.l.b16 %v3344
        %v3381 = vunpack.c.l.b16 %v3345
        %v3382 = vunpack.c.l.b16 %v3346
        %v3383 = vunpack.c.l.b16 %v3347
        %v3384 = vunpack.c.l.b16 %v3348
        %v3385 = vunpack.c.l.b16 %v3349
        %v3386 = vunpack.c.l.b16 %v3350
        %v3387 = vpack.c.b16 %v3372, %v3371
        %v3388 = vpack.c.b16 %v3374, %v3373
        %v3389 = vpack.c.b16 %v3376, %v3375
        %v3390 = vpack.c.b16 %v3378, %v3377
        %v3391 = vpack.c.b16 %v3380, %v3379
        %v3392 = vpack.c.b16 %v3382, %v3381
        %v3393 = vpack.c.b16 %v3384, %v3383
        %v3394 = vpack.c.b16 %v3386, %v3385
        %3403 = vmatpush.bf16.msra.mxu0 %v3394
        %3404 = vmatpush.bf16.msra.mxu0 %v3393
        %3405 = vmatpush.bf16.msra.mxu0 %v3392
        %3406 = vmatpush.bf16.msra.mxu0 %v3391
        %3407 = vmatpush.bf16.msra.mxu0 %v3390
        %3408 = vmatpush.bf16.msra.mxu0 %v3389
        %3409 = vmatpush.bf16.msra.mxu0 %v3388
        %3410 = vmatpush.bf16.msra.mxu0 %v3387
        %3411 = vmatmul.bf16.gmra.mxu0 %v2795
        %v3412 = vpop.f32.mrf.mxu0
        %v3413 = vadd.f32 %v3353, %v3412
        %v3414 = vpop.f32.mrf.mxu0
        %v3415 = vadd.f32 %v3353, %v3414
        %3416 = vdwg.mxu0
        %v3417 = vmul.f32 %v3413, %v3413
        %v3418 = vmul.f32 %v3415, %v3415
        %v3419 = vmul.f32 %v3413, %v3417
        %v3420 = vmul.f32 %v3415, %v3418
        %v3421 = vmul.f32 %v3419, 0.044715
        %v3422 = vmul.f32 %v3420, 0.044715
        %v3423 = vadd.f32 %v3413, %v3421
        %v3424 = vadd.f32 %v3415, %v3422
        %v3425 = vmul.f32 %v3423, 0.7978846
        %v3426 = vmul.f32 %v3424, 0.7978846
        %v3427 = vtanh.pop %v3425
        %v3428 = vtanh.pop %v3426
        %v3429 = vadd.f32 %v3427, 1.0
        %v3430 = vadd.f32 %v3428, 1.0
        %v3431 = vmul.f32 %v3429, 0.5
        %v3432 = vmul.f32 %v3430, 0.5
        %v3433 = vmul.f32 %v3413, %v3431
        %v3434 = vmul.f32 %v3415, %v3432
        %v3435 = vpack.c.bf16 %v3434, %v3433
        %v3436 = vld [vmem:[%s928 + $0xc0] sm:$0xf]
        %v3437 = vld [vmem:[%s928 + $0xc4] sm:$0xf]
        %v3438 = vld [vmem:[%s928 + $0xc8] sm:$0xf]
        %v3439 = vld [vmem:[%s928 + $0xcc] sm:$0xf]
        %v3440 = vld [vmem:[%s928 + $0xd0] sm:$0xf]
        %v3441 = vld [vmem:[%s928 + $0xd4] sm:$0xf]
        %v3442 = vld [vmem:[%s928 + $0xd8] sm:$0xf]
        %v3443 = vld [vmem:[%s928 + $0xdc] sm:$0xf]
        %v3444 = vld [vmem:[%s928 + $0xe0] sm:$0xf]
        %v3445 = vld [vmem:[%s928 + $0xe4] sm:$0xf]
        %v3446 = vld [vmem:[%s928 + $0xe8] sm:$0xf]
        %v3447 = vld [vmem:[%s928 + $0xec] sm:$0xf]
        %v3448 = vld [vmem:[%s928 + $0xf0] sm:$0xf]
        %v3449 = vld [vmem:[%s928 + $0xf4] sm:$0xf]
        %v3450 = vld [vmem:[%s928 + $0xf8] sm:$0xf]
        %v3451 = vld [vmem:[%s928 + $0xfc] sm:$0xf]
        %v3468 = vunpack.c.l.b16 %v3436
        %v3469 = vunpack.c.l.b16 %v3437
        %v3470 = vunpack.c.l.b16 %v3438
        %v3471 = vunpack.c.l.b16 %v3439
        %v3472 = vunpack.c.l.b16 %v3440
        %v3473 = vunpack.c.l.b16 %v3441
        %v3474 = vunpack.c.l.b16 %v3442
        %v3475 = vunpack.c.l.b16 %v3443
        %v3476 = vunpack.c.l.b16 %v3444
        %v3477 = vunpack.c.l.b16 %v3445
        %v3478 = vunpack.c.l.b16 %v3446
        %v3479 = vunpack.c.l.b16 %v3447
        %v3480 = vunpack.c.l.b16 %v3448
        %v3481 = vunpack.c.l.b16 %v3449
        %v3482 = vunpack.c.l.b16 %v3450
        %v3483 = vunpack.c.l.b16 %v3451
        %v3484 = vpack.c.b16 %v3469, %v3468
        %v3485 = vpack.c.b16 %v3471, %v3470
        %v3486 = vpack.c.b16 %v3473, %v3472
        %v3487 = vpack.c.b16 %v3475, %v3474
        %v3488 = vpack.c.b16 %v3477, %v3476
        %v3489 = vpack.c.b16 %v3479, %v3478
        %v3490 = vpack.c.b16 %v3481, %v3480
        %v3491 = vpack.c.b16 %v3483, %v3482
        %3500 = vmatpush.bf16.msra.mxu0 %v3491
        %3501 = vmatpush.bf16.msra.mxu0 %v3490
        %3502 = vmatpush.bf16.msra.mxu0 %v3489
        %3503 = vmatpush.bf16.msra.mxu0 %v3488
        %3504 = vmatpush.bf16.msra.mxu0 %v3487
        %3505 = vmatpush.bf16.msra.mxu0 %v3486
        %3506 = vmatpush.bf16.msra.mxu0 %v3485
        %3507 = vmatpush.bf16.msra.mxu0 %v3484
        %3508 = vmatmul.bf16.gmra.mxu0 %v3435
        %v3509 = vpop.f32.mrf.mxu0
        %v3510 = vadd.f32 0.0, %v3509
        %v3511 = vpop.f32.mrf.mxu0
        %v3512 = vadd.f32 0.0, %v3511
        %3513 = vdwg.mxu0
        %v3514 = vadd.f32 %v3333, %v3510
        %v3515 = vadd.f32 %v3334, %v3512
        %v3516 = vadd.f32 %v2741, %v3514
        %v3517 = vadd.f32 %v2742, %v3515
        %v3518 = vld [vmem:[%s1044] sm:$0x1]
        %v3520 = vperm.slane %v3518, 0
        %v3522 = vadd.f32 %v3516, %v3520
        %v3523 = vadd.f32 %v3517, %v3520
        %3524 = vst [vmem:[#allocation2] sm:$0xff] %v3522
        %3525 = vst [vmem:[#allocation2 + $0x8] sm:$0xff] %v3523
        %p3526 = scmp.eq.s32.totalorder %s51, 1
        // Predicated region
        $region145: #{tpu_custom_call.1} parent=87 // pred_check
          %p3527 = pneg %p3526
        $region146: #{tpu_custom_call.1} parent=87 // pred_check_branch
          %3529 = sbr.rel (%p3527) target = $region148
        $region147: #{tpu_custom_call.1} parent=87 // pred_region
          %3530 = vst [vmem:[#allocation25] sm:$0xff] %v3522
          %3531 = vst [vmem:[#allocation25 + $0x8] sm:$0xff] %v3523
        $region148: #{tpu_custom_call.1} parent=87 // pred_fallthru
          _
        // Predicated region
        $region149: #{tpu_custom_call.1} parent=87 // pred_check
          %p3532 = pneg %p518
        $region150: #{tpu_custom_call.1} parent=87 // pred_check_branch
          %3534 = sbr.rel (%p3532) target = $region152
        $region151: #{tpu_custom_call.1} parent=87 // pred_region
          %s3535 = smul.u32 2, %s50
          %3537 = vsyncadd [#allocation6], 0
          %s3538 = smul.addr %s3535, 8
          %s3539 = scalar_lea.hbm %s17, %s3538
          %s3540 = sshll.u32 [#allocation25], 4
          %s3541 = int_to_ptr.vmem [resolvable:$true] %s3540
          %s3542 = sshll.u32 %s3539, 4
          %s3543 = int_to_ptr.hbm [resolvable:$true] %s3542
          %3548 = dma.vmem_to_hbm [thread:$0]  %s3541, 256, %s3543, [#allocation6], 128, 128, 8
        $region152: #{tpu_custom_call.1} parent=87 // pred_fallthru
          _
        // Predicated region
        $region153: #{tpu_custom_call.1} parent=87 // pred_check
          %p3549 = pneg %p518
        $region154: #{tpu_custom_call.1} parent=87 // pred_check_branch
          %3551 = sbr.rel (%p3549) target = $region156
        $region155: #{tpu_custom_call.1} parent=87 // pred_region
          %3553 = dma.done [#allocation6], 256
        $region156: #{tpu_custom_call.1} parent=87 // pred_fallthru
          _
      $region88: #{tpu_custom_call.1} parent=5 // pred_fallthru
        _
      %p3554 = scmp.le.s32.totalorder 2, %s41
      // Predicated region
      $region157: #{tpu_custom_call.1} parent=5 // pred_check
        %p3555 = pneg %p3554
      $region158: #{tpu_custom_call.1} parent=5 // pred_check_branch
        %3557 = sbr.rel (%p3555) target = $region160
      $region159: #{tpu_custom_call.1} parent=5 // pred_region
        %s3558 = ssub.s32 %s41, 2
      $region160: #{tpu_custom_call.1} parent=5 // pred_fallthru
        _
    $region6: #{tpu_custom_call.1} parent=1 // loop_footer
      %s45 = sadd.s32 1, %s41
    $region7: #{tpu_custom_call.1} parent=1 // loop_footer_branch
      %40 = sbr.rel target = $region3
    $region8: #{tpu_custom_call.1} parent=1 // loop_exit
      _
    %3559 = vsyncpa [#allocation5], 1
    %s3560 = scalar_lea.sflag [#allocation5], 1
    %3561 = vsyncpa %s3560, 1
    %3562 = vsyncpa [#allocation8], 1
    %3563 = vsyncpa [#allocation11], 1
    %s3564 = scalar_lea.sflag [#allocation11], 1
    %3565 = vsyncpa %s3564, 1
    %3566 = vsyncpa [#allocation14], 1
    %s3567 = scalar_lea.sflag [#allocation14], 1
    %3568 = vsyncpa %s3567, 1
    %3569 = vsyncpa [#allocation17], 1
    %s3570 = scalar_lea.sflag [#allocation17], 1
    %3571 = vsyncpa %s3570, 1
    %3572 = vsyncpa [#allocation20], 1
    %s3573 = scalar_lea.sflag [#allocation20], 1
    %3574 = vsyncpa %s3573, 1
    %3575 = vsyncpa [#allocation23], 1
    %s3576 = scalar_lea.sflag [#allocation23], 1
    %3577 = vsyncpa %s3576, 1
    %3578 = vsyncpa [#allocation6], 1
    %s3579 = scalar_lea.sflag [#allocation6], 1
    %3580 = vsyncpa %s3579, 1

</llo_original>
